<compile_context>
chip_gen: v7x
topology: tpu7x:2x2x1
jax: 0.10.0
libtpu: 0.0.40
codegen_flags: <defaults>
</compile_context>

<pallas_src>
import jax
import jax.numpy as jnp
from jax.experimental import pallas as pl
from jax.experimental.pallas import tpu as pltpu


def lstm_kernel(x_ref, len_ref, whh_ref, wih_ref, b_ref, h_out_ref, h_sc, c_sc):
    """One grid step == one chunk of T timesteps of the LSTM recurrence.

    x_ref   : (T*B, E)  bf16 embedded inputs for this time chunk (row-major in t)
    len_ref : (B, 1)    int32 sequence lengths
    whh_ref : (H, 4H)   bf16  W_hh^T
    wih_ref : (E, 4H)   bf16  W_ih^T
    b_ref   : (1, 4H)   f32   b_ih + b_hh
    h_out_ref : (B, H)  f32   final hidden state (written on last grid step)
    h_sc, c_sc : (B, H) f32   VMEM scratch carrying the recurrent state
    """
    chunk = pl.program_id(0)
    B, H = h_sc.shape
    T = x_ref.shape[0] // B

    @pl.when(chunk == 0)
    def _():
        h_sc[...] = jnp.zeros_like(h_sc)
        c_sc[...] = jnp.zeros_like(c_sc)

    # Hoisted input projection: one batched MXU matmul for the whole chunk
    # (T*B rows instead of B rows per timestep), f32 accumulation.
    gates_x = (
        jnp.dot(x_ref[...], wih_ref[...], preferred_element_type=jnp.float32)
        + b_ref[...]
    )  # (T*B, 4H) f32

    lengths = len_ref[...]          # (B, 1) int32
    t0 = chunk * T

    h = h_sc[...]                   # (B, H) f32
    c = c_sc[...]

    # Statically unrolled inner time loop: only the recurrent matmul +
    # elementwise gate math remains on the serial critical path.
    for tt in range(T):
        gates = gates_x[tt * B:(tt + 1) * B, :] + jnp.dot(
            h.astype(whh_ref.dtype), whh_ref[...],
            preferred_element_type=jnp.float32)         # (B, 4H)

        i = jax.nn.sigmoid(gates[:, 0 * H:1 * H])
        f = jax.nn.sigmoid(gates[:, 1 * H:2 * H])
        g = jnp.tanh(gates[:, 2 * H:3 * H])
        o = jax.nn.sigmoid(gates[:, 3 * H:4 * H])

        c_new = f * c + i * g
        h_new = o * jnp.tanh(c_new)

        # pack_padded_sequence semantics: only update state while t < length[b].
        mask = (t0 + tt) < lengths   # (B, 1) bool, broadcasts over hidden dim
        h = jnp.where(mask, h_new, h)
        c = jnp.where(mask, c_new, c)

    h_sc[...] = h
    c_sc[...] = c

    @pl.when(chunk == pl.num_programs(0) - 1)
    def _():
        h_out_ref[...] = h


def init_params(key, input_dim, embedding_dim=128, hidden_dim=256, output_dim=None):
    """Deterministic synthetic parameters matching nn.Embedding + nn.LSTM (+ nn.Linear)."""
    ks = jax.random.split(key, 7)
    bound = 1.0 / jnp.sqrt(hidden_dim)
    params = {
        "embedding": jax.random.normal(ks[0], (input_dim, embedding_dim), jnp.float32),
        "w_ih": jax.random.uniform(ks[1], (4 * hidden_dim, embedding_dim),
                                   jnp.float32, -bound, bound),
        "w_hh": jax.random.uniform(ks[2], (4 * hidden_dim, hidden_dim),
                                   jnp.float32, -bound, bound),
        "b_ih": jax.random.uniform(ks[3], (4 * hidden_dim,), jnp.float32, -bound, bound),
        "b_hh": jax.random.uniform(ks[4], (4 * hidden_dim,), jnp.float32, -bound, bound),
    }
    if output_dim is not None:
        fcb = 1.0 / jnp.sqrt(hidden_dim)
        params["fc_w"] = jax.random.uniform(ks[5], (output_dim, hidden_dim),
                                            jnp.float32, -fcb, fcb)
        params["fc_b"] = jax.random.uniform(ks[6], (output_dim,), jnp.float32, -fcb, fcb)
    return params


def lstm_forward(text, text_length, params, *, t_chunk=8):
    """Equivalent of LSTM.forward(text, text_length) from the PyTorch module."""
    S, B = text.shape
    if S < 1:
        raise ValueError("seq_len must be >= 1")
    E = params["embedding"].shape[1]
    H = params["w_hh"].shape[1]
    assert E % 128 == 0 and H % 128 == 0, "embedding/hidden dims must be lane-aligned"

    # Pad batch to a sublane multiple and seq to a multiple of the time chunk.
    B_p = -(-B // 8) * 8
    S_p = -(-S // t_chunk) * t_chunk
    num_chunks = S_p // t_chunk

    # Glue: embedding lookup (gather) + padding, plain JAX.
    embedded = params["embedding"][text].astype(jnp.bfloat16)          # (S, B, E)
    emb = jnp.zeros((S_p, B_p, E), jnp.bfloat16).at[:S, :B].set(embedded)
    x2 = emb.reshape(S_p * B_p, E)                                     # (S_p*B_p, E)

    wih_t = params["w_ih"].T.astype(jnp.bfloat16)                      # (E, 4H)
    whh_t = params["w_hh"].T.astype(jnp.bfloat16)                      # (H, 4H)
    bias = (params["b_ih"] + params["b_hh"]).reshape(1, 4 * H).astype(jnp.float32)
    lengths = jnp.zeros((B_p, 1), jnp.int32).at[:B, 0].set(
        text_length.astype(jnp.int32))                                 # pad rows -> len 0

    hidden = pl.pallas_call(
        lstm_kernel,
        out_shape=jax.ShapeDtypeStruct((B_p, H), jnp.float32),
        grid_spec=pltpu.PrefetchScalarGridSpec(
            num_scalar_prefetch=0,
            grid=(num_chunks,),
            in_specs=[
                pl.BlockSpec((t_chunk * B_p, E), lambda c: (c, 0)),    # x chunk
                pl.BlockSpec((B_p, 1), lambda c: (0, 0)),              # lengths
                pl.BlockSpec((H, 4 * H), lambda c: (0, 0)),            # W_hh^T
                pl.BlockSpec((E, 4 * H), lambda c: (0, 0)),            # W_ih^T
                pl.BlockSpec((1, 4 * H), lambda c: (0, 0)),            # bias
            ],
            out_specs=pl.BlockSpec((B_p, H), lambda c: (0, 0)),
            scratch_shapes=[
                pltpu.VMEM((B_p, H), jnp.float32),                     # h state
                pltpu.VMEM((B_p, H), jnp.float32),                     # c state
            ],
        ),
        compiler_params=pltpu.CompilerParams(
            dimension_semantics=("arbitrary",)),                       # time is sequential
    )(x2, lengths, whh_t, wih_t, bias)

    hidden = hidden[:B]                                                # drop batch padding

    if "fc_w" in params:
        # Glue: tiny final projection, mirrors `self.fc(hidden.squeeze(0)).view(-1)`.
        return (hidden @ params["fc_w"].T + params["fc_b"]).reshape(-1)
    # fc is None branch: return hidden[-1]  -> (B, H)
    return hidden


def lstm_reference(text, text_length, params):
    """Pure-JAX f32 reference (lax.scan) for correctness checking."""
    emb = params["embedding"][text]
    W_ih, W_hh = params["w_ih"], params["w_hh"]
    b = params["b_ih"] + params["b_hh"]
    S, B = text.shape
    H = W_hh.shape[1]
    lengths = text_length.astype(jnp.int32)

    def step(carry, inp):
        h, c = carry
        x_t, t = inp
        gates = x_t @ W_ih.T + h @ W_hh.T + b
        i, f, g, o = jnp.split(gates, 4, axis=-1)
        i, f, o = jax.nn.sigmoid(i), jax.nn.sigmoid(f), jax.nn.sigmoid(o)
        g = jnp.tanh(g)
        c_new = f * c + i * g
        h_new = o * jnp.tanh(c_new)
        m = (t < lengths)[:, None]
        return (jnp.where(m, h_new, h), jnp.where(m, c_new, c)), None

    init = (jnp.zeros((B, H), jnp.float32), jnp.zeros((B, H), jnp.float32))
    (h, _), _ = jax.lax.scan(step, init, (emb, jnp.arange(S)))
    return h


if __name__ == "__main__":
    # Small deterministic example: vocab=50, embedding=128, hidden=256,
    # seq_len=8, batch=8.  Lengths sorted descending (pack_padded_sequence
    # default enforce_sorted=True).
    key = jax.random.PRNGKey(0)
    k_param, k_text = jax.random.split(key)

    vocab, E, H = 50, 128, 256
    S, B = 8, 8

    params = init_params(k_param, vocab, embedding_dim=E, hidden_dim=H,
                         output_dim=None)  # fc is None -> return hidden[-1]

    text = jax.random.randint(k_text, (S, B), 0, vocab, dtype=jnp.int32)
    text_length = jnp.array([8, 7, 6, 5, 4, 3, 2, 1], dtype=jnp.int32)

    out = lstm_forward(text, text_length, params)
    out = jax.block_until_ready(out)

    ref = jax.block_until_ready(lstm_reference(text, text_length, params))

    assert out.shape == (B, H), out.shape
    assert bool(jnp.all(jnp.isfinite(out)))
    max_err = float(jnp.max(jnp.abs(out - ref)))
    assert max_err < 5e-2, f"mismatch vs reference (bf16 matmul operands): {max_err}"

    print("KERNEL_OK")
</pallas_src>

<mosaic_0001>
module attributes {stable_mosaic.version = 11 : i64} {
  func.func @lstm_kernel(%arg0: i32, %arg1: memref<64x128xbf16, #tpu.memory_space<vmem>>, %arg2: memref<8x1xi32, #tpu.memory_space<vmem>>, %arg3: memref<256x1024xbf16, #tpu.memory_space<vmem>>, %arg4: memref<128x1024xbf16, #tpu.memory_space<vmem>>, %arg5: memref<1x1024xf32, #tpu.memory_space<vmem>>, %arg6: memref<8x256xf32, #tpu.memory_space<vmem>>, %arg7: memref<8x256xf32, #tpu.memory_space<vmem>>, %arg8: memref<8x256xf32, #tpu.memory_space<vmem>>) attributes {dimension_semantics = [#tpu.dimension_semantics<arbitrary>], iteration_bounds = array<i64: 1>, scalar_prefetch = 0 : i64, scratch_operands = 2 : i64, tpu.core_type = #tpu.core_type<tc>, window_params = [{transform_indices = @transform_0, window_bounds = array<i64: 64, 128>}, {pipeline_mode = #tpu.pipeline_mode<synchronous>, transform_indices = @transform_1, window_bounds = array<i64: 8, 1>}, {pipeline_mode = #tpu.pipeline_mode<synchronous>, transform_indices = @transform_2, window_bounds = array<i64: 256, 1024>}, {pipeline_mode = #tpu.pipeline_mode<synchronous>, transform_indices = @transform_3, window_bounds = array<i64: 128, 1024>}, {pipeline_mode = #tpu.pipeline_mode<synchronous>, transform_indices = @transform_4, window_bounds = array<i64: 1, 1024>}, {pipeline_mode = #tpu.pipeline_mode<synchronous>, transform_indices = @transform_5, window_bounds = array<i64: 8, 256>}]} {
    %c0_i32 = arith.constant 0 : i32
    %0 = arith.cmpi eq, %arg0, %c0_i32 : i32
    %1 = arith.extui %0 : i1 to i32
    %c0_i32_0 = arith.constant 0 : i32
    %2 = arith.cmpi ne, %1, %c0_i32_0 : i32
    scf.if %2 {
      %cst_67 = arith.constant 0.000000e+00 : f32
      %330 = vector.broadcast %cst_67 : f32 to vector<8x256xf32>
      %c0_68 = arith.constant 0 : index
      %c0_69 = arith.constant 0 : index
      %331 = vector.load %arg7[%c0_68, %c0_69] : memref<8x256xf32, #tpu.memory_space<vmem>>, vector<8x256xf32>
      tpu.vector_store %arg7[%c0_68, %c0_69], %330 {strides = array<i32>} : memref<8x256xf32, #tpu.memory_space<vmem>>, vector<8x256xf32>,
      %cst_70 = arith.constant 0.000000e+00 : f32
      %332 = vector.broadcast %cst_70 : f32 to vector<8x256xf32>
      %c0_71 = arith.constant 0 : index
      %c0_72 = arith.constant 0 : index
      %333 = vector.load %arg8[%c0_71, %c0_72] : memref<8x256xf32, #tpu.memory_space<vmem>>, vector<8x256xf32>
      tpu.vector_store %arg8[%c0_71, %c0_72], %332 {strides = array<i32>} : memref<8x256xf32, #tpu.memory_space<vmem>>, vector<8x256xf32>,
    } else {
    }
    %c0 = arith.constant 0 : index
    %c0_1 = arith.constant 0 : index
    %3 = vector.load %arg1[%c0, %c0_1] : memref<64x128xbf16, #tpu.memory_space<vmem>>, vector<64x128xbf16>
    %c0_2 = arith.constant 0 : index
    %c0_3 = arith.constant 0 : index
    %4 = vector.load %arg4[%c0_2, %c0_3] : memref<128x1024xbf16, #tpu.memory_space<vmem>>, vector<128x1024xbf16>
    %cst = arith.constant dense<0.000000e+00> : vector<64x1024xf32>
    %5 = tpu.matmul %3, %4, %cst {dimension_numbers = #tpu.dot_dimension_numbers<[1], [0], [0], [1], [0, 0, 1, 1], [], []>} : vector<64x128xbf16>, vector<128x1024xbf16>, vector<64x1024xf32> -> vector<64x1024xf32>
    %c0_4 = arith.constant 0 : index
    %c0_5 = arith.constant 0 : index
    %6 = vector.load %arg5[%c0_4, %c0_5] : memref<1x1024xf32, #tpu.memory_space<vmem>>, vector<1x1024xf32>
    %7 = vector.broadcast %6 : vector<1x1024xf32> to vector<64x1024xf32>
    %8 = arith.addf %5, %7 : vector<64x1024xf32>
    %c0_6 = arith.constant 0 : index
    %c0_7 = arith.constant 0 : index
    %9 = vector.load %arg2[%c0_6, %c0_7] : memref<8x1xi32, #tpu.memory_space<vmem>>, vector<8x1xi32>
    %c8_i32 = arith.constant 8 : i32
    %10 = arith.muli %arg0, %c8_i32 : i32
    %c0_8 = arith.constant 0 : index
    %c0_9 = arith.constant 0 : index
    %11 = vector.load %arg7[%c0_8, %c0_9] : memref<8x256xf32, #tpu.memory_space<vmem>>, vector<8x256xf32>
    %c0_10 = arith.constant 0 : index
    %c0_11 = arith.constant 0 : index
    %12 = vector.load %arg8[%c0_10, %c0_11] : memref<8x256xf32, #tpu.memory_space<vmem>>, vector<8x256xf32>
    %13 = vector.extract_strided_slice %8 {offsets = [0, 0], sizes = [8, 1024], strides = [1, 1]} : vector<64x1024xf32> to vector<8x1024xf32>
    %14 = arith.truncf %11 : vector<8x256xf32> to vector<8x256xbf16>
    %c0_12 = arith.constant 0 : index
    %c0_13 = arith.constant 0 : index
    %15 = vector.load %arg3[%c0_12, %c0_13] : memref<256x1024xbf16, #tpu.memory_space<vmem>>, vector<256x1024xbf16>
    %cst_14 = arith.constant dense<0.000000e+00> : vector<8x1024xf32>
    %16 = tpu.matmul %14, %15, %cst_14 {dimension_numbers = #tpu.dot_dimension_numbers<[1], [0], [0], [1], [0, 0, 1, 1], [], []>} : vector<8x256xbf16>, vector<256x1024xbf16>, vector<8x1024xf32> -> vector<8x1024xf32>
    %17 = arith.addf %13, %16 : vector<8x1024xf32>
    %18 = vector.extract_strided_slice %17 {offsets = [0, 0], sizes = [8, 256], strides = [1, 1]} : vector<8x1024xf32> to vector<8x256xf32>
    %19 = arith.negf %18 : vector<8x256xf32>
    %20 = math.exp %19 : vector<8x256xf32>
    %cst_15 = arith.constant 1.000000e+00 : f32
    %21 = vector.broadcast %cst_15 : f32 to vector<8x256xf32>
    %22 = arith.addf %21, %20 : vector<8x256xf32>
    %23 = arith.divf %21, %22 : vector<8x256xf32>
    %24 = vector.extract_strided_slice %17 {offsets = [0, 256], sizes = [8, 256], strides = [1, 1]} : vector<8x1024xf32> to vector<8x256xf32>
    %25 = arith.negf %24 : vector<8x256xf32>
    %26 = math.exp %25 : vector<8x256xf32>
    %cst_16 = arith.constant 1.000000e+00 : f32
    %27 = vector.broadcast %cst_16 : f32 to vector<8x256xf32>
    %28 = arith.addf %27, %26 : vector<8x256xf32>
    %29 = arith.divf %27, %28 : vector<8x256xf32>
    %30 = vector.extract_strided_slice %17 {offsets = [0, 512], sizes = [8, 256], strides = [1, 1]} : vector<8x1024xf32> to vector<8x256xf32>
    %31 = math.tanh %30 : vector<8x256xf32>
    %32 = vector.extract_strided_slice %17 {offsets = [0, 768], sizes = [8, 256], strides = [1, 1]} : vector<8x1024xf32> to vector<8x256xf32>
    %33 = arith.negf %32 : vector<8x256xf32>
    %34 = math.exp %33 : vector<8x256xf32>
    %cst_17 = arith.constant 1.000000e+00 : f32
    %35 = vector.broadcast %cst_17 : f32 to vector<8x256xf32>
    %36 = arith.addf %35, %34 : vector<8x256xf32>
    %37 = arith.divf %35, %36 : vector<8x256xf32>
    %38 = arith.mulf %29, %12 : vector<8x256xf32>
    %39 = arith.mulf %23, %31 : vector<8x256xf32>
    %40 = arith.addf %38, %39 : vector<8x256xf32>
    %41 = math.tanh %40 : vector<8x256xf32>
    %42 = arith.mulf %37, %41 : vector<8x256xf32>
    %c0_i32_18 = arith.constant 0 : i32
    %43 = arith.addi %10, %c0_i32_18 : i32
    %44 = vector.broadcast %43 : i32 to vector<8x1xi32>
    %45 = arith.cmpi slt, %44, %9 : vector<8x1xi32>
    %46 = vector.shape_cast %45 : vector<8x1xi1> to vector<8x1xi1>
    %47 = vector.broadcast %46 : vector<8x1xi1> to vector<8x256xi1>
    %48 = arith.select %47, %42, %11 : vector<8x256xi1>, vector<8x256xf32>
    %49 = vector.shape_cast %45 : vector<8x1xi1> to vector<8x1xi1>
    %50 = vector.broadcast %49 : vector<8x1xi1> to vector<8x256xi1>
    %51 = arith.select %50, %40, %12 : vector<8x256xi1>, vector<8x256xf32>
    %52 = vector.extract_strided_slice %8 {offsets = [8, 0], sizes = [8, 1024], strides = [1, 1]} : vector<64x1024xf32> to vector<8x1024xf32>
    %53 = arith.truncf %48 : vector<8x256xf32> to vector<8x256xbf16>
    %c0_19 = arith.constant 0 : index
    %c0_20 = arith.constant 0 : index
    %54 = vector.load %arg3[%c0_19, %c0_20] : memref<256x1024xbf16, #tpu.memory_space<vmem>>, vector<256x1024xbf16>
    %cst_21 = arith.constant dense<0.000000e+00> : vector<8x1024xf32>
    %55 = tpu.matmul %53, %54, %cst_21 {dimension_numbers = #tpu.dot_dimension_numbers<[1], [0], [0], [1], [0, 0, 1, 1], [], []>} : vector<8x256xbf16>, vector<256x1024xbf16>, vector<8x1024xf32> -> vector<8x1024xf32>
    %56 = arith.addf %52, %55 : vector<8x1024xf32>
    %57 = vector.extract_strided_slice %56 {offsets = [0, 0], sizes = [8, 256], strides = [1, 1]} : vector<8x1024xf32> to vector<8x256xf32>
    %58 = arith.negf %57 : vector<8x256xf32>
    %59 = math.exp %58 : vector<8x256xf32>
    %cst_22 = arith.constant 1.000000e+00 : f32
    %60 = vector.broadcast %cst_22 : f32 to vector<8x256xf32>
    %61 = arith.addf %60, %59 : vector<8x256xf32>
    %62 = arith.divf %60, %61 : vector<8x256xf32>
    %63 = vector.extract_strided_slice %56 {offsets = [0, 256], sizes = [8, 256], strides = [1, 1]} : vector<8x1024xf32> to vector<8x256xf32>
    %64 = arith.negf %63 : vector<8x256xf32>
    %65 = math.exp %64 : vector<8x256xf32>
    %cst_23 = arith.constant 1.000000e+00 : f32
    %66 = vector.broadcast %cst_23 : f32 to vector<8x256xf32>
    %67 = arith.addf %66, %65 : vector<8x256xf32>
    %68 = arith.divf %66, %67 : vector<8x256xf32>
    %69 = vector.extract_strided_slice %56 {offsets = [0, 512], sizes = [8, 256], strides = [1, 1]} : vector<8x1024xf32> to vector<8x256xf32>
    %70 = math.tanh %69 : vector<8x256xf32>
    %71 = vector.extract_strided_slice %56 {offsets = [0, 768], sizes = [8, 256], strides = [1, 1]} : vector<8x1024xf32> to vector<8x256xf32>
    %72 = arith.negf %71 : vector<8x256xf32>
    %73 = math.exp %72 : vector<8x256xf32>
    %cst_24 = arith.constant 1.000000e+00 : f32
    %74 = vector.broadcast %cst_24 : f32 to vector<8x256xf32>
    %75 = arith.addf %74, %73 : vector<8x256xf32>
    %76 = arith.divf %74, %75 : vector<8x256xf32>
    %77 = arith.mulf %68, %51 : vector<8x256xf32>
    %78 = arith.mulf %62, %70 : vector<8x256xf32>
    %79 = arith.addf %77, %78 : vector<8x256xf32>
    %80 = math.tanh %79 : vector<8x256xf32>
    %81 = arith.mulf %76, %80 : vector<8x256xf32>
    %c1_i32 = arith.constant 1 : i32
    %82 = arith.addi %10, %c1_i32 : i32
    %83 = vector.broadcast %82 : i32 to vector<8x1xi32>
    %84 = arith.cmpi slt, %83, %9 : vector<8x1xi32>
    %85 = vector.shape_cast %84 : vector<8x1xi1> to vector<8x1xi1>
    %86 = vector.broadcast %85 : vector<8x1xi1> to vector<8x256xi1>
    %87 = arith.select %86, %81, %48 : vector<8x256xi1>, vector<8x256xf32>
    %88 = vector.shape_cast %84 : vector<8x1xi1> to vector<8x1xi1>
    %89 = vector.broadcast %88 : vector<8x1xi1> to vector<8x256xi1>
    %90 = arith.select %89, %79, %51 : vector<8x256xi1>, vector<8x256xf32>
    %91 = vector.extract_strided_slice %8 {offsets = [16, 0], sizes = [8, 1024], strides = [1, 1]} : vector<64x1024xf32> to vector<8x1024xf32>
    %92 = arith.truncf %87 : vector<8x256xf32> to vector<8x256xbf16>
    %c0_25 = arith.constant 0 : index
    %c0_26 = arith.constant 0 : index
    %93 = vector.load %arg3[%c0_25, %c0_26] : memref<256x1024xbf16, #tpu.memory_space<vmem>>, vector<256x1024xbf16>
    %cst_27 = arith.constant dense<0.000000e+00> : vector<8x1024xf32>
    %94 = tpu.matmul %92, %93, %cst_27 {dimension_numbers = #tpu.dot_dimension_numbers<[1], [0], [0], [1], [0, 0, 1, 1], [], []>} : vector<8x256xbf16>, vector<256x1024xbf16>, vector<8x1024xf32> -> vector<8x1024xf32>
    %95 = arith.addf %91, %94 : vector<8x1024xf32>
    %96 = vector.extract_strided_slice %95 {offsets = [0, 0], sizes = [8, 256], strides = [1, 1]} : vector<8x1024xf32> to vector<8x256xf32>
    %97 = arith.negf %96 : vector<8x256xf32>
    %98 = math.exp %97 : vector<8x256xf32>
    %cst_28 = arith.constant 1.000000e+00 : f32
    %99 = vector.broadcast %cst_28 : f32 to vector<8x256xf32>
    %100 = arith.addf %99, %98 : vector<8x256xf32>
    %101 = arith.divf %99, %100 : vector<8x256xf32>
    %102 = vector.extract_strided_slice %95 {offsets = [0, 256], sizes = [8, 256], strides = [1, 1]} : vector<8x1024xf32> to vector<8x256xf32>
    %103 = arith.negf %102 : vector<8x256xf32>
    %104 = math.exp %103 : vector<8x256xf32>
    %cst_29 = arith.constant 1.000000e+00 : f32
    %105 = vector.broadcast %cst_29 : f32 to vector<8x256xf32>
    %106 = arith.addf %105, %104 : vector<8x256xf32>
    %107 = arith.divf %105, %106 : vector<8x256xf32>
    %108 = vector.extract_strided_slice %95 {offsets = [0, 512], sizes = [8, 256], strides = [1, 1]} : vector<8x1024xf32> to vector<8x256xf32>
    %109 = math.tanh %108 : vector<8x256xf32>
    %110 = vector.extract_strided_slice %95 {offsets = [0, 768], sizes = [8, 256], strides = [1, 1]} : vector<8x1024xf32> to vector<8x256xf32>
    %111 = arith.negf %110 : vector<8x256xf32>
    %112 = math.exp %111 : vector<8x256xf32>
    %cst_30 = arith.constant 1.000000e+00 : f32
    %113 = vector.broadcast %cst_30 : f32 to vector<8x256xf32>
    %114 = arith.addf %113, %112 : vector<8x256xf32>
    %115 = arith.divf %113, %114 : vector<8x256xf32>
    %116 = arith.mulf %107, %90 : vector<8x256xf32>
    %117 = arith.mulf %101, %109 : vector<8x256xf32>
    %118 = arith.addf %116, %117 : vector<8x256xf32>
    %119 = math.tanh %118 : vector<8x256xf32>
    %120 = arith.mulf %115, %119 : vector<8x256xf32>
    %c2_i32 = arith.constant 2 : i32
    %121 = arith.addi %10, %c2_i32 : i32
    %122 = vector.broadcast %121 : i32 to vector<8x1xi32>
    %123 = arith.cmpi slt, %122, %9 : vector<8x1xi32>
    %124 = vector.shape_cast %123 : vector<8x1xi1> to vector<8x1xi1>
    %125 = vector.broadcast %124 : vector<8x1xi1> to vector<8x256xi1>
    %126 = arith.select %125, %120, %87 : vector<8x256xi1>, vector<8x256xf32>
    %127 = vector.shape_cast %123 : vector<8x1xi1> to vector<8x1xi1>
    %128 = vector.broadcast %127 : vector<8x1xi1> to vector<8x256xi1>
    %129 = arith.select %128, %118, %90 : vector<8x256xi1>, vector<8x256xf32>
    %130 = vector.extract_strided_slice %8 {offsets = [24, 0], sizes = [8, 1024], strides = [1, 1]} : vector<64x1024xf32> to vector<8x1024xf32>
    %131 = arith.truncf %126 : vector<8x256xf32> to vector<8x256xbf16>
    %c0_31 = arith.constant 0 : index
    %c0_32 = arith.constant 0 : index
    %132 = vector.load %arg3[%c0_31, %c0_32] : memref<256x1024xbf16, #tpu.memory_space<vmem>>, vector<256x1024xbf16>
    %cst_33 = arith.constant dense<0.000000e+00> : vector<8x1024xf32>
    %133 = tpu.matmul %131, %132, %cst_33 {dimension_numbers = #tpu.dot_dimension_numbers<[1], [0], [0], [1], [0, 0, 1, 1], [], []>} : vector<8x256xbf16>, vector<256x1024xbf16>, vector<8x1024xf32> -> vector<8x1024xf32>
    %134 = arith.addf %130, %133 : vector<8x1024xf32>
    %135 = vector.extract_strided_slice %134 {offsets = [0, 0], sizes = [8, 256], strides = [1, 1]} : vector<8x1024xf32> to vector<8x256xf32>
    %136 = arith.negf %135 : vector<8x256xf32>
    %137 = math.exp %136 : vector<8x256xf32>
    %cst_34 = arith.constant 1.000000e+00 : f32
    %138 = vector.broadcast %cst_34 : f32 to vector<8x256xf32>
    %139 = arith.addf %138, %137 : vector<8x256xf32>
    %140 = arith.divf %138, %139 : vector<8x256xf32>
    %141 = vector.extract_strided_slice %134 {offsets = [0, 256], sizes = [8, 256], strides = [1, 1]} : vector<8x1024xf32> to vector<8x256xf32>
    %142 = arith.negf %141 : vector<8x256xf32>
    %143 = math.exp %142 : vector<8x256xf32>
    %cst_35 = arith.constant 1.000000e+00 : f32
    %144 = vector.broadcast %cst_35 : f32 to vector<8x256xf32>
    %145 = arith.addf %144, %143 : vector<8x256xf32>
    %146 = arith.divf %144, %145 : vector<8x256xf32>
    %147 = vector.extract_strided_slice %134 {offsets = [0, 512], sizes = [8, 256], strides = [1, 1]} : vector<8x1024xf32> to vector<8x256xf32>
    %148 = math.tanh %147 : vector<8x256xf32>
    %149 = vector.extract_strided_slice %134 {offsets = [0, 768], sizes = [8, 256], strides = [1, 1]} : vector<8x1024xf32> to vector<8x256xf32>
    %150 = arith.negf %149 : vector<8x256xf32>
    %151 = math.exp %150 : vector<8x256xf32>
    %cst_36 = arith.constant 1.000000e+00 : f32
    %152 = vector.broadcast %cst_36 : f32 to vector<8x256xf32>
    %153 = arith.addf %152, %151 : vector<8x256xf32>
    %154 = arith.divf %152, %153 : vector<8x256xf32>
    %155 = arith.mulf %146, %129 : vector<8x256xf32>
    %156 = arith.mulf %140, %148 : vector<8x256xf32>
    %157 = arith.addf %155, %156 : vector<8x256xf32>
    %158 = math.tanh %157 : vector<8x256xf32>
    %159 = arith.mulf %154, %158 : vector<8x256xf32>
    %c3_i32 = arith.constant 3 : i32
    %160 = arith.addi %10, %c3_i32 : i32
    %161 = vector.broadcast %160 : i32 to vector<8x1xi32>
    %162 = arith.cmpi slt, %161, %9 : vector<8x1xi32>
    %163 = vector.shape_cast %162 : vector<8x1xi1> to vector<8x1xi1>
    %164 = vector.broadcast %163 : vector<8x1xi1> to vector<8x256xi1>
    %165 = arith.select %164, %159, %126 : vector<8x256xi1>, vector<8x256xf32>
    %166 = vector.shape_cast %162 : vector<8x1xi1> to vector<8x1xi1>
    %167 = vector.broadcast %166 : vector<8x1xi1> to vector<8x256xi1>
    %168 = arith.select %167, %157, %129 : vector<8x256xi1>, vector<8x256xf32>
    %169 = vector.extract_strided_slice %8 {offsets = [32, 0], sizes = [8, 1024], strides = [1, 1]} : vector<64x1024xf32> to vector<8x1024xf32>
    %170 = arith.truncf %165 : vector<8x256xf32> to vector<8x256xbf16>
    %c0_37 = arith.constant 0 : index
    %c0_38 = arith.constant 0 : index
    %171 = vector.load %arg3[%c0_37, %c0_38] : memref<256x1024xbf16, #tpu.memory_space<vmem>>, vector<256x1024xbf16>
    %cst_39 = arith.constant dense<0.000000e+00> : vector<8x1024xf32>
    %172 = tpu.matmul %170, %171, %cst_39 {dimension_numbers = #tpu.dot_dimension_numbers<[1], [0], [0], [1], [0, 0, 1, 1], [], []>} : vector<8x256xbf16>, vector<256x1024xbf16>, vector<8x1024xf32> -> vector<8x1024xf32>
    %173 = arith.addf %169, %172 : vector<8x1024xf32>
    %174 = vector.extract_strided_slice %173 {offsets = [0, 0], sizes = [8, 256], strides = [1, 1]} : vector<8x1024xf32> to vector<8x256xf32>
    %175 = arith.negf %174 : vector<8x256xf32>
    %176 = math.exp %175 : vector<8x256xf32>
    %cst_40 = arith.constant 1.000000e+00 : f32
    %177 = vector.broadcast %cst_40 : f32 to vector<8x256xf32>
    %178 = arith.addf %177, %176 : vector<8x256xf32>
    %179 = arith.divf %177, %178 : vector<8x256xf32>
    %180 = vector.extract_strided_slice %173 {offsets = [0, 256], sizes = [8, 256], strides = [1, 1]} : vector<8x1024xf32> to vector<8x256xf32>
    %181 = arith.negf %180 : vector<8x256xf32>
    %182 = math.exp %181 : vector<8x256xf32>
    %cst_41 = arith.constant 1.000000e+00 : f32
    %183 = vector.broadcast %cst_41 : f32 to vector<8x256xf32>
    %184 = arith.addf %183, %182 : vector<8x256xf32>
    %185 = arith.divf %183, %184 : vector<8x256xf32>
    %186 = vector.extract_strided_slice %173 {offsets = [0, 512], sizes = [8, 256], strides = [1, 1]} : vector<8x1024xf32> to vector<8x256xf32>
    %187 = math.tanh %186 : vector<8x256xf32>
    %188 = vector.extract_strided_slice %173 {offsets = [0, 768], sizes = [8, 256], strides = [1, 1]} : vector<8x1024xf32> to vector<8x256xf32>
    %189 = arith.negf %188 : vector<8x256xf32>
    %190 = math.exp %189 : vector<8x256xf32>
    %cst_42 = arith.constant 1.000000e+00 : f32
    %191 = vector.broadcast %cst_42 : f32 to vector<8x256xf32>
    %192 = arith.addf %191, %190 : vector<8x256xf32>
    %193 = arith.divf %191, %192 : vector<8x256xf32>
    %194 = arith.mulf %185, %168 : vector<8x256xf32>
    %195 = arith.mulf %179, %187 : vector<8x256xf32>
    %196 = arith.addf %194, %195 : vector<8x256xf32>
    %197 = math.tanh %196 : vector<8x256xf32>
    %198 = arith.mulf %193, %197 : vector<8x256xf32>
    %c4_i32 = arith.constant 4 : i32
    %199 = arith.addi %10, %c4_i32 : i32
    %200 = vector.broadcast %199 : i32 to vector<8x1xi32>
    %201 = arith.cmpi slt, %200, %9 : vector<8x1xi32>
    %202 = vector.shape_cast %201 : vector<8x1xi1> to vector<8x1xi1>
    %203 = vector.broadcast %202 : vector<8x1xi1> to vector<8x256xi1>
    %204 = arith.select %203, %198, %165 : vector<8x256xi1>, vector<8x256xf32>
    %205 = vector.shape_cast %201 : vector<8x1xi1> to vector<8x1xi1>
    %206 = vector.broadcast %205 : vector<8x1xi1> to vector<8x256xi1>
    %207 = arith.select %206, %196, %168 : vector<8x256xi1>, vector<8x256xf32>
    %208 = vector.extract_strided_slice %8 {offsets = [40, 0], sizes = [8, 1024], strides = [1, 1]} : vector<64x1024xf32> to vector<8x1024xf32>
    %209 = arith.truncf %204 : vector<8x256xf32> to vector<8x256xbf16>
    %c0_43 = arith.constant 0 : index
    %c0_44 = arith.constant 0 : index
    %210 = vector.load %arg3[%c0_43, %c0_44] : memref<256x1024xbf16, #tpu.memory_space<vmem>>, vector<256x1024xbf16>
    %cst_45 = arith.constant dense<0.000000e+00> : vector<8x1024xf32>
    %211 = tpu.matmul %209, %210, %cst_45 {dimension_numbers = #tpu.dot_dimension_numbers<[1], [0], [0], [1], [0, 0, 1, 1], [], []>} : vector<8x256xbf16>, vector<256x1024xbf16>, vector<8x1024xf32> -> vector<8x1024xf32>
    %212 = arith.addf %208, %211 : vector<8x1024xf32>
    %213 = vector.extract_strided_slice %212 {offsets = [0, 0], sizes = [8, 256], strides = [1, 1]} : vector<8x1024xf32> to vector<8x256xf32>
    %214 = arith.negf %213 : vector<8x256xf32>
    %215 = math.exp %214 : vector<8x256xf32>
    %cst_46 = arith.constant 1.000000e+00 : f32
    %216 = vector.broadcast %cst_46 : f32 to vector<8x256xf32>
    %217 = arith.addf %216, %215 : vector<8x256xf32>
    %218 = arith.divf %216, %217 : vector<8x256xf32>
    %219 = vector.extract_strided_slice %212 {offsets = [0, 256], sizes = [8, 256], strides = [1, 1]} : vector<8x1024xf32> to vector<8x256xf32>
    %220 = arith.negf %219 : vector<8x256xf32>
    %221 = math.exp %220 : vector<8x256xf32>
    %cst_47 = arith.constant 1.000000e+00 : f32
    %222 = vector.broadcast %cst_47 : f32 to vector<8x256xf32>
    %223 = arith.addf %222, %221 : vector<8x256xf32>
    %224 = arith.divf %222, %223 : vector<8x256xf32>
    %225 = vector.extract_strided_slice %212 {offsets = [0, 512], sizes = [8, 256], strides = [1, 1]} : vector<8x1024xf32> to vector<8x256xf32>
    %226 = math.tanh %225 : vector<8x256xf32>
    %227 = vector.extract_strided_slice %212 {offsets = [0, 768], sizes = [8, 256], strides = [1, 1]} : vector<8x1024xf32> to vector<8x256xf32>
    %228 = arith.negf %227 : vector<8x256xf32>
    %229 = math.exp %228 : vector<8x256xf32>
    %cst_48 = arith.constant 1.000000e+00 : f32
    %230 = vector.broadcast %cst_48 : f32 to vector<8x256xf32>
    %231 = arith.addf %230, %229 : vector<8x256xf32>
    %232 = arith.divf %230, %231 : vector<8x256xf32>
    %233 = arith.mulf %224, %207 : vector<8x256xf32>
    %234 = arith.mulf %218, %226 : vector<8x256xf32>
    %235 = arith.addf %233, %234 : vector<8x256xf32>
    %236 = math.tanh %235 : vector<8x256xf32>
    %237 = arith.mulf %232, %236 : vector<8x256xf32>
    %c5_i32 = arith.constant 5 : i32
    %238 = arith.addi %10, %c5_i32 : i32
    %239 = vector.broadcast %238 : i32 to vector<8x1xi32>
    %240 = arith.cmpi slt, %239, %9 : vector<8x1xi32>
    %241 = vector.shape_cast %240 : vector<8x1xi1> to vector<8x1xi1>
    %242 = vector.broadcast %241 : vector<8x1xi1> to vector<8x256xi1>
    %243 = arith.select %242, %237, %204 : vector<8x256xi1>, vector<8x256xf32>
    %244 = vector.shape_cast %240 : vector<8x1xi1> to vector<8x1xi1>
    %245 = vector.broadcast %244 : vector<8x1xi1> to vector<8x256xi1>
    %246 = arith.select %245, %235, %207 : vector<8x256xi1>, vector<8x256xf32>
    %247 = vector.extract_strided_slice %8 {offsets = [48, 0], sizes = [8, 1024], strides = [1, 1]} : vector<64x1024xf32> to vector<8x1024xf32>
    %248 = arith.truncf %243 : vector<8x256xf32> to vector<8x256xbf16>
    %c0_49 = arith.constant 0 : index
    %c0_50 = arith.constant 0 : index
    %249 = vector.load %arg3[%c0_49, %c0_50] : memref<256x1024xbf16, #tpu.memory_space<vmem>>, vector<256x1024xbf16>
    %cst_51 = arith.constant dense<0.000000e+00> : vector<8x1024xf32>
    %250 = tpu.matmul %248, %249, %cst_51 {dimension_numbers = #tpu.dot_dimension_numbers<[1], [0], [0], [1], [0, 0, 1, 1], [], []>} : vector<8x256xbf16>, vector<256x1024xbf16>, vector<8x1024xf32> -> vector<8x1024xf32>
    %251 = arith.addf %247, %250 : vector<8x1024xf32>
    %252 = vector.extract_strided_slice %251 {offsets = [0, 0], sizes = [8, 256], strides = [1, 1]} : vector<8x1024xf32> to vector<8x256xf32>
    %253 = arith.negf %252 : vector<8x256xf32>
    %254 = math.exp %253 : vector<8x256xf32>
    %cst_52 = arith.constant 1.000000e+00 : f32
    %255 = vector.broadcast %cst_52 : f32 to vector<8x256xf32>
    %256 = arith.addf %255, %254 : vector<8x256xf32>
    %257 = arith.divf %255, %256 : vector<8x256xf32>
    %258 = vector.extract_strided_slice %251 {offsets = [0, 256], sizes = [8, 256], strides = [1, 1]} : vector<8x1024xf32> to vector<8x256xf32>
    %259 = arith.negf %258 : vector<8x256xf32>
    %260 = math.exp %259 : vector<8x256xf32>
    %cst_53 = arith.constant 1.000000e+00 : f32
    %261 = vector.broadcast %cst_53 : f32 to vector<8x256xf32>
    %262 = arith.addf %261, %260 : vector<8x256xf32>
    %263 = arith.divf %261, %262 : vector<8x256xf32>
    %264 = vector.extract_strided_slice %251 {offsets = [0, 512], sizes = [8, 256], strides = [1, 1]} : vector<8x1024xf32> to vector<8x256xf32>
    %265 = math.tanh %264 : vector<8x256xf32>
    %266 = vector.extract_strided_slice %251 {offsets = [0, 768], sizes = [8, 256], strides = [1, 1]} : vector<8x1024xf32> to vector<8x256xf32>
    %267 = arith.negf %266 : vector<8x256xf32>
    %268 = math.exp %267 : vector<8x256xf32>
    %cst_54 = arith.constant 1.000000e+00 : f32
    %269 = vector.broadcast %cst_54 : f32 to vector<8x256xf32>
    %270 = arith.addf %269, %268 : vector<8x256xf32>
    %271 = arith.divf %269, %270 : vector<8x256xf32>
    %272 = arith.mulf %263, %246 : vector<8x256xf32>
    %273 = arith.mulf %257, %265 : vector<8x256xf32>
    %274 = arith.addf %272, %273 : vector<8x256xf32>
    %275 = math.tanh %274 : vector<8x256xf32>
    %276 = arith.mulf %271, %275 : vector<8x256xf32>
    %c6_i32 = arith.constant 6 : i32
    %277 = arith.addi %10, %c6_i32 : i32
    %278 = vector.broadcast %277 : i32 to vector<8x1xi32>
    %279 = arith.cmpi slt, %278, %9 : vector<8x1xi32>
    %280 = vector.shape_cast %279 : vector<8x1xi1> to vector<8x1xi1>
    %281 = vector.broadcast %280 : vector<8x1xi1> to vector<8x256xi1>
    %282 = arith.select %281, %276, %243 : vector<8x256xi1>, vector<8x256xf32>
    %283 = vector.shape_cast %279 : vector<8x1xi1> to vector<8x1xi1>
    %284 = vector.broadcast %283 : vector<8x1xi1> to vector<8x256xi1>
    %285 = arith.select %284, %274, %246 : vector<8x256xi1>, vector<8x256xf32>
    %286 = vector.extract_strided_slice %8 {offsets = [56, 0], sizes = [8, 1024], strides = [1, 1]} : vector<64x1024xf32> to vector<8x1024xf32>
    %287 = arith.truncf %282 : vector<8x256xf32> to vector<8x256xbf16>
    %c0_55 = arith.constant 0 : index
    %c0_56 = arith.constant 0 : index
    %288 = vector.load %arg3[%c0_55, %c0_56] : memref<256x1024xbf16, #tpu.memory_space<vmem>>, vector<256x1024xbf16>
    %cst_57 = arith.constant dense<0.000000e+00> : vector<8x1024xf32>
    %289 = tpu.matmul %287, %288, %cst_57 {dimension_numbers = #tpu.dot_dimension_numbers<[1], [0], [0], [1], [0, 0, 1, 1], [], []>} : vector<8x256xbf16>, vector<256x1024xbf16>, vector<8x1024xf32> -> vector<8x1024xf32>
    %290 = arith.addf %286, %289 : vector<8x1024xf32>
    %291 = vector.extract_strided_slice %290 {offsets = [0, 0], sizes = [8, 256], strides = [1, 1]} : vector<8x1024xf32> to vector<8x256xf32>
    %292 = arith.negf %291 : vector<8x256xf32>
    %293 = math.exp %292 : vector<8x256xf32>
    %cst_58 = arith.constant 1.000000e+00 : f32
    %294 = vector.broadcast %cst_58 : f32 to vector<8x256xf32>
    %295 = arith.addf %294, %293 : vector<8x256xf32>
    %296 = arith.divf %294, %295 : vector<8x256xf32>
    %297 = vector.extract_strided_slice %290 {offsets = [0, 256], sizes = [8, 256], strides = [1, 1]} : vector<8x1024xf32> to vector<8x256xf32>
    %298 = arith.negf %297 : vector<8x256xf32>
    %299 = math.exp %298 : vector<8x256xf32>
    %cst_59 = arith.constant 1.000000e+00 : f32
    %300 = vector.broadcast %cst_59 : f32 to vector<8x256xf32>
    %301 = arith.addf %300, %299 : vector<8x256xf32>
    %302 = arith.divf %300, %301 : vector<8x256xf32>
    %303 = vector.extract_strided_slice %290 {offsets = [0, 512], sizes = [8, 256], strides = [1, 1]} : vector<8x1024xf32> to vector<8x256xf32>
    %304 = math.tanh %303 : vector<8x256xf32>
    %305 = vector.extract_strided_slice %290 {offsets = [0, 768], sizes = [8, 256], strides = [1, 1]} : vector<8x1024xf32> to vector<8x256xf32>
    %306 = arith.negf %305 : vector<8x256xf32>
    %307 = math.exp %306 : vector<8x256xf32>
    %cst_60 = arith.constant 1.000000e+00 : f32
    %308 = vector.broadcast %cst_60 : f32 to vector<8x256xf32>
    %309 = arith.addf %308, %307 : vector<8x256xf32>
    %310 = arith.divf %308, %309 : vector<8x256xf32>
    %311 = arith.mulf %302, %285 : vector<8x256xf32>
    %312 = arith.mulf %296, %304 : vector<8x256xf32>
    %313 = arith.addf %311, %312 : vector<8x256xf32>
    %314 = math.tanh %313 : vector<8x256xf32>
    %315 = arith.mulf %310, %314 : vector<8x256xf32>
    %c7_i32 = arith.constant 7 : i32
    %316 = arith.addi %10, %c7_i32 : i32
    %317 = vector.broadcast %316 : i32 to vector<8x1xi32>
    %318 = arith.cmpi slt, %317, %9 : vector<8x1xi32>
    %319 = vector.shape_cast %318 : vector<8x1xi1> to vector<8x1xi1>
    %320 = vector.broadcast %319 : vector<8x1xi1> to vector<8x256xi1>
    %321 = arith.select %320, %315, %282 : vector<8x256xi1>, vector<8x256xf32>
    %322 = vector.shape_cast %318 : vector<8x1xi1> to vector<8x1xi1>
    %323 = vector.broadcast %322 : vector<8x1xi1> to vector<8x256xi1>
    %324 = arith.select %323, %313, %285 : vector<8x256xi1>, vector<8x256xf32>
    %c0_61 = arith.constant 0 : index
    %c0_62 = arith.constant 0 : index
    %325 = vector.load %arg7[%c0_61, %c0_62] : memref<8x256xf32, #tpu.memory_space<vmem>>, vector<8x256xf32>
    tpu.vector_store %arg7[%c0_61, %c0_62], %321 {strides = array<i32>} : memref<8x256xf32, #tpu.memory_space<vmem>>, vector<8x256xf32>,
    %c0_63 = arith.constant 0 : index
    %c0_64 = arith.constant 0 : index
    %326 = vector.load %arg8[%c0_63, %c0_64] : memref<8x256xf32, #tpu.memory_space<vmem>>, vector<8x256xf32>
    tpu.vector_store %arg8[%c0_63, %c0_64], %324 {strides = array<i32>} : memref<8x256xf32, #tpu.memory_space<vmem>>, vector<8x256xf32>,
    %c0_i32_65 = arith.constant 0 : i32
    %327 = arith.cmpi eq, %arg0, %c0_i32_65 : i32
    %328 = arith.extui %327 : i1 to i32
    %c0_i32_66 = arith.constant 0 : i32
    %329 = arith.cmpi ne, %328, %c0_i32_66 : i32
    scf.if %329 {
      %c0_67 = arith.constant 0 : index
      %c0_68 = arith.constant 0 : index
      %330 = vector.load %arg6[%c0_67, %c0_68] : memref<8x256xf32, #tpu.memory_space<vmem>>, vector<8x256xf32>
      tpu.vector_store %arg6[%c0_67, %c0_68], %321 {strides = array<i32>} : memref<8x256xf32, #tpu.memory_space<vmem>>, vector<8x256xf32>,
    } else {
    }
    return
  }
  func.func @transform_0(%arg0: i32) -> (i32, i32) {
    %c0_i32 = arith.constant 0 : i32
    %c0_i32_0 = arith.constant 0 : i32
    return %arg0, %c0_i32 : i32, i32
  }
  func.func @transform_1(%arg0: i32) -> (i32, i32) {
    %c0_i32 = arith.constant 0 : i32
    %c0_i32_0 = arith.constant 0 : i32
    %c0_i32_1 = arith.constant 0 : i32
    return %c0_i32, %c0_i32_0 : i32, i32
  }
  func.func @transform_2(%arg0: i32) -> (i32, i32) {
    %c0_i32 = arith.constant 0 : i32
    %c0_i32_0 = arith.constant 0 : i32
    %c0_i32_1 = arith.constant 0 : i32
    return %c0_i32, %c0_i32_0 : i32, i32
  }
  func.func @transform_3(%arg0: i32) -> (i32, i32) {
    %c0_i32 = arith.constant 0 : i32
    %c0_i32_0 = arith.constant 0 : i32
    %c0_i32_1 = arith.constant 0 : i32
    return %c0_i32, %c0_i32_0 : i32, i32
  }
  func.func @transform_4(%arg0: i32) -> (i32, i32) {
    %c0_i32 = arith.constant 0 : i32
    %c0_i32_0 = arith.constant 0 : i32
    %c0_i32_1 = arith.constant 0 : i32
    return %c0_i32, %c0_i32_0 : i32, i32
  }
  func.func @transform_5(%arg0: i32) -> (i32, i32) {
    %c0_i32 = arith.constant 0 : i32
    %c0_i32_0 = arith.constant 0 : i32
    %c0_i32_1 = arith.constant 0 : i32
    return %c0_i32, %c0_i32_0 : i32, i32
  }
}

</mosaic_0001>

<llo_original>
// kernel: tpu_custom_call.1
$region0: #{tpu_custom_call.1}
  #allocation0 [shape = 'u32[]', space=smem, size = 0x4, offset = 0x4, fixed_abs, tag = 'smem constant byte address 0x4 - core index']
  #allocation1 [shape = 'u32[144,128]{1,0:T(1,128)}', space=vmem, size = 0x12000, scoped, tag = 'internal scratch']
  #allocation2 [shape = 'f32[8,256]{1,0:T(8,128)}', space=vmem, size = 0x2000, scoped, tag = 'scratch operand']
  #allocation3 [shape = 'f32[8,256]{1,0:T(8,128)}', space=vmem, size = 0x2000, scoped, tag = 'scratch operand']
  %s0 = inlined_call_operand.hbm [shape: bf16[64,128], index: 0, kind: input, shape index: {}]
  %s1 = inlined_call_operand.vmem [shape: s32[8,1], index: 1, kind: input, shape index: {}]
  %s2 = inlined_call_operand.hbm [shape: bf16[256,1024], index: 2, kind: input, shape index: {}]
  %s3 = inlined_call_operand.hbm [shape: bf16[128,1024], index: 3, kind: input, shape index: {}]
  %s4 = inlined_call_operand.vmem [shape: f32[1,1024], index: 4, kind: input, shape index: {}]
  %s5 = inlined_call_operand.hbm [shape: f32[8,256], index: 5, kind: output, shape index: {}]
  %s6 = sld [smem:[#allocation0]]
  $region50: #{tpu_custom_call.1} parent=0
    _
  %s8 = ssub.s32 1, %s6
  %s9 = scalar_select 0, %s8, %s6
  $region1: #{tpu_custom_call.1} parent=0
    #allocation4 [shape = 'u8[16384]{0}', space=vmem, size = 0x4000, scoped, tag = 'input window, operand 0, single buffered']
    #allocation5 [shape = 's32[1]{0}', space=sflag, size = 0x4, scoped, tag = 'scoped memory for tpu_custom_call.1']
    #allocation6 [shape = 's32[1]{0}', space=sflag, size = 0x4, scoped, tag = 'scoped memory for tpu_custom_call.1']
    #allocation7 [shape = 'u8[524288]{0}', space=vmem, size = 0x80000, scoped, tag = 'input window, operand 2, single buffered']
    #allocation8 [shape = 's32[1]{0}', space=sflag, size = 0x4, scoped, tag = 'scoped memory for tpu_custom_call.1']
    #allocation9 [shape = 'u8[262144]{0}', space=vmem, size = 0x40000, scoped, tag = 'input window, operand 3, single buffered']
    #allocation10 [shape = 'u8[8192]{0}', space=vmem, size = 0x2000, scoped, tag = 'output window, operand 0, single buffered']
    %10 = vsyncpa [#allocation5], 0
    %11 = vsyncpa [#allocation8], 0
    %12 = vsyncpa [#allocation6], 0
    // Predicated region
    $region2: #{tpu_custom_call.1} parent=1 // pred_check
      _
    $region3: #{tpu_custom_call.1} parent=1 // pred_check_branch
      %14 = sbr.rel (0) target = $region5
    $region4: #{tpu_custom_call.1} parent=1 // pred_region
      %s16 = ssub.s32 512, 512
      %17 = vsyncadd [#allocation5], %s16
      %s18 = sshll.u32 [#allocation4], 4
      %s19 = int_to_ptr.vmem [resolvable:$true] %s18
      %24 = dma.hbm_to_vmem [thread:$0]  %s0, 512, %s19, [#allocation5], 64, 64, 4
    $region5: #{tpu_custom_call.1} parent=1 // pred_fallthru
      _
    // Predicated region
    $region6: #{tpu_custom_call.1} parent=1 // pred_check
      _
    $region7: #{tpu_custom_call.1} parent=1 // pred_check_branch
      %26 = sbr.rel (0) target = $region9
    $region8: #{tpu_custom_call.1} parent=1 // pred_region
      _
    $region9: #{tpu_custom_call.1} parent=1 // pred_fallthru
      _
    // Predicated region
    $region10: #{tpu_custom_call.1} parent=1 // pred_check
      _
    $region11: #{tpu_custom_call.1} parent=1 // pred_check_branch
      %28 = sbr.rel (0) target = $region13
    $region12: #{tpu_custom_call.1} parent=1 // pred_region
      %s30 = ssub.s32 16384, 16384
      %31 = vsyncadd [#allocation8], %s30
      %s32 = sshll.u32 [#allocation7], 4
      %s33 = int_to_ptr.vmem [resolvable:$true] %s32
      %38 = dma.hbm_to_vmem [thread:$0]  %s2, 16384, %s33, [#allocation8], 512, 512, 32
    $region13: #{tpu_custom_call.1} parent=1 // pred_fallthru
      _
    // Predicated region
    $region14: #{tpu_custom_call.1} parent=1 // pred_check
      _
    $region15: #{tpu_custom_call.1} parent=1 // pred_check_branch
      %40 = sbr.rel (0) target = $region17
    $region16: #{tpu_custom_call.1} parent=1 // pred_region
      %s42 = ssub.s32 8192, 8192
      %43 = vsyncadd [#allocation8], %s42
      %s44 = sshll.u32 [#allocation9], 4
      %s45 = int_to_ptr.vmem [resolvable:$true] %s44
      %50 = dma.hbm_to_vmem [thread:$0]  %s3, 8192, %s45, [#allocation8], 512, 512, 32
    $region17: #{tpu_custom_call.1} parent=1 // pred_fallthru
      _
    // Predicated region
    $region18: #{tpu_custom_call.1} parent=1 // pred_check
      _
    $region19: #{tpu_custom_call.1} parent=1 // pred_check_branch
      %52 = sbr.rel (0) target = $region21
    $region20: #{tpu_custom_call.1} parent=1 // pred_region
      _
    $region21: #{tpu_custom_call.1} parent=1 // pred_fallthru
      _
    // Predicated region
    $region22: #{tpu_custom_call.1} parent=1 // pred_check
      _
    $region23: #{tpu_custom_call.1} parent=1 // pred_check_branch
      %54 = sbr.rel (0) target = $region25
    $region24: #{tpu_custom_call.1} parent=1 // pred_region
      %55 = dma.done [#allocation5], 512
    $region25: #{tpu_custom_call.1} parent=1 // pred_fallthru
      _
    // Predicated region
    $region26: #{tpu_custom_call.1} parent=1 // pred_check
      _
    $region27: #{tpu_custom_call.1} parent=1 // pred_check_branch
      %57 = sbr.rel (0) target = $region29
    $region28: #{tpu_custom_call.1} parent=1 // pred_region
      %58 = dma.done [#allocation8], 16384
    $region29: #{tpu_custom_call.1} parent=1 // pred_fallthru
      _
    // Predicated region
    $region30: #{tpu_custom_call.1} parent=1 // pred_check
      _
    $region31: #{tpu_custom_call.1} parent=1 // pred_check_branch
      %60 = sbr.rel (0) target = $region33
    $region32: #{tpu_custom_call.1} parent=1 // pred_region
      %61 = dma.done [#allocation8], 8192
    $region33: #{tpu_custom_call.1} parent=1 // pred_fallthru
      _
    %p63 = scmp.eq.s32.totalorder 0, 0
    // Predicated region
    $region34: #{tpu_custom_call.1} parent=1 // pred_check
      %p64 = pneg %p63
    $region35: #{tpu_custom_call.1} parent=1 // pred_check_branch
      %66 = sbr.rel (%p64) target = $region37
    $region36: #{tpu_custom_call.1} parent=1 // pred_region
      %67 = vst [vmem:[#allocation2] sm:$0xff] 0.0
      %68 = vst [vmem:[#allocation2 + $0x8] sm:$0xff] 0.0
      %69 = vst [vmem:[#allocation3] sm:$0xff] 0.0
      %70 = vst [vmem:[#allocation3 + $0x8] sm:$0xff] 0.0
    $region37: #{tpu_custom_call.1} parent=1 // pred_fallthru
      _
    %v71 = vld [vmem:[#allocation4] sm:$0xf]
    %v72 = vld [vmem:[#allocation4 + $0x4] sm:$0xf]
    %v73 = vld [vmem:[#allocation4 + $0x8] sm:$0xf]
    %v74 = vld [vmem:[#allocation4 + $0xc] sm:$0xf]
    %v75 = vld [vmem:[#allocation4 + $0x10] sm:$0xf]
    %v76 = vld [vmem:[#allocation4 + $0x14] sm:$0xf]
    %v77 = vld [vmem:[#allocation4 + $0x18] sm:$0xf]
    %v78 = vld [vmem:[#allocation4 + $0x1c] sm:$0xf]
    %v79 = vld [vmem:[#allocation9] sm:$0xff]
    %v80 = vld [vmem:[#allocation9 + $0x8] sm:$0xff]
    %v81 = vld [vmem:[#allocation9 + $0x10] sm:$0xff]
    %v82 = vld [vmem:[#allocation9 + $0x18] sm:$0xff]
    %v83 = vld [vmem:[#allocation9 + $0x20] sm:$0xff]
    %v84 = vld [vmem:[#allocation9 + $0x28] sm:$0xff]
    %v85 = vld [vmem:[#allocation9 + $0x30] sm:$0xff]
    %v86 = vld [vmem:[#allocation9 + $0x38] sm:$0xff]
    %v87 = vld [vmem:[#allocation9 + $0x40] sm:$0xff]
    %v88 = vld [vmem:[#allocation9 + $0x48] sm:$0xff]
    %v89 = vld [vmem:[#allocation9 + $0x50] sm:$0xff]
    %v90 = vld [vmem:[#allocation9 + $0x58] sm:$0xff]
    %v91 = vld [vmem:[#allocation9 + $0x60] sm:$0xff]
    %v92 = vld [vmem:[#allocation9 + $0x68] sm:$0xff]
    %v93 = vld [vmem:[#allocation9 + $0x70] sm:$0xff]
    %v94 = vld [vmem:[#allocation9 + $0x78] sm:$0xff]
    %v95 = vld [vmem:[#allocation9 + $0x80] sm:$0xff]
    %v96 = vld [vmem:[#allocation9 + $0x88] sm:$0xff]
    %v97 = vld [vmem:[#allocation9 + $0x90] sm:$0xff]
    %v98 = vld [vmem:[#allocation9 + $0x98] sm:$0xff]
    %v99 = vld [vmem:[#allocation9 + $0xa0] sm:$0xff]
    %v100 = vld [vmem:[#allocation9 + $0xa8] sm:$0xff]
    %v101 = vld [vmem:[#allocation9 + $0xb0] sm:$0xff]
    %v102 = vld [vmem:[#allocation9 + $0xb8] sm:$0xff]
    %v103 = vld [vmem:[#allocation9 + $0xc0] sm:$0xff]
    %v104 = vld [vmem:[#allocation9 + $0xc8] sm:$0xff]
    %v105 = vld [vmem:[#allocation9 + $0xd0] sm:$0xff]
    %v106 = vld [vmem:[#allocation9 + $0xd8] sm:$0xff]
    %v107 = vld [vmem:[#allocation9 + $0xe0] sm:$0xff]
    %v108 = vld [vmem:[#allocation9 + $0xe8] sm:$0xff]
    %v109 = vld [vmem:[#allocation9 + $0xf0] sm:$0xff]
    %v110 = vld [vmem:[#allocation9 + $0xf8] sm:$0xff]
    %v111 = vld [vmem:[#allocation9 + $0x100] sm:$0xff]
    %v112 = vld [vmem:[#allocation9 + $0x108] sm:$0xff]
    %v113 = vld [vmem:[#allocation9 + $0x110] sm:$0xff]
    %v114 = vld [vmem:[#allocation9 + $0x118] sm:$0xff]
    %v115 = vld [vmem:[#allocation9 + $0x120] sm:$0xff]
    %v116 = vld [vmem:[#allocation9 + $0x128] sm:$0xff]
    %v117 = vld [vmem:[#allocation9 + $0x130] sm:$0xff]
    %v118 = vld [vmem:[#allocation9 + $0x138] sm:$0xff]
    %v119 = vld [vmem:[#allocation9 + $0x140] sm:$0xff]
    %v120 = vld [vmem:[#allocation9 + $0x148] sm:$0xff]
    %v121 = vld [vmem:[#allocation9 + $0x150] sm:$0xff]
    %v122 = vld [vmem:[#allocation9 + $0x158] sm:$0xff]
    %v123 = vld [vmem:[#allocation9 + $0x160] sm:$0xff]
    %v124 = vld [vmem:[#allocation9 + $0x168] sm:$0xff]
    %v125 = vld [vmem:[#allocation9 + $0x170] sm:$0xff]
    %v126 = vld [vmem:[#allocation9 + $0x178] sm:$0xff]
    %v127 = vld [vmem:[#allocation9 + $0x180] sm:$0xff]
    %v128 = vld [vmem:[#allocation9 + $0x188] sm:$0xff]
    %v129 = vld [vmem:[#allocation9 + $0x190] sm:$0xff]
    %v130 = vld [vmem:[#allocation9 + $0x198] sm:$0xff]
    %v131 = vld [vmem:[#allocation9 + $0x1a0] sm:$0xff]
    %v132 = vld [vmem:[#allocation9 + $0x1a8] sm:$0xff]
    %v133 = vld [vmem:[#allocation9 + $0x1b0] sm:$0xff]
    %v134 = vld [vmem:[#allocation9 + $0x1b8] sm:$0xff]
    %v135 = vld [vmem:[#allocation9 + $0x1c0] sm:$0xff]
    %v136 = vld [vmem:[#allocation9 + $0x1c8] sm:$0xff]
    %v137 = vld [vmem:[#allocation9 + $0x1d0] sm:$0xff]
    %v138 = vld [vmem:[#allocation9 + $0x1d8] sm:$0xff]
    %v139 = vld [vmem:[#allocation9 + $0x1e0] sm:$0xff]
    %v140 = vld [vmem:[#allocation9 + $0x1e8] sm:$0xff]
    %v141 = vld [vmem:[#allocation9 + $0x1f0] sm:$0xff]
    %v142 = vld [vmem:[#allocation9 + $0x1f8] sm:$0xff]
    %v143 = vld [vmem:[%s4] sm:$0xff]
    %v145 = vlaneseq
    %v146 = vshrl.u32 %v145, 7
    %v147 = vsub.s32 0, %v146
    %v148 = vrot.slane %v143, %v147
    %v149 = vlaneseq
    %v150 = vshrl.u32 %v149, 7
    %v151 = vsub.s32 1, %v150
    %v152 = vrot.slane %v143, %v151
    %v153 = vlaneseq
    %v154 = vshrl.u32 %v153, 7
    %v155 = vsub.s32 2, %v154
    %v156 = vrot.slane %v143, %v155
    %v157 = vlaneseq
    %v158 = vshrl.u32 %v157, 7
    %v159 = vsub.s32 3, %v158
    %v160 = vrot.slane %v143, %v159
    %v161 = vlaneseq
    %v162 = vshrl.u32 %v161, 7
    %v163 = vsub.s32 4, %v162
    %v164 = vrot.slane %v143, %v163
    %v165 = vlaneseq
    %v166 = vshrl.u32 %v165, 7
    %v167 = vsub.s32 5, %v166
    %v168 = vrot.slane %v143, %v167
    %v169 = vlaneseq
    %v170 = vshrl.u32 %v169, 7
    %v171 = vsub.s32 6, %v170
    %v172 = vrot.slane %v143, %v171
    %v173 = vlaneseq
    %v174 = vshrl.u32 %v173, 7
    %v175 = vsub.s32 7, %v174
    %v176 = vrot.slane %v143, %v175
    %v193 = vunpack.c.l.b16 %v71
    %v194 = vunpack.c.l.b16 %v72
    %v195 = vunpack.c.l.b16 %v73
    %v196 = vunpack.c.l.b16 %v74
    %v197 = vunpack.c.l.b16 %v75
    %v198 = vunpack.c.l.b16 %v76
    %v199 = vunpack.c.l.b16 %v77
    %v200 = vunpack.c.l.b16 %v78
    %v201 = vpack.c.b16 %v194, %v193
    %v202 = vpack.c.b16 %v196, %v195
    %v203 = vpack.c.b16 %v198, %v197
    %v204 = vpack.c.b16 %v200, %v199
    %v273 = vunpack.c.l.b16 %v79
    %v274 = vunpack.c.h.b16 %v79
    %v275 = vunpack.c.l.b16 %v80
    %v276 = vunpack.c.h.b16 %v80
    %v277 = vunpack.c.l.b16 %v81
    %v278 = vunpack.c.h.b16 %v81
    %v279 = vunpack.c.l.b16 %v82
    %v280 = vunpack.c.h.b16 %v82
    %v281 = vunpack.c.l.b16 %v83
    %v282 = vunpack.c.h.b16 %v83
    %v283 = vunpack.c.l.b16 %v84
    %v284 = vunpack.c.h.b16 %v84
    %v285 = vunpack.c.l.b16 %v85
    %v286 = vunpack.c.h.b16 %v85
    %v287 = vunpack.c.l.b16 %v86
    %v288 = vunpack.c.h.b16 %v86
    %v289 = vunpack.c.l.b16 %v87
    %v290 = vunpack.c.h.b16 %v87
    %v291 = vunpack.c.l.b16 %v88
    %v292 = vunpack.c.h.b16 %v88
    %v293 = vunpack.c.l.b16 %v89
    %v294 = vunpack.c.h.b16 %v89
    %v295 = vunpack.c.l.b16 %v90
    %v296 = vunpack.c.h.b16 %v90
    %v297 = vunpack.c.l.b16 %v91
    %v298 = vunpack.c.h.b16 %v91
    %v299 = vunpack.c.l.b16 %v92
    %v300 = vunpack.c.h.b16 %v92
    %v301 = vunpack.c.l.b16 %v93
    %v302 = vunpack.c.h.b16 %v93
    %v303 = vunpack.c.l.b16 %v94
    %v304 = vunpack.c.h.b16 %v94
    %v305 = vunpack.c.l.b16 %v95
    %v306 = vunpack.c.h.b16 %v95
    %v307 = vunpack.c.l.b16 %v96
    %v308 = vunpack.c.h.b16 %v96
    %v309 = vunpack.c.l.b16 %v97
    %v310 = vunpack.c.h.b16 %v97
    %v311 = vunpack.c.l.b16 %v98
    %v312 = vunpack.c.h.b16 %v98
    %v313 = vunpack.c.l.b16 %v99
    %v314 = vunpack.c.h.b16 %v99
    %v315 = vunpack.c.l.b16 %v100
    %v316 = vunpack.c.h.b16 %v100
    %v317 = vunpack.c.l.b16 %v101
    %v318 = vunpack.c.h.b16 %v101
    %v319 = vunpack.c.l.b16 %v102
    %v320 = vunpack.c.h.b16 %v102
    %v321 = vunpack.c.l.b16 %v103
    %v322 = vunpack.c.h.b16 %v103
    %v323 = vunpack.c.l.b16 %v104
    %v324 = vunpack.c.h.b16 %v104
    %v325 = vunpack.c.l.b16 %v105
    %v326 = vunpack.c.h.b16 %v105
    %v327 = vunpack.c.l.b16 %v106
    %v328 = vunpack.c.h.b16 %v106
    %v329 = vunpack.c.l.b16 %v107
    %v330 = vunpack.c.h.b16 %v107
    %v331 = vunpack.c.l.b16 %v108
    %v332 = vunpack.c.h.b16 %v108
    %v333 = vunpack.c.l.b16 %v109
    %v334 = vunpack.c.h.b16 %v109
    %v335 = vunpack.c.l.b16 %v110
    %v336 = vunpack.c.h.b16 %v110
    %v337 = vunpack.c.l.b16 %v111
    %v338 = vunpack.c.h.b16 %v111
    %v339 = vunpack.c.l.b16 %v112
    %v340 = vunpack.c.h.b16 %v112
    %v341 = vunpack.c.l.b16 %v113
    %v342 = vunpack.c.h.b16 %v113
    %v343 = vunpack.c.l.b16 %v114
    %v344 = vunpack.c.h.b16 %v114
    %v345 = vunpack.c.l.b16 %v115
    %v346 = vunpack.c.h.b16 %v115
    %v347 = vunpack.c.l.b16 %v116
    %v348 = vunpack.c.h.b16 %v116
    %v349 = vunpack.c.l.b16 %v117
    %v350 = vunpack.c.h.b16 %v117
    %v351 = vunpack.c.l.b16 %v118
    %v352 = vunpack.c.h.b16 %v118
    %v353 = vunpack.c.l.b16 %v119
    %v354 = vunpack.c.h.b16 %v119
    %v355 = vunpack.c.l.b16 %v120
    %v356 = vunpack.c.h.b16 %v120
    %v357 = vunpack.c.l.b16 %v121
    %v358 = vunpack.c.h.b16 %v121
    %v359 = vunpack.c.l.b16 %v122
    %v360 = vunpack.c.h.b16 %v122
    %v361 = vunpack.c.l.b16 %v123
    %v362 = vunpack.c.h.b16 %v123
    %v363 = vunpack.c.l.b16 %v124
    %v364 = vunpack.c.h.b16 %v124
    %v365 = vunpack.c.l.b16 %v125
    %v366 = vunpack.c.h.b16 %v125
    %v367 = vunpack.c.l.b16 %v126
    %v368 = vunpack.c.h.b16 %v126
    %v369 = vunpack.c.l.b16 %v127
    %v370 = vunpack.c.h.b16 %v127
    %v371 = vunpack.c.l.b16 %v128
    %v372 = vunpack.c.h.b16 %v128
    %v373 = vunpack.c.l.b16 %v129
    %v374 = vunpack.c.h.b16 %v129
    %v375 = vunpack.c.l.b16 %v130
    %v376 = vunpack.c.h.b16 %v130
    %v377 = vunpack.c.l.b16 %v131
    %v378 = vunpack.c.h.b16 %v131
    %v379 = vunpack.c.l.b16 %v132
    %v380 = vunpack.c.h.b16 %v132
    %v381 = vunpack.c.l.b16 %v133
    %v382 = vunpack.c.h.b16 %v133
    %v383 = vunpack.c.l.b16 %v134
    %v384 = vunpack.c.h.b16 %v134
    %v385 = vunpack.c.l.b16 %v135
    %v386 = vunpack.c.h.b16 %v135
    %v387 = vunpack.c.l.b16 %v136
    %v388 = vunpack.c.h.b16 %v136
    %v389 = vunpack.c.l.b16 %v137
    %v390 = vunpack.c.h.b16 %v137
    %v391 = vunpack.c.l.b16 %v138
    %v392 = vunpack.c.h.b16 %v138
    %v393 = vunpack.c.l.b16 %v139
    %v394 = vunpack.c.h.b16 %v139
    %v395 = vunpack.c.l.b16 %v140
    %v396 = vunpack.c.h.b16 %v140
    %v397 = vunpack.c.l.b16 %v141
    %v398 = vunpack.c.h.b16 %v141
    %v399 = vunpack.c.l.b16 %v142
    %v400 = vunpack.c.h.b16 %v142
    %v401 = vpack.c.b16 %v281, %v273
    %v402 = vpack.c.b16 %v282, %v274
    %v403 = vpack.c.b16 %v283, %v275
    %v404 = vpack.c.b16 %v284, %v276
    %v405 = vpack.c.b16 %v285, %v277
    %v406 = vpack.c.b16 %v286, %v278
    %v407 = vpack.c.b16 %v287, %v279
    %v408 = vpack.c.b16 %v288, %v280
    %v409 = vpack.c.b16 %v297, %v289
    %v410 = vpack.c.b16 %v298, %v290
    %v411 = vpack.c.b16 %v299, %v291
    %v412 = vpack.c.b16 %v300, %v292
    %v413 = vpack.c.b16 %v301, %v293
    %v414 = vpack.c.b16 %v302, %v294
    %v415 = vpack.c.b16 %v303, %v295
    %v416 = vpack.c.b16 %v304, %v296
    %v417 = vpack.c.b16 %v313, %v305
    %v418 = vpack.c.b16 %v314, %v306
    %v419 = vpack.c.b16 %v315, %v307
    %v420 = vpack.c.b16 %v316, %v308
    %v421 = vpack.c.b16 %v317, %v309
    %v422 = vpack.c.b16 %v318, %v310
    %v423 = vpack.c.b16 %v319, %v311
    %v424 = vpack.c.b16 %v320, %v312
    %v425 = vpack.c.b16 %v329, %v321
    %v426 = vpack.c.b16 %v330, %v322
    %v427 = vpack.c.b16 %v331, %v323
    %v428 = vpack.c.b16 %v332, %v324
    %v429 = vpack.c.b16 %v333, %v325
    %v430 = vpack.c.b16 %v334, %v326
    %v431 = vpack.c.b16 %v335, %v327
    %v432 = vpack.c.b16 %v336, %v328
    %v433 = vpack.c.b16 %v345, %v337
    %v434 = vpack.c.b16 %v346, %v338
    %v435 = vpack.c.b16 %v347, %v339
    %v436 = vpack.c.b16 %v348, %v340
    %v437 = vpack.c.b16 %v349, %v341
    %v438 = vpack.c.b16 %v350, %v342
    %v439 = vpack.c.b16 %v351, %v343
    %v440 = vpack.c.b16 %v352, %v344
    %v441 = vpack.c.b16 %v361, %v353
    %v442 = vpack.c.b16 %v362, %v354
    %v443 = vpack.c.b16 %v363, %v355
    %v444 = vpack.c.b16 %v364, %v356
    %v445 = vpack.c.b16 %v365, %v357
    %v446 = vpack.c.b16 %v366, %v358
    %v447 = vpack.c.b16 %v367, %v359
    %v448 = vpack.c.b16 %v368, %v360
    %v449 = vpack.c.b16 %v377, %v369
    %v450 = vpack.c.b16 %v378, %v370
    %v451 = vpack.c.b16 %v379, %v371
    %v452 = vpack.c.b16 %v380, %v372
    %v453 = vpack.c.b16 %v381, %v373
    %v454 = vpack.c.b16 %v382, %v374
    %v455 = vpack.c.b16 %v383, %v375
    %v456 = vpack.c.b16 %v384, %v376
    %v457 = vpack.c.b16 %v393, %v385
    %v458 = vpack.c.b16 %v394, %v386
    %v459 = vpack.c.b16 %v395, %v387
    %v460 = vpack.c.b16 %v396, %v388
    %v461 = vpack.c.b16 %v397, %v389
    %v462 = vpack.c.b16 %v398, %v390
    %v463 = vpack.c.b16 %v399, %v391
    %v464 = vpack.c.b16 %v400, %v392
    %529 = vmatprep.subr.bf16.mxu0 %v402
    %530 = vmatpush1.bf16.msra.mxu0 %v401
    %531 = vmatprep.subr.bf16.mxu0 %v410
    %532 = vmatpush1.bf16.msra.mxu0 %v409
    %533 = vmatprep.subr.bf16.mxu0 %v418
    %534 = vmatpush1.bf16.msra.mxu0 %v417
    %535 = vmatprep.subr.bf16.mxu0 %v426
    %536 = vmatpush1.bf16.msra.mxu0 %v425
    %537 = vmatprep.subr.bf16.mxu0 %v434
    %538 = vmatpush1.bf16.msra.mxu0 %v433
    %539 = vmatprep.subr.bf16.mxu0 %v442
    %540 = vmatpush1.bf16.msra.mxu0 %v441
    %541 = vmatprep.subr.bf16.mxu0 %v450
    %542 = vmatpush1.bf16.msra.mxu0 %v449
    %543 = vmatprep.subr.bf16.mxu0 %v458
    %544 = vmatpush1.bf16.msra.mxu0 %v457
    %545 = vmatprep.subr.bf16.mxu0 0
    %546 = vmatpush1.bf16.msra.mxu0 0
    %547 = vmatprep.subr.bf16.mxu0 0
    %548 = vmatpush1.bf16.msra.mxu0 0
    %549 = vmatprep.subr.bf16.mxu0 0
    %550 = vmatpush1.bf16.msra.mxu0 0
    %551 = vmatprep.subr.bf16.mxu0 0
    %552 = vmatpush1.bf16.msra.mxu0 0
    %553 = vmatprep.subr.bf16.mxu0 0
    %554 = vmatpush1.bf16.msra.mxu0 0
    %555 = vmatprep.subr.bf16.mxu0 0
    %556 = vmatpush1.bf16.msra.mxu0 0
    %557 = vmatprep.subr.bf16.mxu0 0
    %558 = vmatpush1.bf16.msra.mxu0 0
    %559 = vmatprep.subr.bf16.mxu0 0
    %560 = vmatpush1.bf16.msra.mxu0 0
    %561 = vmatprep.mubr.bf16.mxu0 0
    %562 = vmatmul.mubr.bf16.gmra.mrb[0].mxu0 %v201
    %v563 = vpop.f32.mrb[0].mxu0
    %v564 = vadd.f32 %v148, %v563
    %v565 = vpop.f32.mrb[0].mxu0
    %v566 = vadd.f32 %v152, %v565
    %v567 = vpop.f32.mrb[0].mxu0
    %v568 = vadd.f32 %v148, %v567
    %v569 = vpop.f32.mrb[0].mxu0
    %v570 = vadd.f32 %v152, %v569
    %571 = vmatprep.mubr.bf16.mxu0 0
    %572 = vmatmul.mubr.bf16.gmra.mrb[0].mxu0 %v202
    %v573 = vpop.f32.mrb[0].mxu0
    %v574 = vadd.f32 %v148, %v573
    %v575 = vpop.f32.mrb[0].mxu0
    %v576 = vadd.f32 %v152, %v575
    %v577 = vpop.f32.mrb[0].mxu0
    %v578 = vadd.f32 %v148, %v577
    %v579 = vpop.f32.mrb[0].mxu0
    %v580 = vadd.f32 %v152, %v579
    %581 = vmatprep.mubr.bf16.mxu0 0
    %582 = vmatmul.mubr.bf16.gmra.mrb[0].mxu0 %v203
    %v583 = vpop.f32.mrb[0].mxu0
    %v584 = vadd.f32 %v148, %v583
    %v585 = vpop.f32.mrb[0].mxu0
    %v586 = vadd.f32 %v152, %v585
    %v587 = vpop.f32.mrb[0].mxu0
    %v588 = vadd.f32 %v148, %v587
    %v589 = vpop.f32.mrb[0].mxu0
    %v590 = vadd.f32 %v152, %v589
    %591 = vmatprep.mubr.bf16.mxu0 0
    %592 = vmatmul.mubr.bf16.gmra.mrb[0].mxu0 %v204
    %v593 = vpop.f32.mrb[0].mxu0
    %v594 = vadd.f32 %v148, %v593
    %v595 = vpop.f32.mrb[0].mxu0
    %v596 = vadd.f32 %v152, %v595
    %v597 = vpop.f32.mrb[0].mxu0
    %v598 = vadd.f32 %v148, %v597
    %v599 = vpop.f32.mrb[0].mxu0
    %v600 = vadd.f32 %v152, %v599
    %601 = vdwg.mxu0
    %602 = vmatprep.subr.bf16.mxu0 %v404
    %603 = vmatpush1.bf16.msra.mxu0 %v403
    %604 = vmatprep.subr.bf16.mxu0 %v412
    %605 = vmatpush1.bf16.msra.mxu0 %v411
    %606 = vmatprep.subr.bf16.mxu0 %v420
    %607 = vmatpush1.bf16.msra.mxu0 %v419
    %608 = vmatprep.subr.bf16.mxu0 %v428
    %609 = vmatpush1.bf16.msra.mxu0 %v427
    %610 = vmatprep.subr.bf16.mxu0 %v436
    %611 = vmatpush1.bf16.msra.mxu0 %v435
    %612 = vmatprep.subr.bf16.mxu0 %v444
    %613 = vmatpush1.bf16.msra.mxu0 %v443
    %614 = vmatprep.subr.bf16.mxu0 %v452
    %615 = vmatpush1.bf16.msra.mxu0 %v451
    %616 = vmatprep.subr.bf16.mxu0 %v460
    %617 = vmatpush1.bf16.msra.mxu0 %v459
    %618 = vmatprep.subr.bf16.mxu0 0
    %619 = vmatpush1.bf16.msra.mxu0 0
    %620 = vmatprep.subr.bf16.mxu0 0
    %621 = vmatpush1.bf16.msra.mxu0 0
    %622 = vmatprep.subr.bf16.mxu0 0
    %623 = vmatpush1.bf16.msra.mxu0 0
    %624 = vmatprep.subr.bf16.mxu0 0
    %625 = vmatpush1.bf16.msra.mxu0 0
    %626 = vmatprep.subr.bf16.mxu0 0
    %627 = vmatpush1.bf16.msra.mxu0 0
    %628 = vmatprep.subr.bf16.mxu0 0
    %629 = vmatpush1.bf16.msra.mxu0 0
    %630 = vmatprep.subr.bf16.mxu0 0
    %631 = vmatpush1.bf16.msra.mxu0 0
    %632 = vmatprep.subr.bf16.mxu0 0
    %633 = vmatpush1.bf16.msra.mxu0 0
    %634 = vmatprep.mubr.bf16.mxu0 0
    %635 = vmatmul.mubr.bf16.gmra.mrb[0].mxu0 %v201
    %v636 = vpop.f32.mrb[0].mxu0
    %v637 = vadd.f32 %v156, %v636
    %v638 = vpop.f32.mrb[0].mxu0
    %v639 = vadd.f32 %v160, %v638
    %v640 = vpop.f32.mrb[0].mxu0
    %v641 = vadd.f32 %v156, %v640
    %v642 = vpop.f32.mrb[0].mxu0
    %v643 = vadd.f32 %v160, %v642
    %644 = vmatprep.mubr.bf16.mxu0 0
    %645 = vmatmul.mubr.bf16.gmra.mrb[0].mxu0 %v202
    %v646 = vpop.f32.mrb[0].mxu0
    %v647 = vadd.f32 %v156, %v646
    %v648 = vpop.f32.mrb[0].mxu0
    %v649 = vadd.f32 %v160, %v648
    %v650 = vpop.f32.mrb[0].mxu0
    %v651 = vadd.f32 %v156, %v650
    %v652 = vpop.f32.mrb[0].mxu0
    %v653 = vadd.f32 %v160, %v652
    %654 = vmatprep.mubr.bf16.mxu0 0
    %655 = vmatmul.mubr.bf16.gmra.mrb[0].mxu0 %v203
    %v656 = vpop.f32.mrb[0].mxu0
    %v657 = vadd.f32 %v156, %v656
    %v658 = vpop.f32.mrb[0].mxu0
    %v659 = vadd.f32 %v160, %v658
    %v660 = vpop.f32.mrb[0].mxu0
    %v661 = vadd.f32 %v156, %v660
    %v662 = vpop.f32.mrb[0].mxu0
    %v663 = vadd.f32 %v160, %v662
    %664 = vmatprep.mubr.bf16.mxu0 0
    %665 = vmatmul.mubr.bf16.gmra.mrb[0].mxu0 %v204
    %v666 = vpop.f32.mrb[0].mxu0
    %v667 = vadd.f32 %v156, %v666
    %v668 = vpop.f32.mrb[0].mxu0
    %v669 = vadd.f32 %v160, %v668
    %v670 = vpop.f32.mrb[0].mxu0
    %v671 = vadd.f32 %v156, %v670
    %v672 = vpop.f32.mrb[0].mxu0
    %v673 = vadd.f32 %v160, %v672
    %674 = vdwg.mxu0
    %675 = vmatprep.subr.bf16.mxu0 %v406
    %676 = vmatpush1.bf16.msra.mxu0 %v405
    %677 = vmatprep.subr.bf16.mxu0 %v414
    %678 = vmatpush1.bf16.msra.mxu0 %v413
    %679 = vmatprep.subr.bf16.mxu0 %v422
    %680 = vmatpush1.bf16.msra.mxu0 %v421
    %681 = vmatprep.subr.bf16.mxu0 %v430
    %682 = vmatpush1.bf16.msra.mxu0 %v429
    %683 = vmatprep.subr.bf16.mxu0 %v438
    %684 = vmatpush1.bf16.msra.mxu0 %v437
    %685 = vmatprep.subr.bf16.mxu0 %v446
    %686 = vmatpush1.bf16.msra.mxu0 %v445
    %687 = vmatprep.subr.bf16.mxu0 %v454
    %688 = vmatpush1.bf16.msra.mxu0 %v453
    %689 = vmatprep.subr.bf16.mxu0 %v462
    %690 = vmatpush1.bf16.msra.mxu0 %v461
    %691 = vmatprep.subr.bf16.mxu0 0
    %692 = vmatpush1.bf16.msra.mxu0 0
    %693 = vmatprep.subr.bf16.mxu0 0
    %694 = vmatpush1.bf16.msra.mxu0 0
    %695 = vmatprep.subr.bf16.mxu0 0
    %696 = vmatpush1.bf16.msra.mxu0 0
    %697 = vmatprep.subr.bf16.mxu0 0
    %698 = vmatpush1.bf16.msra.mxu0 0
    %699 = vmatprep.subr.bf16.mxu0 0
    %700 = vmatpush1.bf16.msra.mxu0 0
    %701 = vmatprep.subr.bf16.mxu0 0
    %702 = vmatpush1.bf16.msra.mxu0 0
    %703 = vmatprep.subr.bf16.mxu0 0
    %704 = vmatpush1.bf16.msra.mxu0 0
    %705 = vmatprep.subr.bf16.mxu0 0
    %706 = vmatpush1.bf16.msra.mxu0 0
    %707 = vmatprep.mubr.bf16.mxu0 0
    %708 = vmatmul.mubr.bf16.gmra.mrb[0].mxu0 %v201
    %v709 = vpop.f32.mrb[0].mxu0
    %v710 = vadd.f32 %v164, %v709
    %v711 = vpop.f32.mrb[0].mxu0
    %v712 = vadd.f32 %v168, %v711
    %v713 = vpop.f32.mrb[0].mxu0
    %v714 = vadd.f32 %v164, %v713
    %v715 = vpop.f32.mrb[0].mxu0
    %v716 = vadd.f32 %v168, %v715
    %717 = vmatprep.mubr.bf16.mxu0 0
    %718 = vmatmul.mubr.bf16.gmra.mrb[0].mxu0 %v202
    %v719 = vpop.f32.mrb[0].mxu0
    %v720 = vadd.f32 %v164, %v719
    %v721 = vpop.f32.mrb[0].mxu0
    %v722 = vadd.f32 %v168, %v721
    %v723 = vpop.f32.mrb[0].mxu0
    %v724 = vadd.f32 %v164, %v723
    %v725 = vpop.f32.mrb[0].mxu0
    %v726 = vadd.f32 %v168, %v725
    %727 = vmatprep.mubr.bf16.mxu0 0
    %728 = vmatmul.mubr.bf16.gmra.mrb[0].mxu0 %v203
    %v729 = vpop.f32.mrb[0].mxu0
    %v730 = vadd.f32 %v164, %v729
    %v731 = vpop.f32.mrb[0].mxu0
    %v732 = vadd.f32 %v168, %v731
    %v733 = vpop.f32.mrb[0].mxu0
    %v734 = vadd.f32 %v164, %v733
    %v735 = vpop.f32.mrb[0].mxu0
    %v736 = vadd.f32 %v168, %v735
    %737 = vmatprep.mubr.bf16.mxu0 0
    %738 = vmatmul.mubr.bf16.gmra.mrb[0].mxu0 %v204
    %v739 = vpop.f32.mrb[0].mxu0
    %v740 = vadd.f32 %v164, %v739
    %v741 = vpop.f32.mrb[0].mxu0
    %v742 = vadd.f32 %v168, %v741
    %v743 = vpop.f32.mrb[0].mxu0
    %v744 = vadd.f32 %v164, %v743
    %v745 = vpop.f32.mrb[0].mxu0
    %v746 = vadd.f32 %v168, %v745
    %747 = vdwg.mxu0
    %748 = vmatprep.subr.bf16.mxu0 %v408
    %749 = vmatpush1.bf16.msra.mxu0 %v407
    %750 = vmatprep.subr.bf16.mxu0 %v416
    %751 = vmatpush1.bf16.msra.mxu0 %v415
    %752 = vmatprep.subr.bf16.mxu0 %v424
    %753 = vmatpush1.bf16.msra.mxu0 %v423
    %754 = vmatprep.subr.bf16.mxu0 %v432
    %755 = vmatpush1.bf16.msra.mxu0 %v431
    %756 = vmatprep.subr.bf16.mxu0 %v440
    %757 = vmatpush1.bf16.msra.mxu0 %v439
    %758 = vmatprep.subr.bf16.mxu0 %v448
    %759 = vmatpush1.bf16.msra.mxu0 %v447
    %760 = vmatprep.subr.bf16.mxu0 %v456
    %761 = vmatpush1.bf16.msra.mxu0 %v455
    %762 = vmatprep.subr.bf16.mxu0 %v464
    %763 = vmatpush1.bf16.msra.mxu0 %v463
    %764 = vmatprep.subr.bf16.mxu0 0
    %765 = vmatpush1.bf16.msra.mxu0 0
    %766 = vmatprep.subr.bf16.mxu0 0
    %767 = vmatpush1.bf16.msra.mxu0 0
    %768 = vmatprep.subr.bf16.mxu0 0
    %769 = vmatpush1.bf16.msra.mxu0 0
    %770 = vmatprep.subr.bf16.mxu0 0
    %771 = vmatpush1.bf16.msra.mxu0 0
    %772 = vmatprep.subr.bf16.mxu0 0
    %773 = vmatpush1.bf16.msra.mxu0 0
    %774 = vmatprep.subr.bf16.mxu0 0
    %775 = vmatpush1.bf16.msra.mxu0 0
    %776 = vmatprep.subr.bf16.mxu0 0
    %777 = vmatpush1.bf16.msra.mxu0 0
    %778 = vmatprep.subr.bf16.mxu0 0
    %779 = vmatpush1.bf16.msra.mxu0 0
    %780 = vmatprep.mubr.bf16.mxu0 0
    %781 = vmatmul.mubr.bf16.gmra.mrb[0].mxu0 %v201
    %v782 = vpop.f32.mrb[0].mxu0
    %v783 = vadd.f32 %v172, %v782
    %v784 = vpop.f32.mrb[0].mxu0
    %v785 = vadd.f32 %v176, %v784
    %v786 = vpop.f32.mrb[0].mxu0
    %v787 = vadd.f32 %v172, %v786
    %v788 = vpop.f32.mrb[0].mxu0
    %v789 = vadd.f32 %v176, %v788
    %790 = vmatprep.mubr.bf16.mxu0 0
    %791 = vmatmul.mubr.bf16.gmra.mrb[0].mxu0 %v202
    %v792 = vpop.f32.mrb[0].mxu0
    %v793 = vadd.f32 %v172, %v792
    %v794 = vpop.f32.mrb[0].mxu0
    %v795 = vadd.f32 %v176, %v794
    %v796 = vpop.f32.mrb[0].mxu0
    %v797 = vadd.f32 %v172, %v796
    %v798 = vpop.f32.mrb[0].mxu0
    %v799 = vadd.f32 %v176, %v798
    %800 = vmatprep.mubr.bf16.mxu0 0
    %801 = vmatmul.mubr.bf16.gmra.mrb[0].mxu0 %v203
    %v802 = vpop.f32.mrb[0].mxu0
    %v803 = vadd.f32 %v172, %v802
    %v804 = vpop.f32.mrb[0].mxu0
    %v805 = vadd.f32 %v176, %v804
    %v806 = vpop.f32.mrb[0].mxu0
    %v807 = vadd.f32 %v172, %v806
    %v808 = vpop.f32.mrb[0].mxu0
    %v809 = vadd.f32 %v176, %v808
    %810 = vmatprep.mubr.bf16.mxu0 0
    %811 = vmatmul.mubr.bf16.gmra.mrb[0].mxu0 %v204
    %v812 = vpop.f32.mrb[0].mxu0
    %v813 = vadd.f32 %v172, %v812
    %v814 = vpop.f32.mrb[0].mxu0
    %v815 = vadd.f32 %v176, %v814
    %v816 = vpop.f32.mrb[0].mxu0
    %v817 = vadd.f32 %v172, %v816
    %v818 = vpop.f32.mrb[0].mxu0
    %v819 = vadd.f32 %v176, %v818
    %820 = vdwg.mxu0
    %v821 = vld [vmem:[%s1] sm:$0xff]
    %s822 = smul.u32 0, 8
    %v823 = vld [vmem:[#allocation2] sm:$0xff]
    %v824 = vld [vmem:[#allocation2 + $0x8] sm:$0xff]
    %v825 = vld [vmem:[#allocation3] sm:$0xff]
    %v826 = vld [vmem:[#allocation3 + $0x8] sm:$0xff]
    %v827 = vpack.c.bf16 %v823, %v823
    %v828 = vpack.c.bf16 %v824, %v824
    %v829 = vld [vmem:[#allocation7] sm:$0xff]
    %v830 = vld [vmem:[#allocation7 + $0x8] sm:$0xff]
    %v831 = vld [vmem:[#allocation7 + $0x10] sm:$0xff]
    %v832 = vld [vmem:[#allocation7 + $0x18] sm:$0xff]
    %v833 = vld [vmem:[#allocation7 + $0x20] sm:$0xff]
    %v834 = vld [vmem:[#allocation7 + $0x28] sm:$0xff]
    %v835 = vld [vmem:[#allocation7 + $0x30] sm:$0xff]
    %v836 = vld [vmem:[#allocation7 + $0x38] sm:$0xff]
    %v837 = vld [vmem:[#allocation7 + $0x40] sm:$0xff]
    %v838 = vld [vmem:[#allocation7 + $0x48] sm:$0xff]
    %v839 = vld [vmem:[#allocation7 + $0x50] sm:$0xff]
    %v840 = vld [vmem:[#allocation7 + $0x58] sm:$0xff]
    %v841 = vld [vmem:[#allocation7 + $0x60] sm:$0xff]
    %v842 = vld [vmem:[#allocation7 + $0x68] sm:$0xff]
    %v843 = vld [vmem:[#allocation7 + $0x70] sm:$0xff]
    %v844 = vld [vmem:[#allocation7 + $0x78] sm:$0xff]
    %v845 = vld [vmem:[#allocation7 + $0x80] sm:$0xff]
    %v846 = vld [vmem:[#allocation7 + $0x88] sm:$0xff]
    %v847 = vld [vmem:[#allocation7 + $0x90] sm:$0xff]
    %v848 = vld [vmem:[#allocation7 + $0x98] sm:$0xff]
    %v849 = vld [vmem:[#allocation7 + $0xa0] sm:$0xff]
    %v850 = vld [vmem:[#allocation7 + $0xa8] sm:$0xff]
    %v851 = vld [vmem:[#allocation7 + $0xb0] sm:$0xff]
    %v852 = vld [vmem:[#allocation7 + $0xb8] sm:$0xff]
    %v853 = vld [vmem:[#allocation7 + $0xc0] sm:$0xff]
    %v854 = vld [vmem:[#allocation7 + $0xc8] sm:$0xff]
    %v855 = vld [vmem:[#allocation7 + $0xd0] sm:$0xff]
    %v856 = vld [vmem:[#allocation7 + $0xd8] sm:$0xff]
    %v857 = vld [vmem:[#allocation7 + $0xe0] sm:$0xff]
    %v858 = vld [vmem:[#allocation7 + $0xe8] sm:$0xff]
    %v859 = vld [vmem:[#allocation7 + $0xf0] sm:$0xff]
    %v860 = vld [vmem:[#allocation7 + $0xf8] sm:$0xff]
    %v861 = vld [vmem:[#allocation7 + $0x100] sm:$0xff]
    %v862 = vld [vmem:[#allocation7 + $0x108] sm:$0xff]
    %v863 = vld [vmem:[#allocation7 + $0x110] sm:$0xff]
    %v864 = vld [vmem:[#allocation7 + $0x118] sm:$0xff]
    %v865 = vld [vmem:[#allocation7 + $0x120] sm:$0xff]
    %v866 = vld [vmem:[#allocation7 + $0x128] sm:$0xff]
    %v867 = vld [vmem:[#allocation7 + $0x130] sm:$0xff]
    %v868 = vld [vmem:[#allocation7 + $0x138] sm:$0xff]
    %v869 = vld [vmem:[#allocation7 + $0x140] sm:$0xff]
    %v870 = vld [vmem:[#allocation7 + $0x148] sm:$0xff]
    %v871 = vld [vmem:[#allocation7 + $0x150] sm:$0xff]
    %v872 = vld [vmem:[#allocation7 + $0x158] sm:$0xff]
    %v873 = vld [vmem:[#allocation7 + $0x160] sm:$0xff]
    %v874 = vld [vmem:[#allocation7 + $0x168] sm:$0xff]
    %v875 = vld [vmem:[#allocation7 + $0x170] sm:$0xff]
    %v876 = vld [vmem:[#allocation7 + $0x178] sm:$0xff]
    %v877 = vld [vmem:[#allocation7 + $0x180] sm:$0xff]
    %v878 = vld [vmem:[#allocation7 + $0x188] sm:$0xff]
    %v879 = vld [vmem:[#allocation7 + $0x190] sm:$0xff]
    %v880 = vld [vmem:[#allocation7 + $0x198] sm:$0xff]
    %v881 = vld [vmem:[#allocation7 + $0x1a0] sm:$0xff]
    %v882 = vld [vmem:[#allocation7 + $0x1a8] sm:$0xff]
    %v883 = vld [vmem:[#allocation7 + $0x1b0] sm:$0xff]
    %v884 = vld [vmem:[#allocation7 + $0x1b8] sm:$0xff]
    %v885 = vld [vmem:[#allocation7 + $0x1c0] sm:$0xff]
    %v886 = vld [vmem:[#allocation7 + $0x1c8] sm:$0xff]
    %v887 = vld [vmem:[#allocation7 + $0x1d0] sm:$0xff]
    %v888 = vld [vmem:[#allocation7 + $0x1d8] sm:$0xff]
    %v889 = vld [vmem:[#allocation7 + $0x1e0] sm:$0xff]
    %v890 = vld [vmem:[#allocation7 + $0x1e8] sm:$0xff]
    %v891 = vld [vmem:[#allocation7 + $0x1f0] sm:$0xff]
    %v892 = vld [vmem:[#allocation7 + $0x1f8] sm:$0xff]
    %v893 = vld [vmem:[#allocation7 + $0x200] sm:$0xff]
    %v894 = vld [vmem:[#allocation7 + $0x208] sm:$0xff]
    %v895 = vld [vmem:[#allocation7 + $0x210] sm:$0xff]
    %v896 = vld [vmem:[#allocation7 + $0x218] sm:$0xff]
    %v897 = vld [vmem:[#allocation7 + $0x220] sm:$0xff]
    %v898 = vld [vmem:[#allocation7 + $0x228] sm:$0xff]
    %v899 = vld [vmem:[#allocation7 + $0x230] sm:$0xff]
    %v900 = vld [vmem:[#allocation7 + $0x238] sm:$0xff]
    %v901 = vld [vmem:[#allocation7 + $0x240] sm:$0xff]
    %v902 = vld [vmem:[#allocation7 + $0x248] sm:$0xff]
    %v903 = vld [vmem:[#allocation7 + $0x250] sm:$0xff]
    %v904 = vld [vmem:[#allocation7 + $0x258] sm:$0xff]
    %v905 = vld [vmem:[#allocation7 + $0x260] sm:$0xff]
    %v906 = vld [vmem:[#allocation7 + $0x268] sm:$0xff]
    %v907 = vld [vmem:[#allocation7 + $0x270] sm:$0xff]
    %v908 = vld [vmem:[#allocation7 + $0x278] sm:$0xff]
    %v909 = vld [vmem:[#allocation7 + $0x280] sm:$0xff]
    %v910 = vld [vmem:[#allocation7 + $0x288] sm:$0xff]
    %v911 = vld [vmem:[#allocation7 + $0x290] sm:$0xff]
    %v912 = vld [vmem:[#allocation7 + $0x298] sm:$0xff]
    %v913 = vld [vmem:[#allocation7 + $0x2a0] sm:$0xff]
    %v914 = vld [vmem:[#allocation7 + $0x2a8] sm:$0xff]
    %v915 = vld [vmem:[#allocation7 + $0x2b0] sm:$0xff]
    %v916 = vld [vmem:[#allocation7 + $0x2b8] sm:$0xff]
    %v917 = vld [vmem:[#allocation7 + $0x2c0] sm:$0xff]
    %v918 = vld [vmem:[#allocation7 + $0x2c8] sm:$0xff]
    %v919 = vld [vmem:[#allocation7 + $0x2d0] sm:$0xff]
    %v920 = vld [vmem:[#allocation7 + $0x2d8] sm:$0xff]
    %v921 = vld [vmem:[#allocation7 + $0x2e0] sm:$0xff]
    %v922 = vld [vmem:[#allocation7 + $0x2e8] sm:$0xff]
    %v923 = vld [vmem:[#allocation7 + $0x2f0] sm:$0xff]
    %v924 = vld [vmem:[#allocation7 + $0x2f8] sm:$0xff]
    %v925 = vld [vmem:[#allocation7 + $0x300] sm:$0xff]
    %v926 = vld [vmem:[#allocation7 + $0x308] sm:$0xff]
    %v927 = vld [vmem:[#allocation7 + $0x310] sm:$0xff]
    %v928 = vld [vmem:[#allocation7 + $0x318] sm:$0xff]
    %v929 = vld [vmem:[#allocation7 + $0x320] sm:$0xff]
    %v930 = vld [vmem:[#allocation7 + $0x328] sm:$0xff]
    %v931 = vld [vmem:[#allocation7 + $0x330] sm:$0xff]
    %v932 = vld [vmem:[#allocation7 + $0x338] sm:$0xff]
    %v933 = vld [vmem:[#allocation7 + $0x340] sm:$0xff]
    %v934 = vld [vmem:[#allocation7 + $0x348] sm:$0xff]
    %v935 = vld [vmem:[#allocation7 + $0x350] sm:$0xff]
    %v936 = vld [vmem:[#allocation7 + $0x358] sm:$0xff]
    %v937 = vld [vmem:[#allocation7 + $0x360] sm:$0xff]
    %v938 = vld [vmem:[#allocation7 + $0x368] sm:$0xff]
    %v939 = vld [vmem:[#allocation7 + $0x370] sm:$0xff]
    %v940 = vld [vmem:[#allocation7 + $0x378] sm:$0xff]
    %v941 = vld [vmem:[#allocation7 + $0x380] sm:$0xff]
    %v942 = vld [vmem:[#allocation7 + $0x388] sm:$0xff]
    %v943 = vld [vmem:[#allocation7 + $0x390] sm:$0xff]
    %v944 = vld [vmem:[#allocation7 + $0x398] sm:$0xff]
    %v945 = vld [vmem:[#allocation7 + $0x3a0] sm:$0xff]
    %v946 = vld [vmem:[#allocation7 + $0x3a8] sm:$0xff]
    %v947 = vld [vmem:[#allocation7 + $0x3b0] sm:$0xff]
    %v948 = vld [vmem:[#allocation7 + $0x3b8] sm:$0xff]
    %v949 = vld [vmem:[#allocation7 + $0x3c0] sm:$0xff]
    %v950 = vld [vmem:[#allocation7 + $0x3c8] sm:$0xff]
    %v951 = vld [vmem:[#allocation7 + $0x3d0] sm:$0xff]
    %v952 = vld [vmem:[#allocation7 + $0x3d8] sm:$0xff]
    %v953 = vld [vmem:[#allocation7 + $0x3e0] sm:$0xff]
    %v954 = vld [vmem:[#allocation7 + $0x3e8] sm:$0xff]
    %v955 = vld [vmem:[#allocation7 + $0x3f0] sm:$0xff]
    %v956 = vld [vmem:[#allocation7 + $0x3f8] sm:$0xff]
    %v1085 = vunpack.c.l.b16 %v829
    %v1086 = vunpack.c.h.b16 %v829
    %v1087 = vunpack.c.l.b16 %v830
    %v1088 = vunpack.c.h.b16 %v830
    %v1089 = vunpack.c.l.b16 %v831
    %v1090 = vunpack.c.h.b16 %v831
    %v1091 = vunpack.c.l.b16 %v832
    %v1092 = vunpack.c.h.b16 %v832
    %v1093 = vunpack.c.l.b16 %v833
    %v1094 = vunpack.c.h.b16 %v833
    %v1095 = vunpack.c.l.b16 %v834
    %v1096 = vunpack.c.h.b16 %v834
    %v1097 = vunpack.c.l.b16 %v835
    %v1098 = vunpack.c.h.b16 %v835
    %v1099 = vunpack.c.l.b16 %v836
    %v1100 = vunpack.c.h.b16 %v836
    %v1101 = vunpack.c.l.b16 %v837
    %v1102 = vunpack.c.h.b16 %v837
    %v1103 = vunpack.c.l.b16 %v838
    %v1104 = vunpack.c.h.b16 %v838
    %v1105 = vunpack.c.l.b16 %v839
    %v1106 = vunpack.c.h.b16 %v839
    %v1107 = vunpack.c.l.b16 %v840
    %v1108 = vunpack.c.h.b16 %v840
    %v1109 = vunpack.c.l.b16 %v841
    %v1110 = vunpack.c.h.b16 %v841
    %v1111 = vunpack.c.l.b16 %v842
    %v1112 = vunpack.c.h.b16 %v842
    %v1113 = vunpack.c.l.b16 %v843
    %v1114 = vunpack.c.h.b16 %v843
    %v1115 = vunpack.c.l.b16 %v844
    %v1116 = vunpack.c.h.b16 %v844
    %v1117 = vunpack.c.l.b16 %v845
    %v1118 = vunpack.c.h.b16 %v845
    %v1119 = vunpack.c.l.b16 %v846
    %v1120 = vunpack.c.h.b16 %v846
    %v1121 = vunpack.c.l.b16 %v847
    %v1122 = vunpack.c.h.b16 %v847
    %v1123 = vunpack.c.l.b16 %v848
    %v1124 = vunpack.c.h.b16 %v848
    %v1125 = vunpack.c.l.b16 %v849
    %v1126 = vunpack.c.h.b16 %v849
    %v1127 = vunpack.c.l.b16 %v850
    %v1128 = vunpack.c.h.b16 %v850
    %v1129 = vunpack.c.l.b16 %v851
    %v1130 = vunpack.c.h.b16 %v851
    %v1131 = vunpack.c.l.b16 %v852
    %v1132 = vunpack.c.h.b16 %v852
    %v1133 = vunpack.c.l.b16 %v853
    %v1134 = vunpack.c.h.b16 %v853
    %v1135 = vunpack.c.l.b16 %v854
    %v1136 = vunpack.c.h.b16 %v854
    %v1137 = vunpack.c.l.b16 %v855
    %v1138 = vunpack.c.h.b16 %v855
    %v1139 = vunpack.c.l.b16 %v856
    %v1140 = vunpack.c.h.b16 %v856
    %v1141 = vunpack.c.l.b16 %v857
    %v1142 = vunpack.c.h.b16 %v857
    %v1143 = vunpack.c.l.b16 %v858
    %v1144 = vunpack.c.h.b16 %v858
    %v1145 = vunpack.c.l.b16 %v859
    %v1146 = vunpack.c.h.b16 %v859
    %v1147 = vunpack.c.l.b16 %v860
    %v1148 = vunpack.c.h.b16 %v860
    %v1149 = vunpack.c.l.b16 %v861
    %v1150 = vunpack.c.h.b16 %v861
    %v1151 = vunpack.c.l.b16 %v862
    %v1152 = vunpack.c.h.b16 %v862
    %v1153 = vunpack.c.l.b16 %v863
    %v1154 = vunpack.c.h.b16 %v863
    %v1155 = vunpack.c.l.b16 %v864
    %v1156 = vunpack.c.h.b16 %v864
    %v1157 = vunpack.c.l.b16 %v865
    %v1158 = vunpack.c.h.b16 %v865
    %v1159 = vunpack.c.l.b16 %v866
    %v1160 = vunpack.c.h.b16 %v866
    %v1161 = vunpack.c.l.b16 %v867
    %v1162 = vunpack.c.h.b16 %v867
    %v1163 = vunpack.c.l.b16 %v868
    %v1164 = vunpack.c.h.b16 %v868
    %v1165 = vunpack.c.l.b16 %v869
    %v1166 = vunpack.c.h.b16 %v869
    %v1167 = vunpack.c.l.b16 %v870
    %v1168 = vunpack.c.h.b16 %v870
    %v1169 = vunpack.c.l.b16 %v871
    %v1170 = vunpack.c.h.b16 %v871
    %v1171 = vunpack.c.l.b16 %v872
    %v1172 = vunpack.c.h.b16 %v872
    %v1173 = vunpack.c.l.b16 %v873
    %v1174 = vunpack.c.h.b16 %v873
    %v1175 = vunpack.c.l.b16 %v874
    %v1176 = vunpack.c.h.b16 %v874
    %v1177 = vunpack.c.l.b16 %v875
    %v1178 = vunpack.c.h.b16 %v875
    %v1179 = vunpack.c.l.b16 %v876
    %v1180 = vunpack.c.h.b16 %v876
    %v1181 = vunpack.c.l.b16 %v877
    %v1182 = vunpack.c.h.b16 %v877
    %v1183 = vunpack.c.l.b16 %v878
    %v1184 = vunpack.c.h.b16 %v878
    %v1185 = vunpack.c.l.b16 %v879
    %v1186 = vunpack.c.h.b16 %v879
    %v1187 = vunpack.c.l.b16 %v880
    %v1188 = vunpack.c.h.b16 %v880
    %v1189 = vunpack.c.l.b16 %v881
    %v1190 = vunpack.c.h.b16 %v881
    %v1191 = vunpack.c.l.b16 %v882
    %v1192 = vunpack.c.h.b16 %v882
    %v1193 = vunpack.c.l.b16 %v883
    %v1194 = vunpack.c.h.b16 %v883
    %v1195 = vunpack.c.l.b16 %v884
    %v1196 = vunpack.c.h.b16 %v884
    %v1197 = vunpack.c.l.b16 %v885
    %v1198 = vunpack.c.h.b16 %v885
    %v1199 = vunpack.c.l.b16 %v886
    %v1200 = vunpack.c.h.b16 %v886
    %v1201 = vunpack.c.l.b16 %v887
    %v1202 = vunpack.c.h.b16 %v887
    %v1203 = vunpack.c.l.b16 %v888
    %v1204 = vunpack.c.h.b16 %v888
    %v1205 = vunpack.c.l.b16 %v889
    %v1206 = vunpack.c.h.b16 %v889
    %v1207 = vunpack.c.l.b16 %v890
    %v1208 = vunpack.c.h.b16 %v890
    %v1209 = vunpack.c.l.b16 %v891
    %v1210 = vunpack.c.h.b16 %v891
    %v1211 = vunpack.c.l.b16 %v892
    %v1212 = vunpack.c.h.b16 %v892
    %v1213 = vunpack.c.l.b16 %v893
    %v1214 = vunpack.c.h.b16 %v893
    %v1215 = vunpack.c.l.b16 %v894
    %v1216 = vunpack.c.h.b16 %v894
    %v1217 = vunpack.c.l.b16 %v895
    %v1218 = vunpack.c.h.b16 %v895
    %v1219 = vunpack.c.l.b16 %v896
    %v1220 = vunpack.c.h.b16 %v896
    %v1221 = vunpack.c.l.b16 %v897
    %v1222 = vunpack.c.h.b16 %v897
    %v1223 = vunpack.c.l.b16 %v898
    %v1224 = vunpack.c.h.b16 %v898
    %v1225 = vunpack.c.l.b16 %v899
    %v1226 = vunpack.c.h.b16 %v899
    %v1227 = vunpack.c.l.b16 %v900
    %v1228 = vunpack.c.h.b16 %v900
    %v1229 = vunpack.c.l.b16 %v901
    %v1230 = vunpack.c.h.b16 %v901
    %v1231 = vunpack.c.l.b16 %v902
    %v1232 = vunpack.c.h.b16 %v902
    %v1233 = vunpack.c.l.b16 %v903
    %v1234 = vunpack.c.h.b16 %v903
    %v1235 = vunpack.c.l.b16 %v904
    %v1236 = vunpack.c.h.b16 %v904
    %v1237 = vunpack.c.l.b16 %v905
    %v1238 = vunpack.c.h.b16 %v905
    %v1239 = vunpack.c.l.b16 %v906
    %v1240 = vunpack.c.h.b16 %v906
    %v1241 = vunpack.c.l.b16 %v907
    %v1242 = vunpack.c.h.b16 %v907
    %v1243 = vunpack.c.l.b16 %v908
    %v1244 = vunpack.c.h.b16 %v908
    %v1245 = vunpack.c.l.b16 %v909
    %v1246 = vunpack.c.h.b16 %v909
    %v1247 = vunpack.c.l.b16 %v910
    %v1248 = vunpack.c.h.b16 %v910
    %v1249 = vunpack.c.l.b16 %v911
    %v1250 = vunpack.c.h.b16 %v911
    %v1251 = vunpack.c.l.b16 %v912
    %v1252 = vunpack.c.h.b16 %v912
    %v1253 = vunpack.c.l.b16 %v913
    %v1254 = vunpack.c.h.b16 %v913
    %v1255 = vunpack.c.l.b16 %v914
    %v1256 = vunpack.c.h.b16 %v914
    %v1257 = vunpack.c.l.b16 %v915
    %v1258 = vunpack.c.h.b16 %v915
    %v1259 = vunpack.c.l.b16 %v916
    %v1260 = vunpack.c.h.b16 %v916
    %v1261 = vunpack.c.l.b16 %v917
    %v1262 = vunpack.c.h.b16 %v917
    %v1263 = vunpack.c.l.b16 %v918
    %v1264 = vunpack.c.h.b16 %v918
    %v1265 = vunpack.c.l.b16 %v919
    %v1266 = vunpack.c.h.b16 %v919
    %v1267 = vunpack.c.l.b16 %v920
    %v1268 = vunpack.c.h.b16 %v920
    %v1269 = vunpack.c.l.b16 %v921
    %v1270 = vunpack.c.h.b16 %v921
    %v1271 = vunpack.c.l.b16 %v922
    %v1272 = vunpack.c.h.b16 %v922
    %v1273 = vunpack.c.l.b16 %v923
    %v1274 = vunpack.c.h.b16 %v923
    %v1275 = vunpack.c.l.b16 %v924
    %v1276 = vunpack.c.h.b16 %v924
    %v1277 = vunpack.c.l.b16 %v925
    %v1278 = vunpack.c.h.b16 %v925
    %v1279 = vunpack.c.l.b16 %v926
    %v1280 = vunpack.c.h.b16 %v926
    %v1281 = vunpack.c.l.b16 %v927
    %v1282 = vunpack.c.h.b16 %v927
    %v1283 = vunpack.c.l.b16 %v928
    %v1284 = vunpack.c.h.b16 %v928
    %v1285 = vunpack.c.l.b16 %v929
    %v1286 = vunpack.c.h.b16 %v929
    %v1287 = vunpack.c.l.b16 %v930
    %v1288 = vunpack.c.h.b16 %v930
    %v1289 = vunpack.c.l.b16 %v931
    %v1290 = vunpack.c.h.b16 %v931
    %v1291 = vunpack.c.l.b16 %v932
    %v1292 = vunpack.c.h.b16 %v932
    %v1293 = vunpack.c.l.b16 %v933
    %v1294 = vunpack.c.h.b16 %v933
    %v1295 = vunpack.c.l.b16 %v934
    %v1296 = vunpack.c.h.b16 %v934
    %v1297 = vunpack.c.l.b16 %v935
    %v1298 = vunpack.c.h.b16 %v935
    %v1299 = vunpack.c.l.b16 %v936
    %v1300 = vunpack.c.h.b16 %v936
    %v1301 = vunpack.c.l.b16 %v937
    %v1302 = vunpack.c.h.b16 %v937
    %v1303 = vunpack.c.l.b16 %v938
    %v1304 = vunpack.c.h.b16 %v938
    %v1305 = vunpack.c.l.b16 %v939
    %v1306 = vunpack.c.h.b16 %v939
    %v1307 = vunpack.c.l.b16 %v940
    %v1308 = vunpack.c.h.b16 %v940
    %v1309 = vunpack.c.l.b16 %v941
    %v1310 = vunpack.c.h.b16 %v941
    %v1311 = vunpack.c.l.b16 %v942
    %v1312 = vunpack.c.h.b16 %v942
    %v1313 = vunpack.c.l.b16 %v943
    %v1314 = vunpack.c.h.b16 %v943
    %v1315 = vunpack.c.l.b16 %v944
    %v1316 = vunpack.c.h.b16 %v944
    %v1317 = vunpack.c.l.b16 %v945
    %v1318 = vunpack.c.h.b16 %v945
    %v1319 = vunpack.c.l.b16 %v946
    %v1320 = vunpack.c.h.b16 %v946
    %v1321 = vunpack.c.l.b16 %v947
    %v1322 = vunpack.c.h.b16 %v947
    %v1323 = vunpack.c.l.b16 %v948
    %v1324 = vunpack.c.h.b16 %v948
    %v1325 = vunpack.c.l.b16 %v949
    %v1326 = vunpack.c.h.b16 %v949
    %v1327 = vunpack.c.l.b16 %v950
    %v1328 = vunpack.c.h.b16 %v950
    %v1329 = vunpack.c.l.b16 %v951
    %v1330 = vunpack.c.h.b16 %v951
    %v1331 = vunpack.c.l.b16 %v952
    %v1332 = vunpack.c.h.b16 %v952
    %v1333 = vunpack.c.l.b16 %v953
    %v1334 = vunpack.c.h.b16 %v953
    %v1335 = vunpack.c.l.b16 %v954
    %v1336 = vunpack.c.h.b16 %v954
    %v1337 = vunpack.c.l.b16 %v955
    %v1338 = vunpack.c.h.b16 %v955
    %v1339 = vunpack.c.l.b16 %v956
    %v1340 = vunpack.c.h.b16 %v956
    %v1341 = vpack.c.b16 %v1093, %v1085
    %v1342 = vpack.c.b16 %v1094, %v1086
    %v1343 = vpack.c.b16 %v1095, %v1087
    %v1344 = vpack.c.b16 %v1096, %v1088
    %v1345 = vpack.c.b16 %v1097, %v1089
    %v1346 = vpack.c.b16 %v1098, %v1090
    %v1347 = vpack.c.b16 %v1099, %v1091
    %v1348 = vpack.c.b16 %v1100, %v1092
    %v1349 = vpack.c.b16 %v1109, %v1101
    %v1350 = vpack.c.b16 %v1110, %v1102
    %v1351 = vpack.c.b16 %v1111, %v1103
    %v1352 = vpack.c.b16 %v1112, %v1104
    %v1353 = vpack.c.b16 %v1113, %v1105
    %v1354 = vpack.c.b16 %v1114, %v1106
    %v1355 = vpack.c.b16 %v1115, %v1107
    %v1356 = vpack.c.b16 %v1116, %v1108
    %v1357 = vpack.c.b16 %v1125, %v1117
    %v1358 = vpack.c.b16 %v1126, %v1118
    %v1359 = vpack.c.b16 %v1127, %v1119
    %v1360 = vpack.c.b16 %v1128, %v1120
    %v1361 = vpack.c.b16 %v1129, %v1121
    %v1362 = vpack.c.b16 %v1130, %v1122
    %v1363 = vpack.c.b16 %v1131, %v1123
    %v1364 = vpack.c.b16 %v1132, %v1124
    %v1365 = vpack.c.b16 %v1141, %v1133
    %v1366 = vpack.c.b16 %v1142, %v1134
    %v1367 = vpack.c.b16 %v1143, %v1135
    %v1368 = vpack.c.b16 %v1144, %v1136
    %v1369 = vpack.c.b16 %v1145, %v1137
    %v1370 = vpack.c.b16 %v1146, %v1138
    %v1371 = vpack.c.b16 %v1147, %v1139
    %v1372 = vpack.c.b16 %v1148, %v1140
    %v1373 = vpack.c.b16 %v1157, %v1149
    %v1374 = vpack.c.b16 %v1158, %v1150
    %v1375 = vpack.c.b16 %v1159, %v1151
    %v1376 = vpack.c.b16 %v1160, %v1152
    %v1377 = vpack.c.b16 %v1161, %v1153
    %v1378 = vpack.c.b16 %v1162, %v1154
    %v1379 = vpack.c.b16 %v1163, %v1155
    %v1380 = vpack.c.b16 %v1164, %v1156
    %v1381 = vpack.c.b16 %v1173, %v1165
    %v1382 = vpack.c.b16 %v1174, %v1166
    %v1383 = vpack.c.b16 %v1175, %v1167
    %v1384 = vpack.c.b16 %v1176, %v1168
    %v1385 = vpack.c.b16 %v1177, %v1169
    %v1386 = vpack.c.b16 %v1178, %v1170
    %v1387 = vpack.c.b16 %v1179, %v1171
    %v1388 = vpack.c.b16 %v1180, %v1172
    %v1389 = vpack.c.b16 %v1189, %v1181
    %v1390 = vpack.c.b16 %v1190, %v1182
    %v1391 = vpack.c.b16 %v1191, %v1183
    %v1392 = vpack.c.b16 %v1192, %v1184
    %v1393 = vpack.c.b16 %v1193, %v1185
    %v1394 = vpack.c.b16 %v1194, %v1186
    %v1395 = vpack.c.b16 %v1195, %v1187
    %v1396 = vpack.c.b16 %v1196, %v1188
    %v1397 = vpack.c.b16 %v1205, %v1197
    %v1398 = vpack.c.b16 %v1206, %v1198
    %v1399 = vpack.c.b16 %v1207, %v1199
    %v1400 = vpack.c.b16 %v1208, %v1200
    %v1401 = vpack.c.b16 %v1209, %v1201
    %v1402 = vpack.c.b16 %v1210, %v1202
    %v1403 = vpack.c.b16 %v1211, %v1203
    %v1404 = vpack.c.b16 %v1212, %v1204
    %v1405 = vpack.c.b16 %v1221, %v1213
    %v1406 = vpack.c.b16 %v1222, %v1214
    %v1407 = vpack.c.b16 %v1223, %v1215
    %v1408 = vpack.c.b16 %v1224, %v1216
    %v1409 = vpack.c.b16 %v1225, %v1217
    %v1410 = vpack.c.b16 %v1226, %v1218
    %v1411 = vpack.c.b16 %v1227, %v1219
    %v1412 = vpack.c.b16 %v1228, %v1220
    %v1413 = vpack.c.b16 %v1237, %v1229
    %v1414 = vpack.c.b16 %v1238, %v1230
    %v1415 = vpack.c.b16 %v1239, %v1231
    %v1416 = vpack.c.b16 %v1240, %v1232
    %v1417 = vpack.c.b16 %v1241, %v1233
    %v1418 = vpack.c.b16 %v1242, %v1234
    %v1419 = vpack.c.b16 %v1243, %v1235
    %v1420 = vpack.c.b16 %v1244, %v1236
    %v1421 = vpack.c.b16 %v1253, %v1245
    %v1422 = vpack.c.b16 %v1254, %v1246
    %v1423 = vpack.c.b16 %v1255, %v1247
    %v1424 = vpack.c.b16 %v1256, %v1248
    %v1425 = vpack.c.b16 %v1257, %v1249
    %v1426 = vpack.c.b16 %v1258, %v1250
    %v1427 = vpack.c.b16 %v1259, %v1251
    %v1428 = vpack.c.b16 %v1260, %v1252
    %v1429 = vpack.c.b16 %v1269, %v1261
    %v1430 = vpack.c.b16 %v1270, %v1262
    %v1431 = vpack.c.b16 %v1271, %v1263
    %v1432 = vpack.c.b16 %v1272, %v1264
    %v1433 = vpack.c.b16 %v1273, %v1265
    %v1434 = vpack.c.b16 %v1274, %v1266
    %v1435 = vpack.c.b16 %v1275, %v1267
    %v1436 = vpack.c.b16 %v1276, %v1268
    %v1437 = vpack.c.b16 %v1285, %v1277
    %v1438 = vpack.c.b16 %v1286, %v1278
    %v1439 = vpack.c.b16 %v1287, %v1279
    %v1440 = vpack.c.b16 %v1288, %v1280
    %v1441 = vpack.c.b16 %v1289, %v1281
    %v1442 = vpack.c.b16 %v1290, %v1282
    %v1443 = vpack.c.b16 %v1291, %v1283
    %v1444 = vpack.c.b16 %v1292, %v1284
    %v1445 = vpack.c.b16 %v1301, %v1293
    %v1446 = vpack.c.b16 %v1302, %v1294
    %v1447 = vpack.c.b16 %v1303, %v1295
    %v1448 = vpack.c.b16 %v1304, %v1296
    %v1449 = vpack.c.b16 %v1305, %v1297
    %v1450 = vpack.c.b16 %v1306, %v1298
    %v1451 = vpack.c.b16 %v1307, %v1299
    %v1452 = vpack.c.b16 %v1308, %v1300
    %v1453 = vpack.c.b16 %v1317, %v1309
    %v1454 = vpack.c.b16 %v1318, %v1310
    %v1455 = vpack.c.b16 %v1319, %v1311
    %v1456 = vpack.c.b16 %v1320, %v1312
    %v1457 = vpack.c.b16 %v1321, %v1313
    %v1458 = vpack.c.b16 %v1322, %v1314
    %v1459 = vpack.c.b16 %v1323, %v1315
    %v1460 = vpack.c.b16 %v1324, %v1316
    %v1461 = vpack.c.b16 %v1333, %v1325
    %v1462 = vpack.c.b16 %v1334, %v1326
    %v1463 = vpack.c.b16 %v1335, %v1327
    %v1464 = vpack.c.b16 %v1336, %v1328
    %v1465 = vpack.c.b16 %v1337, %v1329
    %v1466 = vpack.c.b16 %v1338, %v1330
    %v1467 = vpack.c.b16 %v1339, %v1331
    %v1468 = vpack.c.b16 %v1340, %v1332
    %1597 = vmatprep.subr.bf16.mxu0 %v1342
    %1598 = vmatpush1.bf16.msra.mxu0 %v1341
    %1599 = vmatprep.subr.bf16.mxu0 %v1350
    %1600 = vmatpush1.bf16.msra.mxu0 %v1349
    %1601 = vmatprep.subr.bf16.mxu0 %v1358
    %1602 = vmatpush1.bf16.msra.mxu0 %v1357
    %1603 = vmatprep.subr.bf16.mxu0 %v1366
    %1604 = vmatpush1.bf16.msra.mxu0 %v1365
    %1605 = vmatprep.subr.bf16.mxu0 %v1374
    %1606 = vmatpush1.bf16.msra.mxu0 %v1373
    %1607 = vmatprep.subr.bf16.mxu0 %v1382
    %1608 = vmatpush1.bf16.msra.mxu0 %v1381
    %1609 = vmatprep.subr.bf16.mxu0 %v1390
    %1610 = vmatpush1.bf16.msra.mxu0 %v1389
    %1611 = vmatprep.subr.bf16.mxu0 %v1398
    %1612 = vmatpush1.bf16.msra.mxu0 %v1397
    %1613 = vmatprep.subr.bf16.mxu0 %v1406
    %1614 = vmatpush1.bf16.msra.mxu0 %v1405
    %1615 = vmatprep.subr.bf16.mxu0 %v1414
    %1616 = vmatpush1.bf16.msra.mxu0 %v1413
    %1617 = vmatprep.subr.bf16.mxu0 %v1422
    %1618 = vmatpush1.bf16.msra.mxu0 %v1421
    %1619 = vmatprep.subr.bf16.mxu0 %v1430
    %1620 = vmatpush1.bf16.msra.mxu0 %v1429
    %1621 = vmatprep.subr.bf16.mxu0 %v1438
    %1622 = vmatpush1.bf16.msra.mxu0 %v1437
    %1623 = vmatprep.subr.bf16.mxu0 %v1446
    %1624 = vmatpush1.bf16.msra.mxu0 %v1445
    %1625 = vmatprep.subr.bf16.mxu0 %v1454
    %1626 = vmatpush1.bf16.msra.mxu0 %v1453
    %1627 = vmatprep.subr.bf16.mxu0 %v1462
    %1628 = vmatpush1.bf16.msra.mxu0 %v1461
    %1629 = vmatprep.mubr.bf16.mxu0 %v828
    %1630 = vmatmul.mubr.bf16.gmra.mrb[0].mxu0 %v827
    %v1631 = vpop.f32.mrb[0].mxu0
    %v1632 = vadd.f32 0.0, %v1631
    %v1633 = vpop.f32.mrb[0].mxu0
    %v1634 = vadd.f32 0.0, %v1633
    %v1635 = vpop.f32.mrb[0].mxu0
    %v1636 = vpop.f32.mrb[0].mxu0
    %1637 = vdwg.mxu0
    %1638 = vmatprep.subr.bf16.mxu0 %v1344
    %1639 = vmatpush1.bf16.msra.mxu0 %v1343
    %1640 = vmatprep.subr.bf16.mxu0 %v1352
    %1641 = vmatpush1.bf16.msra.mxu0 %v1351
    %1642 = vmatprep.subr.bf16.mxu0 %v1360
    %1643 = vmatpush1.bf16.msra.mxu0 %v1359
    %1644 = vmatprep.subr.bf16.mxu0 %v1368
    %1645 = vmatpush1.bf16.msra.mxu0 %v1367
    %1646 = vmatprep.subr.bf16.mxu0 %v1376
    %1647 = vmatpush1.bf16.msra.mxu0 %v1375
    %1648 = vmatprep.subr.bf16.mxu0 %v1384
    %1649 = vmatpush1.bf16.msra.mxu0 %v1383
    %1650 = vmatprep.subr.bf16.mxu0 %v1392
    %1651 = vmatpush1.bf16.msra.mxu0 %v1391
    %1652 = vmatprep.subr.bf16.mxu0 %v1400
    %1653 = vmatpush1.bf16.msra.mxu0 %v1399
    %1654 = vmatprep.subr.bf16.mxu0 %v1408
    %1655 = vmatpush1.bf16.msra.mxu0 %v1407
    %1656 = vmatprep.subr.bf16.mxu0 %v1416
    %1657 = vmatpush1.bf16.msra.mxu0 %v1415
    %1658 = vmatprep.subr.bf16.mxu0 %v1424
    %1659 = vmatpush1.bf16.msra.mxu0 %v1423
    %1660 = vmatprep.subr.bf16.mxu0 %v1432
    %1661 = vmatpush1.bf16.msra.mxu0 %v1431
    %1662 = vmatprep.subr.bf16.mxu0 %v1440
    %1663 = vmatpush1.bf16.msra.mxu0 %v1439
    %1664 = vmatprep.subr.bf16.mxu0 %v1448
    %1665 = vmatpush1.bf16.msra.mxu0 %v1447
    %1666 = vmatprep.subr.bf16.mxu0 %v1456
    %1667 = vmatpush1.bf16.msra.mxu0 %v1455
    %1668 = vmatprep.subr.bf16.mxu0 %v1464
    %1669 = vmatpush1.bf16.msra.mxu0 %v1463
    %1670 = vmatprep.mubr.bf16.mxu0 %v828
    %1671 = vmatmul.mubr.bf16.gmra.mrb[0].mxu0 %v827
    %v1672 = vpop.f32.mrb[0].mxu0
    %v1673 = vadd.f32 0.0, %v1672
    %v1674 = vpop.f32.mrb[0].mxu0
    %v1675 = vadd.f32 0.0, %v1674
    %v1676 = vpop.f32.mrb[0].mxu0
    %v1677 = vpop.f32.mrb[0].mxu0
    %1678 = vdwg.mxu0
    %1679 = vmatprep.subr.bf16.mxu0 %v1346
    %1680 = vmatpush1.bf16.msra.mxu0 %v1345
    %1681 = vmatprep.subr.bf16.mxu0 %v1354
    %1682 = vmatpush1.bf16.msra.mxu0 %v1353
    %1683 = vmatprep.subr.bf16.mxu0 %v1362
    %1684 = vmatpush1.bf16.msra.mxu0 %v1361
    %1685 = vmatprep.subr.bf16.mxu0 %v1370
    %1686 = vmatpush1.bf16.msra.mxu0 %v1369
    %1687 = vmatprep.subr.bf16.mxu0 %v1378
    %1688 = vmatpush1.bf16.msra.mxu0 %v1377
    %1689 = vmatprep.subr.bf16.mxu0 %v1386
    %1690 = vmatpush1.bf16.msra.mxu0 %v1385
    %1691 = vmatprep.subr.bf16.mxu0 %v1394
    %1692 = vmatpush1.bf16.msra.mxu0 %v1393
    %1693 = vmatprep.subr.bf16.mxu0 %v1402
    %1694 = vmatpush1.bf16.msra.mxu0 %v1401
    %1695 = vmatprep.subr.bf16.mxu0 %v1410
    %1696 = vmatpush1.bf16.msra.mxu0 %v1409
    %1697 = vmatprep.subr.bf16.mxu0 %v1418
    %1698 = vmatpush1.bf16.msra.mxu0 %v1417
    %1699 = vmatprep.subr.bf16.mxu0 %v1426
    %1700 = vmatpush1.bf16.msra.mxu0 %v1425
    %1701 = vmatprep.subr.bf16.mxu0 %v1434
    %1702 = vmatpush1.bf16.msra.mxu0 %v1433
    %1703 = vmatprep.subr.bf16.mxu0 %v1442
    %1704 = vmatpush1.bf16.msra.mxu0 %v1441
    %1705 = vmatprep.subr.bf16.mxu0 %v1450
    %1706 = vmatpush1.bf16.msra.mxu0 %v1449
    %1707 = vmatprep.subr.bf16.mxu0 %v1458
    %1708 = vmatpush1.bf16.msra.mxu0 %v1457
    %1709 = vmatprep.subr.bf16.mxu0 %v1466
    %1710 = vmatpush1.bf16.msra.mxu0 %v1465
    %1711 = vmatprep.mubr.bf16.mxu0 %v828
    %1712 = vmatmul.mubr.bf16.gmra.mrb[0].mxu0 %v827
    %v1713 = vpop.f32.mrb[0].mxu0
    %v1714 = vadd.f32 0.0, %v1713
    %v1715 = vpop.f32.mrb[0].mxu0
    %v1716 = vadd.f32 0.0, %v1715
    %v1717 = vpop.f32.mrb[0].mxu0
    %v1718 = vpop.f32.mrb[0].mxu0
    %1719 = vdwg.mxu0
    %1720 = vmatprep.subr.bf16.mxu0 %v1348
    %1721 = vmatpush1.bf16.msra.mxu0 %v1347
    %1722 = vmatprep.subr.bf16.mxu0 %v1356
    %1723 = vmatpush1.bf16.msra.mxu0 %v1355
    %1724 = vmatprep.subr.bf16.mxu0 %v1364
    %1725 = vmatpush1.bf16.msra.mxu0 %v1363
    %1726 = vmatprep.subr.bf16.mxu0 %v1372
    %1727 = vmatpush1.bf16.msra.mxu0 %v1371
    %1728 = vmatprep.subr.bf16.mxu0 %v1380
    %1729 = vmatpush1.bf16.msra.mxu0 %v1379
    %1730 = vmatprep.subr.bf16.mxu0 %v1388
    %1731 = vmatpush1.bf16.msra.mxu0 %v1387
    %1732 = vmatprep.subr.bf16.mxu0 %v1396
    %1733 = vmatpush1.bf16.msra.mxu0 %v1395
    %1734 = vmatprep.subr.bf16.mxu0 %v1404
    %1735 = vmatpush1.bf16.msra.mxu0 %v1403
    %1736 = vmatprep.subr.bf16.mxu0 %v1412
    %1737 = vmatpush1.bf16.msra.mxu0 %v1411
    %1738 = vmatprep.subr.bf16.mxu0 %v1420
    %1739 = vmatpush1.bf16.msra.mxu0 %v1419
    %1740 = vmatprep.subr.bf16.mxu0 %v1428
    %1741 = vmatpush1.bf16.msra.mxu0 %v1427
    %1742 = vmatprep.subr.bf16.mxu0 %v1436
    %1743 = vmatpush1.bf16.msra.mxu0 %v1435
    %1744 = vmatprep.subr.bf16.mxu0 %v1444
    %1745 = vmatpush1.bf16.msra.mxu0 %v1443
    %1746 = vmatprep.subr.bf16.mxu0 %v1452
    %1747 = vmatpush1.bf16.msra.mxu0 %v1451
    %1748 = vmatprep.subr.bf16.mxu0 %v1460
    %1749 = vmatpush1.bf16.msra.mxu0 %v1459
    %1750 = vmatprep.subr.bf16.mxu0 %v1468
    %1751 = vmatpush1.bf16.msra.mxu0 %v1467
    %1752 = vmatprep.mubr.bf16.mxu0 %v828
    %1753 = vmatmul.mubr.bf16.gmra.mrb[0].mxu0 %v827
    %v1754 = vpop.f32.mrb[0].mxu0
    %v1755 = vadd.f32 0.0, %v1754
    %v1756 = vpop.f32.mrb[0].mxu0
    %v1757 = vadd.f32 0.0, %v1756
    %v1758 = vpop.f32.mrb[0].mxu0
    %v1759 = vpop.f32.mrb[0].mxu0
    %1760 = vdwg.mxu0
    %v1761 = vadd.f32 %v564, %v1632
    %v1762 = vadd.f32 %v566, %v1634
    %v1763 = vadd.f32 %v637, %v1673
    %v1764 = vadd.f32 %v639, %v1675
    %v1765 = vadd.f32 %v710, %v1714
    %v1766 = vadd.f32 %v712, %v1716
    %v1767 = vadd.f32 %v783, %v1755
    %v1768 = vadd.f32 %v785, %v1757
    %v1769 = vxor.u32 %v1761, 2147483648
    %v1770 = vxor.u32 %v1762, 2147483648
    %v1771 = vmul.f32 %v1769, 1.442695
    %v1772 = vpow.pop %v1771
    %v1773 = vmul.f32 %v1770, 1.442695
    %v1774 = vpow.pop %v1773
    %v1775 = vadd.f32 %v1772, 1.0
    %v1776 = vadd.f32 %v1774, 1.0
    %v1777 = vrcp.pop %v1775
    %v1778 = vmul.f32 1.0, %v1777
    %v1779 = vrcp.pop %v1776
    %v1780 = vmul.f32 1.0, %v1779
    %v1781 = vxor.u32 %v1763, 2147483648
    %v1782 = vxor.u32 %v1764, 2147483648
    %v1783 = vmul.f32 %v1781, 1.442695
    %v1784 = vpow.pop %v1783
    %v1785 = vmul.f32 %v1782, 1.442695
    %v1786 = vpow.pop %v1785
    %v1787 = vadd.f32 %v1784, 1.0
    %v1788 = vadd.f32 %v1786, 1.0
    %v1789 = vrcp.pop %v1787
    %v1790 = vmul.f32 1.0, %v1789
    %v1791 = vrcp.pop %v1788
    %v1792 = vmul.f32 1.0, %v1791
    %v1793 = vtanh.pop %v1765
    %v1794 = vtanh.pop %v1766
    %v1795 = vxor.u32 %v1767, 2147483648
    %v1796 = vxor.u32 %v1768, 2147483648
    %v1797 = vmul.f32 %v1795, 1.442695
    %v1798 = vpow.pop %v1797
    %v1799 = vmul.f32 %v1796, 1.442695
    %v1800 = vpow.pop %v1799
    %v1801 = vadd.f32 %v1798, 1.0
    %v1802 = vadd.f32 %v1800, 1.0
    %v1803 = vrcp.pop %v1801
    %v1804 = vmul.f32 1.0, %v1803
    %v1805 = vrcp.pop %v1802
    %v1806 = vmul.f32 1.0, %v1805
    %v1807 = vmul.f32 %v1790, %v825
    %v1808 = vmul.f32 %v1792, %v826
    %v1809 = vmul.f32 %v1778, %v1793
    %v1810 = vmul.f32 %v1780, %v1794
    %v1811 = vadd.f32 %v1807, %v1809
    %v1812 = vadd.f32 %v1808, %v1810
    %v1813 = vtanh.pop %v1811
    %v1814 = vtanh.pop %v1812
    %v1815 = vmul.f32 %v1804, %v1813
    %v1816 = vmul.f32 %v1806, %v1814
    %v1817 = vstv %s822
    %vm1818 = vcmp.lt.s32.totalorder %v1817, %v821
    %v1819 = vsel %vm1818, 1, 0
    %1820 = vset.pattern.permute.xlu0 0
    %1821 = vperm.xlu0 %1820, %v1819
    %v1822 = vpop.permute.xlu0 %1821
    %vm1823 = vcmp.eq.s32.totalorder %v1822, 1
    %v1824 = vsel %vm1823, %v1815, %v823
    %v1825 = vsel %vm1823, %v1816, %v824
    %v1826 = vsel %vm1823, %v1811, %v825
    %v1827 = vsel %vm1823, %v1812, %v826
    %v1828 = vpack.c.bf16 %v1824, %v1824
    %v1829 = vpack.c.bf16 %v1825, %v1825
    %1830 = vmatprep.subr.bf16.mxu0 %v1342
    %1831 = vmatpush1.bf16.msra.mxu0 %v1341
    %1832 = vmatprep.subr.bf16.mxu0 %v1350
    %1833 = vmatpush1.bf16.msra.mxu0 %v1349
    %1834 = vmatprep.subr.bf16.mxu0 %v1358
    %1835 = vmatpush1.bf16.msra.mxu0 %v1357
    %1836 = vmatprep.subr.bf16.mxu0 %v1366
    %1837 = vmatpush1.bf16.msra.mxu0 %v1365
    %1838 = vmatprep.subr.bf16.mxu0 %v1374
    %1839 = vmatpush1.bf16.msra.mxu0 %v1373
    %1840 = vmatprep.subr.bf16.mxu0 %v1382
    %1841 = vmatpush1.bf16.msra.mxu0 %v1381
    %1842 = vmatprep.subr.bf16.mxu0 %v1390
    %1843 = vmatpush1.bf16.msra.mxu0 %v1389
    %1844 = vmatprep.subr.bf16.mxu0 %v1398
    %1845 = vmatpush1.bf16.msra.mxu0 %v1397
    %1846 = vmatprep.subr.bf16.mxu0 %v1406
    %1847 = vmatpush1.bf16.msra.mxu0 %v1405
    %1848 = vmatprep.subr.bf16.mxu0 %v1414
    %1849 = vmatpush1.bf16.msra.mxu0 %v1413
    %1850 = vmatprep.subr.bf16.mxu0 %v1422
    %1851 = vmatpush1.bf16.msra.mxu0 %v1421
    %1852 = vmatprep.subr.bf16.mxu0 %v1430
    %1853 = vmatpush1.bf16.msra.mxu0 %v1429
    %1854 = vmatprep.subr.bf16.mxu0 %v1438
    %1855 = vmatpush1.bf16.msra.mxu0 %v1437
    %1856 = vmatprep.subr.bf16.mxu0 %v1446
    %1857 = vmatpush1.bf16.msra.mxu0 %v1445
    %1858 = vmatprep.subr.bf16.mxu0 %v1454
    %1859 = vmatpush1.bf16.msra.mxu0 %v1453
    %1860 = vmatprep.subr.bf16.mxu0 %v1462
    %1861 = vmatpush1.bf16.msra.mxu0 %v1461
    %1862 = vmatprep.mubr.bf16.mxu0 %v1829
    %1863 = vmatmul.mubr.bf16.gmra.mrb[0].mxu0 %v1828
    %v1864 = vpop.f32.mrb[0].mxu0
    %v1865 = vadd.f32 0.0, %v1864
    %v1866 = vpop.f32.mrb[0].mxu0
    %v1867 = vadd.f32 0.0, %v1866
    %v1868 = vpop.f32.mrb[0].mxu0
    %v1869 = vpop.f32.mrb[0].mxu0
    %1870 = vdwg.mxu0
    %1871 = vmatprep.subr.bf16.mxu0 %v1344
    %1872 = vmatpush1.bf16.msra.mxu0 %v1343
    %1873 = vmatprep.subr.bf16.mxu0 %v1352
    %1874 = vmatpush1.bf16.msra.mxu0 %v1351
    %1875 = vmatprep.subr.bf16.mxu0 %v1360
    %1876 = vmatpush1.bf16.msra.mxu0 %v1359
    %1877 = vmatprep.subr.bf16.mxu0 %v1368
    %1878 = vmatpush1.bf16.msra.mxu0 %v1367
    %1879 = vmatprep.subr.bf16.mxu0 %v1376
    %1880 = vmatpush1.bf16.msra.mxu0 %v1375
    %1881 = vmatprep.subr.bf16.mxu0 %v1384
    %1882 = vmatpush1.bf16.msra.mxu0 %v1383
    %1883 = vmatprep.subr.bf16.mxu0 %v1392
    %1884 = vmatpush1.bf16.msra.mxu0 %v1391
    %1885 = vmatprep.subr.bf16.mxu0 %v1400
    %1886 = vmatpush1.bf16.msra.mxu0 %v1399
    %1887 = vmatprep.subr.bf16.mxu0 %v1408
    %1888 = vmatpush1.bf16.msra.mxu0 %v1407
    %1889 = vmatprep.subr.bf16.mxu0 %v1416
    %1890 = vmatpush1.bf16.msra.mxu0 %v1415
    %1891 = vmatprep.subr.bf16.mxu0 %v1424
    %1892 = vmatpush1.bf16.msra.mxu0 %v1423
    %1893 = vmatprep.subr.bf16.mxu0 %v1432
    %1894 = vmatpush1.bf16.msra.mxu0 %v1431
    %1895 = vmatprep.subr.bf16.mxu0 %v1440
    %1896 = vmatpush1.bf16.msra.mxu0 %v1439
    %1897 = vmatprep.subr.bf16.mxu0 %v1448
    %1898 = vmatpush1.bf16.msra.mxu0 %v1447
    %1899 = vmatprep.subr.bf16.mxu0 %v1456
    %1900 = vmatpush1.bf16.msra.mxu0 %v1455
    %1901 = vmatprep.subr.bf16.mxu0 %v1464
    %1902 = vmatpush1.bf16.msra.mxu0 %v1463
    %1903 = vmatprep.mubr.bf16.mxu0 %v1829
    %1904 = vmatmul.mubr.bf16.gmra.mrb[0].mxu0 %v1828
    %v1905 = vpop.f32.mrb[0].mxu0
    %v1906 = vadd.f32 0.0, %v1905
    %v1907 = vpop.f32.mrb[0].mxu0
    %v1908 = vadd.f32 0.0, %v1907
    %v1909 = vpop.f32.mrb[0].mxu0
    %v1910 = vpop.f32.mrb[0].mxu0
    %1911 = vdwg.mxu0
    %1912 = vmatprep.subr.bf16.mxu0 %v1346
    %1913 = vmatpush1.bf16.msra.mxu0 %v1345
    %1914 = vmatprep.subr.bf16.mxu0 %v1354
    %1915 = vmatpush1.bf16.msra.mxu0 %v1353
    %1916 = vmatprep.subr.bf16.mxu0 %v1362
    %1917 = vmatpush1.bf16.msra.mxu0 %v1361
    %1918 = vmatprep.subr.bf16.mxu0 %v1370
    %1919 = vmatpush1.bf16.msra.mxu0 %v1369
    %1920 = vmatprep.subr.bf16.mxu0 %v1378
    %1921 = vmatpush1.bf16.msra.mxu0 %v1377
    %1922 = vmatprep.subr.bf16.mxu0 %v1386
    %1923 = vmatpush1.bf16.msra.mxu0 %v1385
    %1924 = vmatprep.subr.bf16.mxu0 %v1394
    %1925 = vmatpush1.bf16.msra.mxu0 %v1393
    %1926 = vmatprep.subr.bf16.mxu0 %v1402
    %1927 = vmatpush1.bf16.msra.mxu0 %v1401
    %1928 = vmatprep.subr.bf16.mxu0 %v1410
    %1929 = vmatpush1.bf16.msra.mxu0 %v1409
    %1930 = vmatprep.subr.bf16.mxu0 %v1418
    %1931 = vmatpush1.bf16.msra.mxu0 %v1417
    %1932 = vmatprep.subr.bf16.mxu0 %v1426
    %1933 = vmatpush1.bf16.msra.mxu0 %v1425
    %1934 = vmatprep.subr.bf16.mxu0 %v1434
    %1935 = vmatpush1.bf16.msra.mxu0 %v1433
    %1936 = vmatprep.subr.bf16.mxu0 %v1442
    %1937 = vmatpush1.bf16.msra.mxu0 %v1441
    %1938 = vmatprep.subr.bf16.mxu0 %v1450
    %1939 = vmatpush1.bf16.msra.mxu0 %v1449
    %1940 = vmatprep.subr.bf16.mxu0 %v1458
    %1941 = vmatpush1.bf16.msra.mxu0 %v1457
    %1942 = vmatprep.subr.bf16.mxu0 %v1466
    %1943 = vmatpush1.bf16.msra.mxu0 %v1465
    %1944 = vmatprep.mubr.bf16.mxu0 %v1829
    %1945 = vmatmul.mubr.bf16.gmra.mrb[0].mxu0 %v1828
    %v1946 = vpop.f32.mrb[0].mxu0
    %v1947 = vadd.f32 0.0, %v1946
    %v1948 = vpop.f32.mrb[0].mxu0
    %v1949 = vadd.f32 0.0, %v1948
    %v1950 = vpop.f32.mrb[0].mxu0
    %v1951 = vpop.f32.mrb[0].mxu0
    %1952 = vdwg.mxu0
    %1953 = vmatprep.subr.bf16.mxu0 %v1348
    %1954 = vmatpush1.bf16.msra.mxu0 %v1347
    %1955 = vmatprep.subr.bf16.mxu0 %v1356
    %1956 = vmatpush1.bf16.msra.mxu0 %v1355
    %1957 = vmatprep.subr.bf16.mxu0 %v1364
    %1958 = vmatpush1.bf16.msra.mxu0 %v1363
    %1959 = vmatprep.subr.bf16.mxu0 %v1372
    %1960 = vmatpush1.bf16.msra.mxu0 %v1371
    %1961 = vmatprep.subr.bf16.mxu0 %v1380
    %1962 = vmatpush1.bf16.msra.mxu0 %v1379
    %1963 = vmatprep.subr.bf16.mxu0 %v1388
    %1964 = vmatpush1.bf16.msra.mxu0 %v1387
    %1965 = vmatprep.subr.bf16.mxu0 %v1396
    %1966 = vmatpush1.bf16.msra.mxu0 %v1395
    %1967 = vmatprep.subr.bf16.mxu0 %v1404
    %1968 = vmatpush1.bf16.msra.mxu0 %v1403
    %1969 = vmatprep.subr.bf16.mxu0 %v1412
    %1970 = vmatpush1.bf16.msra.mxu0 %v1411
    %1971 = vmatprep.subr.bf16.mxu0 %v1420
    %1972 = vmatpush1.bf16.msra.mxu0 %v1419
    %1973 = vmatprep.subr.bf16.mxu0 %v1428
    %1974 = vmatpush1.bf16.msra.mxu0 %v1427
    %1975 = vmatprep.subr.bf16.mxu0 %v1436
    %1976 = vmatpush1.bf16.msra.mxu0 %v1435
    %1977 = vmatprep.subr.bf16.mxu0 %v1444
    %1978 = vmatpush1.bf16.msra.mxu0 %v1443
    %1979 = vmatprep.subr.bf16.mxu0 %v1452
    %1980 = vmatpush1.bf16.msra.mxu0 %v1451
    %1981 = vmatprep.subr.bf16.mxu0 %v1460
    %1982 = vmatpush1.bf16.msra.mxu0 %v1459
    %1983 = vmatprep.subr.bf16.mxu0 %v1468
    %1984 = vmatpush1.bf16.msra.mxu0 %v1467
    %1985 = vmatprep.mubr.bf16.mxu0 %v1829
    %1986 = vmatmul.mubr.bf16.gmra.mrb[0].mxu0 %v1828
    %v1987 = vpop.f32.mrb[0].mxu0
    %v1988 = vadd.f32 0.0, %v1987
    %v1989 = vpop.f32.mrb[0].mxu0
    %v1990 = vadd.f32 0.0, %v1989
    %v1991 = vpop.f32.mrb[0].mxu0
    %v1992 = vpop.f32.mrb[0].mxu0
    %1993 = vdwg.mxu0
    %v1994 = vadd.f32 %v568, %v1865
    %v1995 = vadd.f32 %v570, %v1867
    %v1996 = vadd.f32 %v641, %v1906
    %v1997 = vadd.f32 %v643, %v1908
    %v1998 = vadd.f32 %v714, %v1947
    %v1999 = vadd.f32 %v716, %v1949
    %v2000 = vadd.f32 %v787, %v1988
    %v2001 = vadd.f32 %v789, %v1990
    %v2002 = vxor.u32 %v1994, 2147483648
    %v2003 = vxor.u32 %v1995, 2147483648
    %v2004 = vmul.f32 %v2002, 1.442695
    %v2005 = vpow.pop %v2004
    %v2006 = vmul.f32 %v2003, 1.442695
    %v2007 = vpow.pop %v2006
    %v2008 = vadd.f32 %v2005, 1.0
    %v2009 = vadd.f32 %v2007, 1.0
    %v2010 = vrcp.pop %v2008
    %v2011 = vmul.f32 1.0, %v2010
    %v2012 = vrcp.pop %v2009
    %v2013 = vmul.f32 1.0, %v2012
    %v2014 = vxor.u32 %v1996, 2147483648
    %v2015 = vxor.u32 %v1997, 2147483648
    %v2016 = vmul.f32 %v2014, 1.442695
    %v2017 = vpow.pop %v2016
    %v2018 = vmul.f32 %v2015, 1.442695
    %v2019 = vpow.pop %v2018
    %v2020 = vadd.f32 %v2017, 1.0
    %v2021 = vadd.f32 %v2019, 1.0
    %v2022 = vrcp.pop %v2020
    %v2023 = vmul.f32 1.0, %v2022
    %v2024 = vrcp.pop %v2021
    %v2025 = vmul.f32 1.0, %v2024
    %v2026 = vtanh.pop %v1998
    %v2027 = vtanh.pop %v1999
    %v2028 = vxor.u32 %v2000, 2147483648
    %v2029 = vxor.u32 %v2001, 2147483648
    %v2030 = vmul.f32 %v2028, 1.442695
    %v2031 = vpow.pop %v2030
    %v2032 = vmul.f32 %v2029, 1.442695
    %v2033 = vpow.pop %v2032
    %v2034 = vadd.f32 %v2031, 1.0
    %v2035 = vadd.f32 %v2033, 1.0
    %v2036 = vrcp.pop %v2034
    %v2037 = vmul.f32 1.0, %v2036
    %v2038 = vrcp.pop %v2035
    %v2039 = vmul.f32 1.0, %v2038
    %v2040 = vmul.f32 %v2023, %v1826
    %v2041 = vmul.f32 %v2025, %v1827
    %v2042 = vmul.f32 %v2011, %v2026
    %v2043 = vmul.f32 %v2013, %v2027
    %v2044 = vadd.f32 %v2040, %v2042
    %v2045 = vadd.f32 %v2041, %v2043
    %v2046 = vtanh.pop %v2044
    %v2047 = vtanh.pop %v2045
    %v2048 = vmul.f32 %v2037, %v2046
    %v2049 = vmul.f32 %v2039, %v2047
    %s2050 = sadd.s32 %s822, 1
    %v2051 = vstv %s2050
    %vm2052 = vcmp.lt.s32.totalorder %v2051, %v821
    %v2053 = vsel %vm2052, 1, 0
    %2054 = vset.pattern.permute.xlu0 0
    %2055 = vperm.xlu0 %2054, %v2053
    %v2056 = vpop.permute.xlu0 %2055
    %vm2057 = vcmp.eq.s32.totalorder %v2056, 1
    %v2058 = vsel %vm2057, %v2048, %v1824
    %v2059 = vsel %vm2057, %v2049, %v1825
    %v2060 = vsel %vm2057, %v2044, %v1826
    %v2061 = vsel %vm2057, %v2045, %v1827
    %v2062 = vpack.c.bf16 %v2058, %v2058
    %v2063 = vpack.c.bf16 %v2059, %v2059
    %2064 = vmatprep.subr.bf16.mxu0 %v1342
    %2065 = vmatpush1.bf16.msra.mxu0 %v1341
    %2066 = vmatprep.subr.bf16.mxu0 %v1350
    %2067 = vmatpush1.bf16.msra.mxu0 %v1349
    %2068 = vmatprep.subr.bf16.mxu0 %v1358
    %2069 = vmatpush1.bf16.msra.mxu0 %v1357
    %2070 = vmatprep.subr.bf16.mxu0 %v1366
    %2071 = vmatpush1.bf16.msra.mxu0 %v1365
    %2072 = vmatprep.subr.bf16.mxu0 %v1374
    %2073 = vmatpush1.bf16.msra.mxu0 %v1373
    %2074 = vmatprep.subr.bf16.mxu0 %v1382
    %2075 = vmatpush1.bf16.msra.mxu0 %v1381
    %2076 = vmatprep.subr.bf16.mxu0 %v1390
    %2077 = vmatpush1.bf16.msra.mxu0 %v1389
    %2078 = vmatprep.subr.bf16.mxu0 %v1398
    %2079 = vmatpush1.bf16.msra.mxu0 %v1397
    %2080 = vmatprep.subr.bf16.mxu0 %v1406
    %2081 = vmatpush1.bf16.msra.mxu0 %v1405
    %2082 = vmatprep.subr.bf16.mxu0 %v1414
    %2083 = vmatpush1.bf16.msra.mxu0 %v1413
    %2084 = vmatprep.subr.bf16.mxu0 %v1422
    %2085 = vmatpush1.bf16.msra.mxu0 %v1421
    %2086 = vmatprep.subr.bf16.mxu0 %v1430
    %2087 = vmatpush1.bf16.msra.mxu0 %v1429
    %2088 = vmatprep.subr.bf16.mxu0 %v1438
    %2089 = vmatpush1.bf16.msra.mxu0 %v1437
    %2090 = vmatprep.subr.bf16.mxu0 %v1446
    %2091 = vmatpush1.bf16.msra.mxu0 %v1445
    %2092 = vmatprep.subr.bf16.mxu0 %v1454
    %2093 = vmatpush1.bf16.msra.mxu0 %v1453
    %2094 = vmatprep.subr.bf16.mxu0 %v1462
    %2095 = vmatpush1.bf16.msra.mxu0 %v1461
    %2096 = vmatprep.mubr.bf16.mxu0 %v2063
    %2097 = vmatmul.mubr.bf16.gmra.mrb[0].mxu0 %v2062
    %v2098 = vpop.f32.mrb[0].mxu0
    %v2099 = vadd.f32 0.0, %v2098
    %v2100 = vpop.f32.mrb[0].mxu0
    %v2101 = vadd.f32 0.0, %v2100
    %v2102 = vpop.f32.mrb[0].mxu0
    %v2103 = vpop.f32.mrb[0].mxu0
    %2104 = vdwg.mxu0
    %2105 = vmatprep.subr.bf16.mxu0 %v1344
    %2106 = vmatpush1.bf16.msra.mxu0 %v1343
    %2107 = vmatprep.subr.bf16.mxu0 %v1352
    %2108 = vmatpush1.bf16.msra.mxu0 %v1351
    %2109 = vmatprep.subr.bf16.mxu0 %v1360
    %2110 = vmatpush1.bf16.msra.mxu0 %v1359
    %2111 = vmatprep.subr.bf16.mxu0 %v1368
    %2112 = vmatpush1.bf16.msra.mxu0 %v1367
    %2113 = vmatprep.subr.bf16.mxu0 %v1376
    %2114 = vmatpush1.bf16.msra.mxu0 %v1375
    %2115 = vmatprep.subr.bf16.mxu0 %v1384
    %2116 = vmatpush1.bf16.msra.mxu0 %v1383
    %2117 = vmatprep.subr.bf16.mxu0 %v1392
    %2118 = vmatpush1.bf16.msra.mxu0 %v1391
    %2119 = vmatprep.subr.bf16.mxu0 %v1400
    %2120 = vmatpush1.bf16.msra.mxu0 %v1399
    %2121 = vmatprep.subr.bf16.mxu0 %v1408
    %2122 = vmatpush1.bf16.msra.mxu0 %v1407
    %2123 = vmatprep.subr.bf16.mxu0 %v1416
    %2124 = vmatpush1.bf16.msra.mxu0 %v1415
    %2125 = vmatprep.subr.bf16.mxu0 %v1424
    %2126 = vmatpush1.bf16.msra.mxu0 %v1423
    %2127 = vmatprep.subr.bf16.mxu0 %v1432
    %2128 = vmatpush1.bf16.msra.mxu0 %v1431
    %2129 = vmatprep.subr.bf16.mxu0 %v1440
    %2130 = vmatpush1.bf16.msra.mxu0 %v1439
    %2131 = vmatprep.subr.bf16.mxu0 %v1448
    %2132 = vmatpush1.bf16.msra.mxu0 %v1447
    %2133 = vmatprep.subr.bf16.mxu0 %v1456
    %2134 = vmatpush1.bf16.msra.mxu0 %v1455
    %2135 = vmatprep.subr.bf16.mxu0 %v1464
    %2136 = vmatpush1.bf16.msra.mxu0 %v1463
    %2137 = vmatprep.mubr.bf16.mxu0 %v2063
    %2138 = vmatmul.mubr.bf16.gmra.mrb[0].mxu0 %v2062
    %v2139 = vpop.f32.mrb[0].mxu0
    %v2140 = vadd.f32 0.0, %v2139
    %v2141 = vpop.f32.mrb[0].mxu0
    %v2142 = vadd.f32 0.0, %v2141
    %v2143 = vpop.f32.mrb[0].mxu0
    %v2144 = vpop.f32.mrb[0].mxu0
    %2145 = vdwg.mxu0
    %2146 = vmatprep.subr.bf16.mxu0 %v1346
    %2147 = vmatpush1.bf16.msra.mxu0 %v1345
    %2148 = vmatprep.subr.bf16.mxu0 %v1354
    %2149 = vmatpush1.bf16.msra.mxu0 %v1353
    %2150 = vmatprep.subr.bf16.mxu0 %v1362
    %2151 = vmatpush1.bf16.msra.mxu0 %v1361
    %2152 = vmatprep.subr.bf16.mxu0 %v1370
    %2153 = vmatpush1.bf16.msra.mxu0 %v1369
    %2154 = vmatprep.subr.bf16.mxu0 %v1378
    %2155 = vmatpush1.bf16.msra.mxu0 %v1377
    %2156 = vmatprep.subr.bf16.mxu0 %v1386
    %2157 = vmatpush1.bf16.msra.mxu0 %v1385
    %2158 = vmatprep.subr.bf16.mxu0 %v1394
    %2159 = vmatpush1.bf16.msra.mxu0 %v1393
    %2160 = vmatprep.subr.bf16.mxu0 %v1402
    %2161 = vmatpush1.bf16.msra.mxu0 %v1401
    %2162 = vmatprep.subr.bf16.mxu0 %v1410
    %2163 = vmatpush1.bf16.msra.mxu0 %v1409
    %2164 = vmatprep.subr.bf16.mxu0 %v1418
    %2165 = vmatpush1.bf16.msra.mxu0 %v1417
    %2166 = vmatprep.subr.bf16.mxu0 %v1426
    %2167 = vmatpush1.bf16.msra.mxu0 %v1425
    %2168 = vmatprep.subr.bf16.mxu0 %v1434
    %2169 = vmatpush1.bf16.msra.mxu0 %v1433
    %2170 = vmatprep.subr.bf16.mxu0 %v1442
    %2171 = vmatpush1.bf16.msra.mxu0 %v1441
    %2172 = vmatprep.subr.bf16.mxu0 %v1450
    %2173 = vmatpush1.bf16.msra.mxu0 %v1449
    %2174 = vmatprep.subr.bf16.mxu0 %v1458
    %2175 = vmatpush1.bf16.msra.mxu0 %v1457
    %2176 = vmatprep.subr.bf16.mxu0 %v1466
    %2177 = vmatpush1.bf16.msra.mxu0 %v1465
    %2178 = vmatprep.mubr.bf16.mxu0 %v2063
    %2179 = vmatmul.mubr.bf16.gmra.mrb[0].mxu0 %v2062
    %v2180 = vpop.f32.mrb[0].mxu0
    %v2181 = vadd.f32 0.0, %v2180
    %v2182 = vpop.f32.mrb[0].mxu0
    %v2183 = vadd.f32 0.0, %v2182
    %v2184 = vpop.f32.mrb[0].mxu0
    %v2185 = vpop.f32.mrb[0].mxu0
    %2186 = vdwg.mxu0
    %2187 = vmatprep.subr.bf16.mxu0 %v1348
    %2188 = vmatpush1.bf16.msra.mxu0 %v1347
    %2189 = vmatprep.subr.bf16.mxu0 %v1356
    %2190 = vmatpush1.bf16.msra.mxu0 %v1355
    %2191 = vmatprep.subr.bf16.mxu0 %v1364
    %2192 = vmatpush1.bf16.msra.mxu0 %v1363
    %2193 = vmatprep.subr.bf16.mxu0 %v1372
    %2194 = vmatpush1.bf16.msra.mxu0 %v1371
    %2195 = vmatprep.subr.bf16.mxu0 %v1380
    %2196 = vmatpush1.bf16.msra.mxu0 %v1379
    %2197 = vmatprep.subr.bf16.mxu0 %v1388
    %2198 = vmatpush1.bf16.msra.mxu0 %v1387
    %2199 = vmatprep.subr.bf16.mxu0 %v1396
    %2200 = vmatpush1.bf16.msra.mxu0 %v1395
    %2201 = vmatprep.subr.bf16.mxu0 %v1404
    %2202 = vmatpush1.bf16.msra.mxu0 %v1403
    %2203 = vmatprep.subr.bf16.mxu0 %v1412
    %2204 = vmatpush1.bf16.msra.mxu0 %v1411
    %2205 = vmatprep.subr.bf16.mxu0 %v1420
    %2206 = vmatpush1.bf16.msra.mxu0 %v1419
    %2207 = vmatprep.subr.bf16.mxu0 %v1428
    %2208 = vmatpush1.bf16.msra.mxu0 %v1427
    %2209 = vmatprep.subr.bf16.mxu0 %v1436
    %2210 = vmatpush1.bf16.msra.mxu0 %v1435
    %2211 = vmatprep.subr.bf16.mxu0 %v1444
    %2212 = vmatpush1.bf16.msra.mxu0 %v1443
    %2213 = vmatprep.subr.bf16.mxu0 %v1452
    %2214 = vmatpush1.bf16.msra.mxu0 %v1451
    %2215 = vmatprep.subr.bf16.mxu0 %v1460
    %2216 = vmatpush1.bf16.msra.mxu0 %v1459
    %2217 = vmatprep.subr.bf16.mxu0 %v1468
    %2218 = vmatpush1.bf16.msra.mxu0 %v1467
    %2219 = vmatprep.mubr.bf16.mxu0 %v2063
    %2220 = vmatmul.mubr.bf16.gmra.mrb[0].mxu0 %v2062
    %v2221 = vpop.f32.mrb[0].mxu0
    %v2222 = vadd.f32 0.0, %v2221
    %v2223 = vpop.f32.mrb[0].mxu0
    %v2224 = vadd.f32 0.0, %v2223
    %v2225 = vpop.f32.mrb[0].mxu0
    %v2226 = vpop.f32.mrb[0].mxu0
    %2227 = vdwg.mxu0
    %v2228 = vadd.f32 %v574, %v2099
    %v2229 = vadd.f32 %v576, %v2101
    %v2230 = vadd.f32 %v647, %v2140
    %v2231 = vadd.f32 %v649, %v2142
    %v2232 = vadd.f32 %v720, %v2181
    %v2233 = vadd.f32 %v722, %v2183
    %v2234 = vadd.f32 %v793, %v2222
    %v2235 = vadd.f32 %v795, %v2224
    %v2236 = vxor.u32 %v2228, 2147483648
    %v2237 = vxor.u32 %v2229, 2147483648
    %v2238 = vmul.f32 %v2236, 1.442695
    %v2239 = vpow.pop %v2238
    %v2240 = vmul.f32 %v2237, 1.442695
    %v2241 = vpow.pop %v2240
    %v2242 = vadd.f32 %v2239, 1.0
    %v2243 = vadd.f32 %v2241, 1.0
    %v2244 = vrcp.pop %v2242
    %v2245 = vmul.f32 1.0, %v2244
    %v2246 = vrcp.pop %v2243
    %v2247 = vmul.f32 1.0, %v2246
    %v2248 = vxor.u32 %v2230, 2147483648
    %v2249 = vxor.u32 %v2231, 2147483648
    %v2250 = vmul.f32 %v2248, 1.442695
    %v2251 = vpow.pop %v2250
    %v2252 = vmul.f32 %v2249, 1.442695
    %v2253 = vpow.pop %v2252
    %v2254 = vadd.f32 %v2251, 1.0
    %v2255 = vadd.f32 %v2253, 1.0
    %v2256 = vrcp.pop %v2254
    %v2257 = vmul.f32 1.0, %v2256
    %v2258 = vrcp.pop %v2255
    %v2259 = vmul.f32 1.0, %v2258
    %v2260 = vtanh.pop %v2232
    %v2261 = vtanh.pop %v2233
    %v2262 = vxor.u32 %v2234, 2147483648
    %v2263 = vxor.u32 %v2235, 2147483648
    %v2264 = vmul.f32 %v2262, 1.442695
    %v2265 = vpow.pop %v2264
    %v2266 = vmul.f32 %v2263, 1.442695
    %v2267 = vpow.pop %v2266
    %v2268 = vadd.f32 %v2265, 1.0
    %v2269 = vadd.f32 %v2267, 1.0
    %v2270 = vrcp.pop %v2268
    %v2271 = vmul.f32 1.0, %v2270
    %v2272 = vrcp.pop %v2269
    %v2273 = vmul.f32 1.0, %v2272
    %v2274 = vmul.f32 %v2257, %v2060
    %v2275 = vmul.f32 %v2259, %v2061
    %v2276 = vmul.f32 %v2245, %v2260
    %v2277 = vmul.f32 %v2247, %v2261
    %v2278 = vadd.f32 %v2274, %v2276
    %v2279 = vadd.f32 %v2275, %v2277
    %v2280 = vtanh.pop %v2278
    %v2281 = vtanh.pop %v2279
    %v2282 = vmul.f32 %v2271, %v2280
    %v2283 = vmul.f32 %v2273, %v2281
    %s2284 = sadd.s32 %s822, 2
    %v2285 = vstv %s2284
    %vm2286 = vcmp.lt.s32.totalorder %v2285, %v821
    %v2287 = vsel %vm2286, 1, 0
    %2288 = vset.pattern.permute.xlu0 0
    %2289 = vperm.xlu0 %2288, %v2287
    %v2290 = vpop.permute.xlu0 %2289
    %vm2291 = vcmp.eq.s32.totalorder %v2290, 1
    %v2292 = vsel %vm2291, %v2282, %v2058
    %v2293 = vsel %vm2291, %v2283, %v2059
    %v2294 = vsel %vm2291, %v2278, %v2060
    %v2295 = vsel %vm2291, %v2279, %v2061
    %v2296 = vpack.c.bf16 %v2292, %v2292
    %v2297 = vpack.c.bf16 %v2293, %v2293
    %2298 = vmatprep.subr.bf16.mxu0 %v1342
    %2299 = vmatpush1.bf16.msra.mxu0 %v1341
    %2300 = vmatprep.subr.bf16.mxu0 %v1350
    %2301 = vmatpush1.bf16.msra.mxu0 %v1349
    %2302 = vmatprep.subr.bf16.mxu0 %v1358
    %2303 = vmatpush1.bf16.msra.mxu0 %v1357
    %2304 = vmatprep.subr.bf16.mxu0 %v1366
    %2305 = vmatpush1.bf16.msra.mxu0 %v1365
    %2306 = vmatprep.subr.bf16.mxu0 %v1374
    %2307 = vmatpush1.bf16.msra.mxu0 %v1373
    %2308 = vmatprep.subr.bf16.mxu0 %v1382
    %2309 = vmatpush1.bf16.msra.mxu0 %v1381
    %2310 = vmatprep.subr.bf16.mxu0 %v1390
    %2311 = vmatpush1.bf16.msra.mxu0 %v1389
    %2312 = vmatprep.subr.bf16.mxu0 %v1398
    %2313 = vmatpush1.bf16.msra.mxu0 %v1397
    %2314 = vmatprep.subr.bf16.mxu0 %v1406
    %2315 = vmatpush1.bf16.msra.mxu0 %v1405
    %2316 = vmatprep.subr.bf16.mxu0 %v1414
    %2317 = vmatpush1.bf16.msra.mxu0 %v1413
    %2318 = vmatprep.subr.bf16.mxu0 %v1422
    %2319 = vmatpush1.bf16.msra.mxu0 %v1421
    %2320 = vmatprep.subr.bf16.mxu0 %v1430
    %2321 = vmatpush1.bf16.msra.mxu0 %v1429
    %2322 = vmatprep.subr.bf16.mxu0 %v1438
    %2323 = vmatpush1.bf16.msra.mxu0 %v1437
    %2324 = vmatprep.subr.bf16.mxu0 %v1446
    %2325 = vmatpush1.bf16.msra.mxu0 %v1445
    %2326 = vmatprep.subr.bf16.mxu0 %v1454
    %2327 = vmatpush1.bf16.msra.mxu0 %v1453
    %2328 = vmatprep.subr.bf16.mxu0 %v1462
    %2329 = vmatpush1.bf16.msra.mxu0 %v1461
    %2330 = vmatprep.mubr.bf16.mxu0 %v2297
    %2331 = vmatmul.mubr.bf16.gmra.mrb[0].mxu0 %v2296
    %v2332 = vpop.f32.mrb[0].mxu0
    %v2333 = vadd.f32 0.0, %v2332
    %v2334 = vpop.f32.mrb[0].mxu0
    %v2335 = vadd.f32 0.0, %v2334
    %v2336 = vpop.f32.mrb[0].mxu0
    %v2337 = vpop.f32.mrb[0].mxu0
    %2338 = vdwg.mxu0
    %2339 = vmatprep.subr.bf16.mxu0 %v1344
    %2340 = vmatpush1.bf16.msra.mxu0 %v1343
    %2341 = vmatprep.subr.bf16.mxu0 %v1352
    %2342 = vmatpush1.bf16.msra.mxu0 %v1351
    %2343 = vmatprep.subr.bf16.mxu0 %v1360
    %2344 = vmatpush1.bf16.msra.mxu0 %v1359
    %2345 = vmatprep.subr.bf16.mxu0 %v1368
    %2346 = vmatpush1.bf16.msra.mxu0 %v1367
    %2347 = vmatprep.subr.bf16.mxu0 %v1376
    %2348 = vmatpush1.bf16.msra.mxu0 %v1375
    %2349 = vmatprep.subr.bf16.mxu0 %v1384
    %2350 = vmatpush1.bf16.msra.mxu0 %v1383
    %2351 = vmatprep.subr.bf16.mxu0 %v1392
    %2352 = vmatpush1.bf16.msra.mxu0 %v1391
    %2353 = vmatprep.subr.bf16.mxu0 %v1400
    %2354 = vmatpush1.bf16.msra.mxu0 %v1399
    %2355 = vmatprep.subr.bf16.mxu0 %v1408
    %2356 = vmatpush1.bf16.msra.mxu0 %v1407
    %2357 = vmatprep.subr.bf16.mxu0 %v1416
    %2358 = vmatpush1.bf16.msra.mxu0 %v1415
    %2359 = vmatprep.subr.bf16.mxu0 %v1424
    %2360 = vmatpush1.bf16.msra.mxu0 %v1423
    %2361 = vmatprep.subr.bf16.mxu0 %v1432
    %2362 = vmatpush1.bf16.msra.mxu0 %v1431
    %2363 = vmatprep.subr.bf16.mxu0 %v1440
    %2364 = vmatpush1.bf16.msra.mxu0 %v1439
    %2365 = vmatprep.subr.bf16.mxu0 %v1448
    %2366 = vmatpush1.bf16.msra.mxu0 %v1447
    %2367 = vmatprep.subr.bf16.mxu0 %v1456
    %2368 = vmatpush1.bf16.msra.mxu0 %v1455
    %2369 = vmatprep.subr.bf16.mxu0 %v1464
    %2370 = vmatpush1.bf16.msra.mxu0 %v1463
    %2371 = vmatprep.mubr.bf16.mxu0 %v2297
    %2372 = vmatmul.mubr.bf16.gmra.mrb[0].mxu0 %v2296
    %v2373 = vpop.f32.mrb[0].mxu0
    %v2374 = vadd.f32 0.0, %v2373
    %v2375 = vpop.f32.mrb[0].mxu0
    %v2376 = vadd.f32 0.0, %v2375
    %v2377 = vpop.f32.mrb[0].mxu0
    %v2378 = vpop.f32.mrb[0].mxu0
    %2379 = vdwg.mxu0
    %2380 = vmatprep.subr.bf16.mxu0 %v1346
    %2381 = vmatpush1.bf16.msra.mxu0 %v1345
    %2382 = vmatprep.subr.bf16.mxu0 %v1354
    %2383 = vmatpush1.bf16.msra.mxu0 %v1353
    %2384 = vmatprep.subr.bf16.mxu0 %v1362
    %2385 = vmatpush1.bf16.msra.mxu0 %v1361
    %2386 = vmatprep.subr.bf16.mxu0 %v1370
    %2387 = vmatpush1.bf16.msra.mxu0 %v1369
    %2388 = vmatprep.subr.bf16.mxu0 %v1378
    %2389 = vmatpush1.bf16.msra.mxu0 %v1377
    %2390 = vmatprep.subr.bf16.mxu0 %v1386
    %2391 = vmatpush1.bf16.msra.mxu0 %v1385
    %2392 = vmatprep.subr.bf16.mxu0 %v1394
    %2393 = vmatpush1.bf16.msra.mxu0 %v1393
    %2394 = vmatprep.subr.bf16.mxu0 %v1402
    %2395 = vmatpush1.bf16.msra.mxu0 %v1401
    %2396 = vmatprep.subr.bf16.mxu0 %v1410
    %2397 = vmatpush1.bf16.msra.mxu0 %v1409
    %2398 = vmatprep.subr.bf16.mxu0 %v1418
    %2399 = vmatpush1.bf16.msra.mxu0 %v1417
    %2400 = vmatprep.subr.bf16.mxu0 %v1426
    %2401 = vmatpush1.bf16.msra.mxu0 %v1425
    %2402 = vmatprep.subr.bf16.mxu0 %v1434
    %2403 = vmatpush1.bf16.msra.mxu0 %v1433
    %2404 = vmatprep.subr.bf16.mxu0 %v1442
    %2405 = vmatpush1.bf16.msra.mxu0 %v1441
    %2406 = vmatprep.subr.bf16.mxu0 %v1450
    %2407 = vmatpush1.bf16.msra.mxu0 %v1449
    %2408 = vmatprep.subr.bf16.mxu0 %v1458
    %2409 = vmatpush1.bf16.msra.mxu0 %v1457
    %2410 = vmatprep.subr.bf16.mxu0 %v1466
    %2411 = vmatpush1.bf16.msra.mxu0 %v1465
    %2412 = vmatprep.mubr.bf16.mxu0 %v2297
    %2413 = vmatmul.mubr.bf16.gmra.mrb[0].mxu0 %v2296
    %v2414 = vpop.f32.mrb[0].mxu0
    %v2415 = vadd.f32 0.0, %v2414
    %v2416 = vpop.f32.mrb[0].mxu0
    %v2417 = vadd.f32 0.0, %v2416
    %v2418 = vpop.f32.mrb[0].mxu0
    %v2419 = vpop.f32.mrb[0].mxu0
    %2420 = vdwg.mxu0
    %2421 = vmatprep.subr.bf16.mxu0 %v1348
    %2422 = vmatpush1.bf16.msra.mxu0 %v1347
    %2423 = vmatprep.subr.bf16.mxu0 %v1356
    %2424 = vmatpush1.bf16.msra.mxu0 %v1355
    %2425 = vmatprep.subr.bf16.mxu0 %v1364
    %2426 = vmatpush1.bf16.msra.mxu0 %v1363
    %2427 = vmatprep.subr.bf16.mxu0 %v1372
    %2428 = vmatpush1.bf16.msra.mxu0 %v1371
    %2429 = vmatprep.subr.bf16.mxu0 %v1380
    %2430 = vmatpush1.bf16.msra.mxu0 %v1379
    %2431 = vmatprep.subr.bf16.mxu0 %v1388
    %2432 = vmatpush1.bf16.msra.mxu0 %v1387
    %2433 = vmatprep.subr.bf16.mxu0 %v1396
    %2434 = vmatpush1.bf16.msra.mxu0 %v1395
    %2435 = vmatprep.subr.bf16.mxu0 %v1404
    %2436 = vmatpush1.bf16.msra.mxu0 %v1403
    %2437 = vmatprep.subr.bf16.mxu0 %v1412
    %2438 = vmatpush1.bf16.msra.mxu0 %v1411
    %2439 = vmatprep.subr.bf16.mxu0 %v1420
    %2440 = vmatpush1.bf16.msra.mxu0 %v1419
    %2441 = vmatprep.subr.bf16.mxu0 %v1428
    %2442 = vmatpush1.bf16.msra.mxu0 %v1427
    %2443 = vmatprep.subr.bf16.mxu0 %v1436
    %2444 = vmatpush1.bf16.msra.mxu0 %v1435
    %2445 = vmatprep.subr.bf16.mxu0 %v1444
    %2446 = vmatpush1.bf16.msra.mxu0 %v1443
    %2447 = vmatprep.subr.bf16.mxu0 %v1452
    %2448 = vmatpush1.bf16.msra.mxu0 %v1451
    %2449 = vmatprep.subr.bf16.mxu0 %v1460
    %2450 = vmatpush1.bf16.msra.mxu0 %v1459
    %2451 = vmatprep.subr.bf16.mxu0 %v1468
    %2452 = vmatpush1.bf16.msra.mxu0 %v1467
    %2453 = vmatprep.mubr.bf16.mxu0 %v2297
    %2454 = vmatmul.mubr.bf16.gmra.mrb[0].mxu0 %v2296
    %v2455 = vpop.f32.mrb[0].mxu0
    %v2456 = vadd.f32 0.0, %v2455
    %v2457 = vpop.f32.mrb[0].mxu0
    %v2458 = vadd.f32 0.0, %v2457
    %v2459 = vpop.f32.mrb[0].mxu0
    %v2460 = vpop.f32.mrb[0].mxu0
    %2461 = vdwg.mxu0
    %v2462 = vadd.f32 %v578, %v2333
    %v2463 = vadd.f32 %v580, %v2335
    %v2464 = vadd.f32 %v651, %v2374
    %v2465 = vadd.f32 %v653, %v2376
    %v2466 = vadd.f32 %v724, %v2415
    %v2467 = vadd.f32 %v726, %v2417
    %v2468 = vadd.f32 %v797, %v2456
    %v2469 = vadd.f32 %v799, %v2458
    %v2470 = vxor.u32 %v2462, 2147483648
    %v2471 = vxor.u32 %v2463, 2147483648
    %v2472 = vmul.f32 %v2470, 1.442695
    %v2473 = vpow.pop %v2472
    %v2474 = vmul.f32 %v2471, 1.442695
    %v2475 = vpow.pop %v2474
    %v2476 = vadd.f32 %v2473, 1.0
    %v2477 = vadd.f32 %v2475, 1.0
    %v2478 = vrcp.pop %v2476
    %v2479 = vmul.f32 1.0, %v2478
    %v2480 = vrcp.pop %v2477
    %v2481 = vmul.f32 1.0, %v2480
    %v2482 = vxor.u32 %v2464, 2147483648
    %v2483 = vxor.u32 %v2465, 2147483648
    %v2484 = vmul.f32 %v2482, 1.442695
    %v2485 = vpow.pop %v2484
    %v2486 = vmul.f32 %v2483, 1.442695
    %v2487 = vpow.pop %v2486
    %v2488 = vadd.f32 %v2485, 1.0
    %v2489 = vadd.f32 %v2487, 1.0
    %v2490 = vrcp.pop %v2488
    %v2491 = vmul.f32 1.0, %v2490
    %v2492 = vrcp.pop %v2489
    %v2493 = vmul.f32 1.0, %v2492
    %v2494 = vtanh.pop %v2466
    %v2495 = vtanh.pop %v2467
    %v2496 = vxor.u32 %v2468, 2147483648
    %v2497 = vxor.u32 %v2469, 2147483648
    %v2498 = vmul.f32 %v2496, 1.442695
    %v2499 = vpow.pop %v2498
    %v2500 = vmul.f32 %v2497, 1.442695
    %v2501 = vpow.pop %v2500
    %v2502 = vadd.f32 %v2499, 1.0
    %v2503 = vadd.f32 %v2501, 1.0
    %v2504 = vrcp.pop %v2502
    %v2505 = vmul.f32 1.0, %v2504
    %v2506 = vrcp.pop %v2503
    %v2507 = vmul.f32 1.0, %v2506
    %v2508 = vmul.f32 %v2491, %v2294
    %v2509 = vmul.f32 %v2493, %v2295
    %v2510 = vmul.f32 %v2479, %v2494
    %v2511 = vmul.f32 %v2481, %v2495
    %v2512 = vadd.f32 %v2508, %v2510
    %v2513 = vadd.f32 %v2509, %v2511
    %v2514 = vtanh.pop %v2512
    %v2515 = vtanh.pop %v2513
    %v2516 = vmul.f32 %v2505, %v2514
    %v2517 = vmul.f32 %v2507, %v2515
    %s2518 = sadd.s32 %s822, 3
    %v2519 = vstv %s2518
    %vm2520 = vcmp.lt.s32.totalorder %v2519, %v821
    %v2521 = vsel %vm2520, 1, 0
    %2522 = vset.pattern.permute.xlu0 0
    %2523 = vperm.xlu0 %2522, %v2521
    %v2524 = vpop.permute.xlu0 %2523
    %vm2525 = vcmp.eq.s32.totalorder %v2524, 1
    %v2526 = vsel %vm2525, %v2516, %v2292
    %v2527 = vsel %vm2525, %v2517, %v2293
    %v2528 = vsel %vm2525, %v2512, %v2294
    %v2529 = vsel %vm2525, %v2513, %v2295
    %v2530 = vpack.c.bf16 %v2526, %v2526
    %v2531 = vpack.c.bf16 %v2527, %v2527
    %2532 = vmatprep.subr.bf16.mxu0 %v1342
    %2533 = vmatpush1.bf16.msra.mxu0 %v1341
    %2534 = vmatprep.subr.bf16.mxu0 %v1350
    %2535 = vmatpush1.bf16.msra.mxu0 %v1349
    %2536 = vmatprep.subr.bf16.mxu0 %v1358
    %2537 = vmatpush1.bf16.msra.mxu0 %v1357
    %2538 = vmatprep.subr.bf16.mxu0 %v1366
    %2539 = vmatpush1.bf16.msra.mxu0 %v1365
    %2540 = vmatprep.subr.bf16.mxu0 %v1374
    %2541 = vmatpush1.bf16.msra.mxu0 %v1373
    %2542 = vmatprep.subr.bf16.mxu0 %v1382
    %2543 = vmatpush1.bf16.msra.mxu0 %v1381
    %2544 = vmatprep.subr.bf16.mxu0 %v1390
    %2545 = vmatpush1.bf16.msra.mxu0 %v1389
    %2546 = vmatprep.subr.bf16.mxu0 %v1398
    %2547 = vmatpush1.bf16.msra.mxu0 %v1397
    %2548 = vmatprep.subr.bf16.mxu0 %v1406
    %2549 = vmatpush1.bf16.msra.mxu0 %v1405
    %2550 = vmatprep.subr.bf16.mxu0 %v1414
    %2551 = vmatpush1.bf16.msra.mxu0 %v1413
    %2552 = vmatprep.subr.bf16.mxu0 %v1422
    %2553 = vmatpush1.bf16.msra.mxu0 %v1421
    %2554 = vmatprep.subr.bf16.mxu0 %v1430
    %2555 = vmatpush1.bf16.msra.mxu0 %v1429
    %2556 = vmatprep.subr.bf16.mxu0 %v1438
    %2557 = vmatpush1.bf16.msra.mxu0 %v1437
    %2558 = vmatprep.subr.bf16.mxu0 %v1446
    %2559 = vmatpush1.bf16.msra.mxu0 %v1445
    %2560 = vmatprep.subr.bf16.mxu0 %v1454
    %2561 = vmatpush1.bf16.msra.mxu0 %v1453
    %2562 = vmatprep.subr.bf16.mxu0 %v1462
    %2563 = vmatpush1.bf16.msra.mxu0 %v1461
    %2564 = vmatprep.mubr.bf16.mxu0 %v2531
    %2565 = vmatmul.mubr.bf16.gmra.mrb[0].mxu0 %v2530
    %v2566 = vpop.f32.mrb[0].mxu0
    %v2567 = vadd.f32 0.0, %v2566
    %v2568 = vpop.f32.mrb[0].mxu0
    %v2569 = vadd.f32 0.0, %v2568
    %v2570 = vpop.f32.mrb[0].mxu0
    %v2571 = vpop.f32.mrb[0].mxu0
    %2572 = vdwg.mxu0
    %2573 = vmatprep.subr.bf16.mxu0 %v1344
    %2574 = vmatpush1.bf16.msra.mxu0 %v1343
    %2575 = vmatprep.subr.bf16.mxu0 %v1352
    %2576 = vmatpush1.bf16.msra.mxu0 %v1351
    %2577 = vmatprep.subr.bf16.mxu0 %v1360
    %2578 = vmatpush1.bf16.msra.mxu0 %v1359
    %2579 = vmatprep.subr.bf16.mxu0 %v1368
    %2580 = vmatpush1.bf16.msra.mxu0 %v1367
    %2581 = vmatprep.subr.bf16.mxu0 %v1376
    %2582 = vmatpush1.bf16.msra.mxu0 %v1375
    %2583 = vmatprep.subr.bf16.mxu0 %v1384
    %2584 = vmatpush1.bf16.msra.mxu0 %v1383
    %2585 = vmatprep.subr.bf16.mxu0 %v1392
    %2586 = vmatpush1.bf16.msra.mxu0 %v1391
    %2587 = vmatprep.subr.bf16.mxu0 %v1400
    %2588 = vmatpush1.bf16.msra.mxu0 %v1399
    %2589 = vmatprep.subr.bf16.mxu0 %v1408
    %2590 = vmatpush1.bf16.msra.mxu0 %v1407
    %2591 = vmatprep.subr.bf16.mxu0 %v1416
    %2592 = vmatpush1.bf16.msra.mxu0 %v1415
    %2593 = vmatprep.subr.bf16.mxu0 %v1424
    %2594 = vmatpush1.bf16.msra.mxu0 %v1423
    %2595 = vmatprep.subr.bf16.mxu0 %v1432
    %2596 = vmatpush1.bf16.msra.mxu0 %v1431
    %2597 = vmatprep.subr.bf16.mxu0 %v1440
    %2598 = vmatpush1.bf16.msra.mxu0 %v1439
    %2599 = vmatprep.subr.bf16.mxu0 %v1448
    %2600 = vmatpush1.bf16.msra.mxu0 %v1447
    %2601 = vmatprep.subr.bf16.mxu0 %v1456
    %2602 = vmatpush1.bf16.msra.mxu0 %v1455
    %2603 = vmatprep.subr.bf16.mxu0 %v1464
    %2604 = vmatpush1.bf16.msra.mxu0 %v1463
    %2605 = vmatprep.mubr.bf16.mxu0 %v2531
    %2606 = vmatmul.mubr.bf16.gmra.mrb[0].mxu0 %v2530
    %v2607 = vpop.f32.mrb[0].mxu0
    %v2608 = vadd.f32 0.0, %v2607
    %v2609 = vpop.f32.mrb[0].mxu0
    %v2610 = vadd.f32 0.0, %v2609
    %v2611 = vpop.f32.mrb[0].mxu0
    %v2612 = vpop.f32.mrb[0].mxu0
    %2613 = vdwg.mxu0
    %2614 = vmatprep.subr.bf16.mxu0 %v1346
    %2615 = vmatpush1.bf16.msra.mxu0 %v1345
    %2616 = vmatprep.subr.bf16.mxu0 %v1354
    %2617 = vmatpush1.bf16.msra.mxu0 %v1353
    %2618 = vmatprep.subr.bf16.mxu0 %v1362
    %2619 = vmatpush1.bf16.msra.mxu0 %v1361
    %2620 = vmatprep.subr.bf16.mxu0 %v1370
    %2621 = vmatpush1.bf16.msra.mxu0 %v1369
    %2622 = vmatprep.subr.bf16.mxu0 %v1378
    %2623 = vmatpush1.bf16.msra.mxu0 %v1377
    %2624 = vmatprep.subr.bf16.mxu0 %v1386
    %2625 = vmatpush1.bf16.msra.mxu0 %v1385
    %2626 = vmatprep.subr.bf16.mxu0 %v1394
    %2627 = vmatpush1.bf16.msra.mxu0 %v1393
    %2628 = vmatprep.subr.bf16.mxu0 %v1402
    %2629 = vmatpush1.bf16.msra.mxu0 %v1401
    %2630 = vmatprep.subr.bf16.mxu0 %v1410
    %2631 = vmatpush1.bf16.msra.mxu0 %v1409
    %2632 = vmatprep.subr.bf16.mxu0 %v1418
    %2633 = vmatpush1.bf16.msra.mxu0 %v1417
    %2634 = vmatprep.subr.bf16.mxu0 %v1426
    %2635 = vmatpush1.bf16.msra.mxu0 %v1425
    %2636 = vmatprep.subr.bf16.mxu0 %v1434
    %2637 = vmatpush1.bf16.msra.mxu0 %v1433
    %2638 = vmatprep.subr.bf16.mxu0 %v1442
    %2639 = vmatpush1.bf16.msra.mxu0 %v1441
    %2640 = vmatprep.subr.bf16.mxu0 %v1450
    %2641 = vmatpush1.bf16.msra.mxu0 %v1449
    %2642 = vmatprep.subr.bf16.mxu0 %v1458
    %2643 = vmatpush1.bf16.msra.mxu0 %v1457
    %2644 = vmatprep.subr.bf16.mxu0 %v1466
    %2645 = vmatpush1.bf16.msra.mxu0 %v1465
    %2646 = vmatprep.mubr.bf16.mxu0 %v2531
    %2647 = vmatmul.mubr.bf16.gmra.mrb[0].mxu0 %v2530
    %v2648 = vpop.f32.mrb[0].mxu0
    %v2649 = vadd.f32 0.0, %v2648
    %v2650 = vpop.f32.mrb[0].mxu0
    %v2651 = vadd.f32 0.0, %v2650
    %v2652 = vpop.f32.mrb[0].mxu0
    %v2653 = vpop.f32.mrb[0].mxu0
    %2654 = vdwg.mxu0
    %2655 = vmatprep.subr.bf16.mxu0 %v1348
    %2656 = vmatpush1.bf16.msra.mxu0 %v1347
    %2657 = vmatprep.subr.bf16.mxu0 %v1356
    %2658 = vmatpush1.bf16.msra.mxu0 %v1355
    %2659 = vmatprep.subr.bf16.mxu0 %v1364
    %2660 = vmatpush1.bf16.msra.mxu0 %v1363
    %2661 = vmatprep.subr.bf16.mxu0 %v1372
    %2662 = vmatpush1.bf16.msra.mxu0 %v1371
    %2663 = vmatprep.subr.bf16.mxu0 %v1380
    %2664 = vmatpush1.bf16.msra.mxu0 %v1379
    %2665 = vmatprep.subr.bf16.mxu0 %v1388
    %2666 = vmatpush1.bf16.msra.mxu0 %v1387
    %2667 = vmatprep.subr.bf16.mxu0 %v1396
    %2668 = vmatpush1.bf16.msra.mxu0 %v1395
    %2669 = vmatprep.subr.bf16.mxu0 %v1404
    %2670 = vmatpush1.bf16.msra.mxu0 %v1403
    %2671 = vmatprep.subr.bf16.mxu0 %v1412
    %2672 = vmatpush1.bf16.msra.mxu0 %v1411
    %2673 = vmatprep.subr.bf16.mxu0 %v1420
    %2674 = vmatpush1.bf16.msra.mxu0 %v1419
    %2675 = vmatprep.subr.bf16.mxu0 %v1428
    %2676 = vmatpush1.bf16.msra.mxu0 %v1427
    %2677 = vmatprep.subr.bf16.mxu0 %v1436
    %2678 = vmatpush1.bf16.msra.mxu0 %v1435
    %2679 = vmatprep.subr.bf16.mxu0 %v1444
    %2680 = vmatpush1.bf16.msra.mxu0 %v1443
    %2681 = vmatprep.subr.bf16.mxu0 %v1452
    %2682 = vmatpush1.bf16.msra.mxu0 %v1451
    %2683 = vmatprep.subr.bf16.mxu0 %v1460
    %2684 = vmatpush1.bf16.msra.mxu0 %v1459
    %2685 = vmatprep.subr.bf16.mxu0 %v1468
    %2686 = vmatpush1.bf16.msra.mxu0 %v1467
    %2687 = vmatprep.mubr.bf16.mxu0 %v2531
    %2688 = vmatmul.mubr.bf16.gmra.mrb[0].mxu0 %v2530
    %v2689 = vpop.f32.mrb[0].mxu0
    %v2690 = vadd.f32 0.0, %v2689
    %v2691 = vpop.f32.mrb[0].mxu0
    %v2692 = vadd.f32 0.0, %v2691
    %v2693 = vpop.f32.mrb[0].mxu0
    %v2694 = vpop.f32.mrb[0].mxu0
    %2695 = vdwg.mxu0
    %v2696 = vadd.f32 %v584, %v2567
    %v2697 = vadd.f32 %v586, %v2569
    %v2698 = vadd.f32 %v657, %v2608
    %v2699 = vadd.f32 %v659, %v2610
    %v2700 = vadd.f32 %v730, %v2649
    %v2701 = vadd.f32 %v732, %v2651
    %v2702 = vadd.f32 %v803, %v2690
    %v2703 = vadd.f32 %v805, %v2692
    %v2704 = vxor.u32 %v2696, 2147483648
    %v2705 = vxor.u32 %v2697, 2147483648
    %v2706 = vmul.f32 %v2704, 1.442695
    %v2707 = vpow.pop %v2706
    %v2708 = vmul.f32 %v2705, 1.442695
    %v2709 = vpow.pop %v2708
    %v2710 = vadd.f32 %v2707, 1.0
    %v2711 = vadd.f32 %v2709, 1.0
    %v2712 = vrcp.pop %v2710
    %v2713 = vmul.f32 1.0, %v2712
    %v2714 = vrcp.pop %v2711
    %v2715 = vmul.f32 1.0, %v2714
    %v2716 = vxor.u32 %v2698, 2147483648
    %v2717 = vxor.u32 %v2699, 2147483648
    %v2718 = vmul.f32 %v2716, 1.442695
    %v2719 = vpow.pop %v2718
    %v2720 = vmul.f32 %v2717, 1.442695
    %v2721 = vpow.pop %v2720
    %v2722 = vadd.f32 %v2719, 1.0
    %v2723 = vadd.f32 %v2721, 1.0
    %v2724 = vrcp.pop %v2722
    %v2725 = vmul.f32 1.0, %v2724
    %v2726 = vrcp.pop %v2723
    %v2727 = vmul.f32 1.0, %v2726
    %v2728 = vtanh.pop %v2700
    %v2729 = vtanh.pop %v2701
    %v2730 = vxor.u32 %v2702, 2147483648
    %v2731 = vxor.u32 %v2703, 2147483648
    %v2732 = vmul.f32 %v2730, 1.442695
    %v2733 = vpow.pop %v2732
    %v2734 = vmul.f32 %v2731, 1.442695
    %v2735 = vpow.pop %v2734
    %v2736 = vadd.f32 %v2733, 1.0
    %v2737 = vadd.f32 %v2735, 1.0
    %v2738 = vrcp.pop %v2736
    %v2739 = vmul.f32 1.0, %v2738
    %v2740 = vrcp.pop %v2737
    %v2741 = vmul.f32 1.0, %v2740
    %v2742 = vmul.f32 %v2725, %v2528
    %v2743 = vmul.f32 %v2727, %v2529
    %v2744 = vmul.f32 %v2713, %v2728
    %v2745 = vmul.f32 %v2715, %v2729
    %v2746 = vadd.f32 %v2742, %v2744
    %v2747 = vadd.f32 %v2743, %v2745
    %v2748 = vtanh.pop %v2746
    %v2749 = vtanh.pop %v2747
    %v2750 = vmul.f32 %v2739, %v2748
    %v2751 = vmul.f32 %v2741, %v2749
    %s2752 = sadd.s32 %s822, 4
    %v2753 = vstv %s2752
    %vm2754 = vcmp.lt.s32.totalorder %v2753, %v821
    %v2755 = vsel %vm2754, 1, 0
    %2756 = vset.pattern.permute.xlu0 0
    %2757 = vperm.xlu0 %2756, %v2755
    %v2758 = vpop.permute.xlu0 %2757
    %vm2759 = vcmp.eq.s32.totalorder %v2758, 1
    %v2760 = vsel %vm2759, %v2750, %v2526
    %v2761 = vsel %vm2759, %v2751, %v2527
    %v2762 = vsel %vm2759, %v2746, %v2528
    %v2763 = vsel %vm2759, %v2747, %v2529
    %v2764 = vpack.c.bf16 %v2760, %v2760
    %v2765 = vpack.c.bf16 %v2761, %v2761
    %2766 = vmatprep.subr.bf16.mxu0 %v1342
    %2767 = vmatpush1.bf16.msra.mxu0 %v1341
    %2768 = vmatprep.subr.bf16.mxu0 %v1350
    %2769 = vmatpush1.bf16.msra.mxu0 %v1349
    %2770 = vmatprep.subr.bf16.mxu0 %v1358
    %2771 = vmatpush1.bf16.msra.mxu0 %v1357
    %2772 = vmatprep.subr.bf16.mxu0 %v1366
    %2773 = vmatpush1.bf16.msra.mxu0 %v1365
    %2774 = vmatprep.subr.bf16.mxu0 %v1374
    %2775 = vmatpush1.bf16.msra.mxu0 %v1373
    %2776 = vmatprep.subr.bf16.mxu0 %v1382
    %2777 = vmatpush1.bf16.msra.mxu0 %v1381
    %2778 = vmatprep.subr.bf16.mxu0 %v1390
    %2779 = vmatpush1.bf16.msra.mxu0 %v1389
    %2780 = vmatprep.subr.bf16.mxu0 %v1398
    %2781 = vmatpush1.bf16.msra.mxu0 %v1397
    %2782 = vmatprep.subr.bf16.mxu0 %v1406
    %2783 = vmatpush1.bf16.msra.mxu0 %v1405
    %2784 = vmatprep.subr.bf16.mxu0 %v1414
    %2785 = vmatpush1.bf16.msra.mxu0 %v1413
    %2786 = vmatprep.subr.bf16.mxu0 %v1422
    %2787 = vmatpush1.bf16.msra.mxu0 %v1421
    %2788 = vmatprep.subr.bf16.mxu0 %v1430
    %2789 = vmatpush1.bf16.msra.mxu0 %v1429
    %2790 = vmatprep.subr.bf16.mxu0 %v1438
    %2791 = vmatpush1.bf16.msra.mxu0 %v1437
    %2792 = vmatprep.subr.bf16.mxu0 %v1446
    %2793 = vmatpush1.bf16.msra.mxu0 %v1445
    %2794 = vmatprep.subr.bf16.mxu0 %v1454
    %2795 = vmatpush1.bf16.msra.mxu0 %v1453
    %2796 = vmatprep.subr.bf16.mxu0 %v1462
    %2797 = vmatpush1.bf16.msra.mxu0 %v1461
    %2798 = vmatprep.mubr.bf16.mxu0 %v2765
    %2799 = vmatmul.mubr.bf16.gmra.mrb[0].mxu0 %v2764
    %v2800 = vpop.f32.mrb[0].mxu0
    %v2801 = vadd.f32 0.0, %v2800
    %v2802 = vpop.f32.mrb[0].mxu0
    %v2803 = vadd.f32 0.0, %v2802
    %v2804 = vpop.f32.mrb[0].mxu0
    %v2805 = vpop.f32.mrb[0].mxu0
    %2806 = vdwg.mxu0
    %2807 = vmatprep.subr.bf16.mxu0 %v1344
    %2808 = vmatpush1.bf16.msra.mxu0 %v1343
    %2809 = vmatprep.subr.bf16.mxu0 %v1352
    %2810 = vmatpush1.bf16.msra.mxu0 %v1351
    %2811 = vmatprep.subr.bf16.mxu0 %v1360
    %2812 = vmatpush1.bf16.msra.mxu0 %v1359
    %2813 = vmatprep.subr.bf16.mxu0 %v1368
    %2814 = vmatpush1.bf16.msra.mxu0 %v1367
    %2815 = vmatprep.subr.bf16.mxu0 %v1376
    %2816 = vmatpush1.bf16.msra.mxu0 %v1375
    %2817 = vmatprep.subr.bf16.mxu0 %v1384
    %2818 = vmatpush1.bf16.msra.mxu0 %v1383
    %2819 = vmatprep.subr.bf16.mxu0 %v1392
    %2820 = vmatpush1.bf16.msra.mxu0 %v1391
    %2821 = vmatprep.subr.bf16.mxu0 %v1400
    %2822 = vmatpush1.bf16.msra.mxu0 %v1399
    %2823 = vmatprep.subr.bf16.mxu0 %v1408
    %2824 = vmatpush1.bf16.msra.mxu0 %v1407
    %2825 = vmatprep.subr.bf16.mxu0 %v1416
    %2826 = vmatpush1.bf16.msra.mxu0 %v1415
    %2827 = vmatprep.subr.bf16.mxu0 %v1424
    %2828 = vmatpush1.bf16.msra.mxu0 %v1423
    %2829 = vmatprep.subr.bf16.mxu0 %v1432
    %2830 = vmatpush1.bf16.msra.mxu0 %v1431
    %2831 = vmatprep.subr.bf16.mxu0 %v1440
    %2832 = vmatpush1.bf16.msra.mxu0 %v1439
    %2833 = vmatprep.subr.bf16.mxu0 %v1448
    %2834 = vmatpush1.bf16.msra.mxu0 %v1447
    %2835 = vmatprep.subr.bf16.mxu0 %v1456
    %2836 = vmatpush1.bf16.msra.mxu0 %v1455
    %2837 = vmatprep.subr.bf16.mxu0 %v1464
    %2838 = vmatpush1.bf16.msra.mxu0 %v1463
    %2839 = vmatprep.mubr.bf16.mxu0 %v2765
    %2840 = vmatmul.mubr.bf16.gmra.mrb[0].mxu0 %v2764
    %v2841 = vpop.f32.mrb[0].mxu0
    %v2842 = vadd.f32 0.0, %v2841
    %v2843 = vpop.f32.mrb[0].mxu0
    %v2844 = vadd.f32 0.0, %v2843
    %v2845 = vpop.f32.mrb[0].mxu0
    %v2846 = vpop.f32.mrb[0].mxu0
    %2847 = vdwg.mxu0
    %2848 = vmatprep.subr.bf16.mxu0 %v1346
    %2849 = vmatpush1.bf16.msra.mxu0 %v1345
    %2850 = vmatprep.subr.bf16.mxu0 %v1354
    %2851 = vmatpush1.bf16.msra.mxu0 %v1353
    %2852 = vmatprep.subr.bf16.mxu0 %v1362
    %2853 = vmatpush1.bf16.msra.mxu0 %v1361
    %2854 = vmatprep.subr.bf16.mxu0 %v1370
    %2855 = vmatpush1.bf16.msra.mxu0 %v1369
    %2856 = vmatprep.subr.bf16.mxu0 %v1378
    %2857 = vmatpush1.bf16.msra.mxu0 %v1377
    %2858 = vmatprep.subr.bf16.mxu0 %v1386
    %2859 = vmatpush1.bf16.msra.mxu0 %v1385
    %2860 = vmatprep.subr.bf16.mxu0 %v1394
    %2861 = vmatpush1.bf16.msra.mxu0 %v1393
    %2862 = vmatprep.subr.bf16.mxu0 %v1402
    %2863 = vmatpush1.bf16.msra.mxu0 %v1401
    %2864 = vmatprep.subr.bf16.mxu0 %v1410
    %2865 = vmatpush1.bf16.msra.mxu0 %v1409
    %2866 = vmatprep.subr.bf16.mxu0 %v1418
    %2867 = vmatpush1.bf16.msra.mxu0 %v1417
    %2868 = vmatprep.subr.bf16.mxu0 %v1426
    %2869 = vmatpush1.bf16.msra.mxu0 %v1425
    %2870 = vmatprep.subr.bf16.mxu0 %v1434
    %2871 = vmatpush1.bf16.msra.mxu0 %v1433
    %2872 = vmatprep.subr.bf16.mxu0 %v1442
    %2873 = vmatpush1.bf16.msra.mxu0 %v1441
    %2874 = vmatprep.subr.bf16.mxu0 %v1450
    %2875 = vmatpush1.bf16.msra.mxu0 %v1449
    %2876 = vmatprep.subr.bf16.mxu0 %v1458
    %2877 = vmatpush1.bf16.msra.mxu0 %v1457
    %2878 = vmatprep.subr.bf16.mxu0 %v1466
    %2879 = vmatpush1.bf16.msra.mxu0 %v1465
    %2880 = vmatprep.mubr.bf16.mxu0 %v2765
    %2881 = vmatmul.mubr.bf16.gmra.mrb[0].mxu0 %v2764
    %v2882 = vpop.f32.mrb[0].mxu0
    %v2883 = vadd.f32 0.0, %v2882
    %v2884 = vpop.f32.mrb[0].mxu0
    %v2885 = vadd.f32 0.0, %v2884
    %v2886 = vpop.f32.mrb[0].mxu0
    %v2887 = vpop.f32.mrb[0].mxu0
    %2888 = vdwg.mxu0
    %2889 = vmatprep.subr.bf16.mxu0 %v1348
    %2890 = vmatpush1.bf16.msra.mxu0 %v1347
    %2891 = vmatprep.subr.bf16.mxu0 %v1356
    %2892 = vmatpush1.bf16.msra.mxu0 %v1355
    %2893 = vmatprep.subr.bf16.mxu0 %v1364
    %2894 = vmatpush1.bf16.msra.mxu0 %v1363
    %2895 = vmatprep.subr.bf16.mxu0 %v1372
    %2896 = vmatpush1.bf16.msra.mxu0 %v1371
    %2897 = vmatprep.subr.bf16.mxu0 %v1380
    %2898 = vmatpush1.bf16.msra.mxu0 %v1379
    %2899 = vmatprep.subr.bf16.mxu0 %v1388
    %2900 = vmatpush1.bf16.msra.mxu0 %v1387
    %2901 = vmatprep.subr.bf16.mxu0 %v1396
    %2902 = vmatpush1.bf16.msra.mxu0 %v1395
    %2903 = vmatprep.subr.bf16.mxu0 %v1404
    %2904 = vmatpush1.bf16.msra.mxu0 %v1403
    %2905 = vmatprep.subr.bf16.mxu0 %v1412
    %2906 = vmatpush1.bf16.msra.mxu0 %v1411
    %2907 = vmatprep.subr.bf16.mxu0 %v1420
    %2908 = vmatpush1.bf16.msra.mxu0 %v1419
    %2909 = vmatprep.subr.bf16.mxu0 %v1428
    %2910 = vmatpush1.bf16.msra.mxu0 %v1427
    %2911 = vmatprep.subr.bf16.mxu0 %v1436
    %2912 = vmatpush1.bf16.msra.mxu0 %v1435
    %2913 = vmatprep.subr.bf16.mxu0 %v1444
    %2914 = vmatpush1.bf16.msra.mxu0 %v1443
    %2915 = vmatprep.subr.bf16.mxu0 %v1452
    %2916 = vmatpush1.bf16.msra.mxu0 %v1451
    %2917 = vmatprep.subr.bf16.mxu0 %v1460
    %2918 = vmatpush1.bf16.msra.mxu0 %v1459
    %2919 = vmatprep.subr.bf16.mxu0 %v1468
    %2920 = vmatpush1.bf16.msra.mxu0 %v1467
    %2921 = vmatprep.mubr.bf16.mxu0 %v2765
    %2922 = vmatmul.mubr.bf16.gmra.mrb[0].mxu0 %v2764
    %v2923 = vpop.f32.mrb[0].mxu0
    %v2924 = vadd.f32 0.0, %v2923
    %v2925 = vpop.f32.mrb[0].mxu0
    %v2926 = vadd.f32 0.0, %v2925
    %v2927 = vpop.f32.mrb[0].mxu0
    %v2928 = vpop.f32.mrb[0].mxu0
    %2929 = vdwg.mxu0
    %v2930 = vadd.f32 %v588, %v2801
    %v2931 = vadd.f32 %v590, %v2803
    %v2932 = vadd.f32 %v661, %v2842
    %v2933 = vadd.f32 %v663, %v2844
    %v2934 = vadd.f32 %v734, %v2883
    %v2935 = vadd.f32 %v736, %v2885
    %v2936 = vadd.f32 %v807, %v2924
    %v2937 = vadd.f32 %v809, %v2926
    %v2938 = vxor.u32 %v2930, 2147483648
    %v2939 = vxor.u32 %v2931, 2147483648
    %v2940 = vmul.f32 %v2938, 1.442695
    %v2941 = vpow.pop %v2940
    %v2942 = vmul.f32 %v2939, 1.442695
    %v2943 = vpow.pop %v2942
    %v2944 = vadd.f32 %v2941, 1.0
    %v2945 = vadd.f32 %v2943, 1.0
    %v2946 = vrcp.pop %v2944
    %v2947 = vmul.f32 1.0, %v2946
    %v2948 = vrcp.pop %v2945
    %v2949 = vmul.f32 1.0, %v2948
    %v2950 = vxor.u32 %v2932, 2147483648
    %v2951 = vxor.u32 %v2933, 2147483648
    %v2952 = vmul.f32 %v2950, 1.442695
    %v2953 = vpow.pop %v2952
    %v2954 = vmul.f32 %v2951, 1.442695
    %v2955 = vpow.pop %v2954
    %v2956 = vadd.f32 %v2953, 1.0
    %v2957 = vadd.f32 %v2955, 1.0
    %v2958 = vrcp.pop %v2956
    %v2959 = vmul.f32 1.0, %v2958
    %v2960 = vrcp.pop %v2957
    %v2961 = vmul.f32 1.0, %v2960
    %v2962 = vtanh.pop %v2934
    %v2963 = vtanh.pop %v2935
    %v2964 = vxor.u32 %v2936, 2147483648
    %v2965 = vxor.u32 %v2937, 2147483648
    %v2966 = vmul.f32 %v2964, 1.442695
    %v2967 = vpow.pop %v2966
    %v2968 = vmul.f32 %v2965, 1.442695
    %v2969 = vpow.pop %v2968
    %v2970 = vadd.f32 %v2967, 1.0
    %v2971 = vadd.f32 %v2969, 1.0
    %v2972 = vrcp.pop %v2970
    %v2973 = vmul.f32 1.0, %v2972
    %v2974 = vrcp.pop %v2971
    %v2975 = vmul.f32 1.0, %v2974
    %v2976 = vmul.f32 %v2959, %v2762
    %v2977 = vmul.f32 %v2961, %v2763
    %v2978 = vmul.f32 %v2947, %v2962
    %v2979 = vmul.f32 %v2949, %v2963
    %v2980 = vadd.f32 %v2976, %v2978
    %v2981 = vadd.f32 %v2977, %v2979
    %v2982 = vtanh.pop %v2980
    %v2983 = vtanh.pop %v2981
    %v2984 = vmul.f32 %v2973, %v2982
    %v2985 = vmul.f32 %v2975, %v2983
    %s2986 = sadd.s32 %s822, 5
    %v2987 = vstv %s2986
    %vm2988 = vcmp.lt.s32.totalorder %v2987, %v821
    %v2989 = vsel %vm2988, 1, 0
    %2990 = vset.pattern.permute.xlu0 0
    %2991 = vperm.xlu0 %2990, %v2989
    %v2992 = vpop.permute.xlu0 %2991
    %vm2993 = vcmp.eq.s32.totalorder %v2992, 1
    %v2994 = vsel %vm2993, %v2984, %v2760
    %v2995 = vsel %vm2993, %v2985, %v2761
    %v2996 = vsel %vm2993, %v2980, %v2762
    %v2997 = vsel %vm2993, %v2981, %v2763
    %v2998 = vpack.c.bf16 %v2994, %v2994
    %v2999 = vpack.c.bf16 %v2995, %v2995
    %3000 = vmatprep.subr.bf16.mxu0 %v1342
    %3001 = vmatpush1.bf16.msra.mxu0 %v1341
    %3002 = vmatprep.subr.bf16.mxu0 %v1350
    %3003 = vmatpush1.bf16.msra.mxu0 %v1349
    %3004 = vmatprep.subr.bf16.mxu0 %v1358
    %3005 = vmatpush1.bf16.msra.mxu0 %v1357
    %3006 = vmatprep.subr.bf16.mxu0 %v1366
    %3007 = vmatpush1.bf16.msra.mxu0 %v1365
    %3008 = vmatprep.subr.bf16.mxu0 %v1374
    %3009 = vmatpush1.bf16.msra.mxu0 %v1373
    %3010 = vmatprep.subr.bf16.mxu0 %v1382
    %3011 = vmatpush1.bf16.msra.mxu0 %v1381
    %3012 = vmatprep.subr.bf16.mxu0 %v1390
    %3013 = vmatpush1.bf16.msra.mxu0 %v1389
    %3014 = vmatprep.subr.bf16.mxu0 %v1398
    %3015 = vmatpush1.bf16.msra.mxu0 %v1397
    %3016 = vmatprep.subr.bf16.mxu0 %v1406
    %3017 = vmatpush1.bf16.msra.mxu0 %v1405
    %3018 = vmatprep.subr.bf16.mxu0 %v1414
    %3019 = vmatpush1.bf16.msra.mxu0 %v1413
    %3020 = vmatprep.subr.bf16.mxu0 %v1422
    %3021 = vmatpush1.bf16.msra.mxu0 %v1421
    %3022 = vmatprep.subr.bf16.mxu0 %v1430
    %3023 = vmatpush1.bf16.msra.mxu0 %v1429
    %3024 = vmatprep.subr.bf16.mxu0 %v1438
    %3025 = vmatpush1.bf16.msra.mxu0 %v1437
    %3026 = vmatprep.subr.bf16.mxu0 %v1446
    %3027 = vmatpush1.bf16.msra.mxu0 %v1445
    %3028 = vmatprep.subr.bf16.mxu0 %v1454
    %3029 = vmatpush1.bf16.msra.mxu0 %v1453
    %3030 = vmatprep.subr.bf16.mxu0 %v1462
    %3031 = vmatpush1.bf16.msra.mxu0 %v1461
    %3032 = vmatprep.mubr.bf16.mxu0 %v2999
    %3033 = vmatmul.mubr.bf16.gmra.mrb[0].mxu0 %v2998
    %v3034 = vpop.f32.mrb[0].mxu0
    %v3035 = vadd.f32 0.0, %v3034
    %v3036 = vpop.f32.mrb[0].mxu0
    %v3037 = vadd.f32 0.0, %v3036
    %v3038 = vpop.f32.mrb[0].mxu0
    %v3039 = vpop.f32.mrb[0].mxu0
    %3040 = vdwg.mxu0
    %3041 = vmatprep.subr.bf16.mxu0 %v1344
    %3042 = vmatpush1.bf16.msra.mxu0 %v1343
    %3043 = vmatprep.subr.bf16.mxu0 %v1352
    %3044 = vmatpush1.bf16.msra.mxu0 %v1351
    %3045 = vmatprep.subr.bf16.mxu0 %v1360
    %3046 = vmatpush1.bf16.msra.mxu0 %v1359
    %3047 = vmatprep.subr.bf16.mxu0 %v1368
    %3048 = vmatpush1.bf16.msra.mxu0 %v1367
    %3049 = vmatprep.subr.bf16.mxu0 %v1376
    %3050 = vmatpush1.bf16.msra.mxu0 %v1375
    %3051 = vmatprep.subr.bf16.mxu0 %v1384
    %3052 = vmatpush1.bf16.msra.mxu0 %v1383
    %3053 = vmatprep.subr.bf16.mxu0 %v1392
    %3054 = vmatpush1.bf16.msra.mxu0 %v1391
    %3055 = vmatprep.subr.bf16.mxu0 %v1400
    %3056 = vmatpush1.bf16.msra.mxu0 %v1399
    %3057 = vmatprep.subr.bf16.mxu0 %v1408
    %3058 = vmatpush1.bf16.msra.mxu0 %v1407
    %3059 = vmatprep.subr.bf16.mxu0 %v1416
    %3060 = vmatpush1.bf16.msra.mxu0 %v1415
    %3061 = vmatprep.subr.bf16.mxu0 %v1424
    %3062 = vmatpush1.bf16.msra.mxu0 %v1423
    %3063 = vmatprep.subr.bf16.mxu0 %v1432
    %3064 = vmatpush1.bf16.msra.mxu0 %v1431
    %3065 = vmatprep.subr.bf16.mxu0 %v1440
    %3066 = vmatpush1.bf16.msra.mxu0 %v1439
    %3067 = vmatprep.subr.bf16.mxu0 %v1448
    %3068 = vmatpush1.bf16.msra.mxu0 %v1447
    %3069 = vmatprep.subr.bf16.mxu0 %v1456
    %3070 = vmatpush1.bf16.msra.mxu0 %v1455
    %3071 = vmatprep.subr.bf16.mxu0 %v1464
    %3072 = vmatpush1.bf16.msra.mxu0 %v1463
    %3073 = vmatprep.mubr.bf16.mxu0 %v2999
    %3074 = vmatmul.mubr.bf16.gmra.mrb[0].mxu0 %v2998
    %v3075 = vpop.f32.mrb[0].mxu0
    %v3076 = vadd.f32 0.0, %v3075
    %v3077 = vpop.f32.mrb[0].mxu0
    %v3078 = vadd.f32 0.0, %v3077
    %v3079 = vpop.f32.mrb[0].mxu0
    %v3080 = vpop.f32.mrb[0].mxu0
    %3081 = vdwg.mxu0
    %3082 = vmatprep.subr.bf16.mxu0 %v1346
    %3083 = vmatpush1.bf16.msra.mxu0 %v1345
    %3084 = vmatprep.subr.bf16.mxu0 %v1354
    %3085 = vmatpush1.bf16.msra.mxu0 %v1353
    %3086 = vmatprep.subr.bf16.mxu0 %v1362
    %3087 = vmatpush1.bf16.msra.mxu0 %v1361
    %3088 = vmatprep.subr.bf16.mxu0 %v1370
    %3089 = vmatpush1.bf16.msra.mxu0 %v1369
    %3090 = vmatprep.subr.bf16.mxu0 %v1378
    %3091 = vmatpush1.bf16.msra.mxu0 %v1377
    %3092 = vmatprep.subr.bf16.mxu0 %v1386
    %3093 = vmatpush1.bf16.msra.mxu0 %v1385
    %3094 = vmatprep.subr.bf16.mxu0 %v1394
    %3095 = vmatpush1.bf16.msra.mxu0 %v1393
    %3096 = vmatprep.subr.bf16.mxu0 %v1402
    %3097 = vmatpush1.bf16.msra.mxu0 %v1401
    %3098 = vmatprep.subr.bf16.mxu0 %v1410
    %3099 = vmatpush1.bf16.msra.mxu0 %v1409
    %3100 = vmatprep.subr.bf16.mxu0 %v1418
    %3101 = vmatpush1.bf16.msra.mxu0 %v1417
    %3102 = vmatprep.subr.bf16.mxu0 %v1426
    %3103 = vmatpush1.bf16.msra.mxu0 %v1425
    %3104 = vmatprep.subr.bf16.mxu0 %v1434
    %3105 = vmatpush1.bf16.msra.mxu0 %v1433
    %3106 = vmatprep.subr.bf16.mxu0 %v1442
    %3107 = vmatpush1.bf16.msra.mxu0 %v1441
    %3108 = vmatprep.subr.bf16.mxu0 %v1450
    %3109 = vmatpush1.bf16.msra.mxu0 %v1449
    %3110 = vmatprep.subr.bf16.mxu0 %v1458
    %3111 = vmatpush1.bf16.msra.mxu0 %v1457
    %3112 = vmatprep.subr.bf16.mxu0 %v1466
    %3113 = vmatpush1.bf16.msra.mxu0 %v1465
    %3114 = vmatprep.mubr.bf16.mxu0 %v2999
    %3115 = vmatmul.mubr.bf16.gmra.mrb[0].mxu0 %v2998
    %v3116 = vpop.f32.mrb[0].mxu0
    %v3117 = vadd.f32 0.0, %v3116
    %v3118 = vpop.f32.mrb[0].mxu0
    %v3119 = vadd.f32 0.0, %v3118
    %v3120 = vpop.f32.mrb[0].mxu0
    %v3121 = vpop.f32.mrb[0].mxu0
    %3122 = vdwg.mxu0
    %3123 = vmatprep.subr.bf16.mxu0 %v1348
    %3124 = vmatpush1.bf16.msra.mxu0 %v1347
    %3125 = vmatprep.subr.bf16.mxu0 %v1356
    %3126 = vmatpush1.bf16.msra.mxu0 %v1355
    %3127 = vmatprep.subr.bf16.mxu0 %v1364
    %3128 = vmatpush1.bf16.msra.mxu0 %v1363
    %3129 = vmatprep.subr.bf16.mxu0 %v1372
    %3130 = vmatpush1.bf16.msra.mxu0 %v1371
    %3131 = vmatprep.subr.bf16.mxu0 %v1380
    %3132 = vmatpush1.bf16.msra.mxu0 %v1379
    %3133 = vmatprep.subr.bf16.mxu0 %v1388
    %3134 = vmatpush1.bf16.msra.mxu0 %v1387
    %3135 = vmatprep.subr.bf16.mxu0 %v1396
    %3136 = vmatpush1.bf16.msra.mxu0 %v1395
    %3137 = vmatprep.subr.bf16.mxu0 %v1404
    %3138 = vmatpush1.bf16.msra.mxu0 %v1403
    %3139 = vmatprep.subr.bf16.mxu0 %v1412
    %3140 = vmatpush1.bf16.msra.mxu0 %v1411
    %3141 = vmatprep.subr.bf16.mxu0 %v1420
    %3142 = vmatpush1.bf16.msra.mxu0 %v1419
    %3143 = vmatprep.subr.bf16.mxu0 %v1428
    %3144 = vmatpush1.bf16.msra.mxu0 %v1427
    %3145 = vmatprep.subr.bf16.mxu0 %v1436
    %3146 = vmatpush1.bf16.msra.mxu0 %v1435
    %3147 = vmatprep.subr.bf16.mxu0 %v1444
    %3148 = vmatpush1.bf16.msra.mxu0 %v1443
    %3149 = vmatprep.subr.bf16.mxu0 %v1452
    %3150 = vmatpush1.bf16.msra.mxu0 %v1451
    %3151 = vmatprep.subr.bf16.mxu0 %v1460
    %3152 = vmatpush1.bf16.msra.mxu0 %v1459
    %3153 = vmatprep.subr.bf16.mxu0 %v1468
    %3154 = vmatpush1.bf16.msra.mxu0 %v1467
    %3155 = vmatprep.mubr.bf16.mxu0 %v2999
    %3156 = vmatmul.mubr.bf16.gmra.mrb[0].mxu0 %v2998
    %v3157 = vpop.f32.mrb[0].mxu0
    %v3158 = vadd.f32 0.0, %v3157
    %v3159 = vpop.f32.mrb[0].mxu0
    %v3160 = vadd.f32 0.0, %v3159
    %v3161 = vpop.f32.mrb[0].mxu0
    %v3162 = vpop.f32.mrb[0].mxu0
    %3163 = vdwg.mxu0
    %v3164 = vadd.f32 %v594, %v3035
    %v3165 = vadd.f32 %v596, %v3037
    %v3166 = vadd.f32 %v667, %v3076
    %v3167 = vadd.f32 %v669, %v3078
    %v3168 = vadd.f32 %v740, %v3117
    %v3169 = vadd.f32 %v742, %v3119
    %v3170 = vadd.f32 %v813, %v3158
    %v3171 = vadd.f32 %v815, %v3160
    %v3172 = vxor.u32 %v3164, 2147483648
    %v3173 = vxor.u32 %v3165, 2147483648
    %v3174 = vmul.f32 %v3172, 1.442695
    %v3175 = vpow.pop %v3174
    %v3176 = vmul.f32 %v3173, 1.442695
    %v3177 = vpow.pop %v3176
    %v3178 = vadd.f32 %v3175, 1.0
    %v3179 = vadd.f32 %v3177, 1.0
    %v3180 = vrcp.pop %v3178
    %v3181 = vmul.f32 1.0, %v3180
    %v3182 = vrcp.pop %v3179
    %v3183 = vmul.f32 1.0, %v3182
    %v3184 = vxor.u32 %v3166, 2147483648
    %v3185 = vxor.u32 %v3167, 2147483648
    %v3186 = vmul.f32 %v3184, 1.442695
    %v3187 = vpow.pop %v3186
    %v3188 = vmul.f32 %v3185, 1.442695
    %v3189 = vpow.pop %v3188
    %v3190 = vadd.f32 %v3187, 1.0
    %v3191 = vadd.f32 %v3189, 1.0
    %v3192 = vrcp.pop %v3190
    %v3193 = vmul.f32 1.0, %v3192
    %v3194 = vrcp.pop %v3191
    %v3195 = vmul.f32 1.0, %v3194
    %v3196 = vtanh.pop %v3168
    %v3197 = vtanh.pop %v3169
    %v3198 = vxor.u32 %v3170, 2147483648
    %v3199 = vxor.u32 %v3171, 2147483648
    %v3200 = vmul.f32 %v3198, 1.442695
    %v3201 = vpow.pop %v3200
    %v3202 = vmul.f32 %v3199, 1.442695
    %v3203 = vpow.pop %v3202
    %v3204 = vadd.f32 %v3201, 1.0
    %v3205 = vadd.f32 %v3203, 1.0
    %v3206 = vrcp.pop %v3204
    %v3207 = vmul.f32 1.0, %v3206
    %v3208 = vrcp.pop %v3205
    %v3209 = vmul.f32 1.0, %v3208
    %v3210 = vmul.f32 %v3193, %v2996
    %v3211 = vmul.f32 %v3195, %v2997
    %v3212 = vmul.f32 %v3181, %v3196
    %v3213 = vmul.f32 %v3183, %v3197
    %v3214 = vadd.f32 %v3210, %v3212
    %v3215 = vadd.f32 %v3211, %v3213
    %v3216 = vtanh.pop %v3214
    %v3217 = vtanh.pop %v3215
    %v3218 = vmul.f32 %v3207, %v3216
    %v3219 = vmul.f32 %v3209, %v3217
    %s3220 = sadd.s32 %s822, 6
    %v3221 = vstv %s3220
    %vm3222 = vcmp.lt.s32.totalorder %v3221, %v821
    %v3223 = vsel %vm3222, 1, 0
    %3224 = vset.pattern.permute.xlu0 0
    %3225 = vperm.xlu0 %3224, %v3223
    %v3226 = vpop.permute.xlu0 %3225
    %vm3227 = vcmp.eq.s32.totalorder %v3226, 1
    %v3228 = vsel %vm3227, %v3218, %v2994
    %v3229 = vsel %vm3227, %v3219, %v2995
    %v3230 = vsel %vm3227, %v3214, %v2996
    %v3231 = vsel %vm3227, %v3215, %v2997
    %v3232 = vpack.c.bf16 %v3228, %v3228
    %v3233 = vpack.c.bf16 %v3229, %v3229
    %3234 = vmatprep.subr.bf16.mxu0 %v1342
    %3235 = vmatpush1.bf16.msra.mxu0 %v1341
    %3236 = vmatprep.subr.bf16.mxu0 %v1350
    %3237 = vmatpush1.bf16.msra.mxu0 %v1349
    %3238 = vmatprep.subr.bf16.mxu0 %v1358
    %3239 = vmatpush1.bf16.msra.mxu0 %v1357
    %3240 = vmatprep.subr.bf16.mxu0 %v1366
    %3241 = vmatpush1.bf16.msra.mxu0 %v1365
    %3242 = vmatprep.subr.bf16.mxu0 %v1374
    %3243 = vmatpush1.bf16.msra.mxu0 %v1373
    %3244 = vmatprep.subr.bf16.mxu0 %v1382
    %3245 = vmatpush1.bf16.msra.mxu0 %v1381
    %3246 = vmatprep.subr.bf16.mxu0 %v1390
    %3247 = vmatpush1.bf16.msra.mxu0 %v1389
    %3248 = vmatprep.subr.bf16.mxu0 %v1398
    %3249 = vmatpush1.bf16.msra.mxu0 %v1397
    %3250 = vmatprep.subr.bf16.mxu0 %v1406
    %3251 = vmatpush1.bf16.msra.mxu0 %v1405
    %3252 = vmatprep.subr.bf16.mxu0 %v1414
    %3253 = vmatpush1.bf16.msra.mxu0 %v1413
    %3254 = vmatprep.subr.bf16.mxu0 %v1422
    %3255 = vmatpush1.bf16.msra.mxu0 %v1421
    %3256 = vmatprep.subr.bf16.mxu0 %v1430
    %3257 = vmatpush1.bf16.msra.mxu0 %v1429
    %3258 = vmatprep.subr.bf16.mxu0 %v1438
    %3259 = vmatpush1.bf16.msra.mxu0 %v1437
    %3260 = vmatprep.subr.bf16.mxu0 %v1446
    %3261 = vmatpush1.bf16.msra.mxu0 %v1445
    %3262 = vmatprep.subr.bf16.mxu0 %v1454
    %3263 = vmatpush1.bf16.msra.mxu0 %v1453
    %3264 = vmatprep.subr.bf16.mxu0 %v1462
    %3265 = vmatpush1.bf16.msra.mxu0 %v1461
    %3266 = vmatprep.mubr.bf16.mxu0 %v3233
    %3267 = vmatmul.mubr.bf16.gmra.mrb[0].mxu0 %v3232
    %v3268 = vpop.f32.mrb[0].mxu0
    %v3269 = vadd.f32 0.0, %v3268
    %v3270 = vpop.f32.mrb[0].mxu0
    %v3271 = vadd.f32 0.0, %v3270
    %v3272 = vpop.f32.mrb[0].mxu0
    %v3273 = vpop.f32.mrb[0].mxu0
    %3274 = vdwg.mxu0
    %3275 = vmatprep.subr.bf16.mxu0 %v1344
    %3276 = vmatpush1.bf16.msra.mxu0 %v1343
    %3277 = vmatprep.subr.bf16.mxu0 %v1352
    %3278 = vmatpush1.bf16.msra.mxu0 %v1351
    %3279 = vmatprep.subr.bf16.mxu0 %v1360
    %3280 = vmatpush1.bf16.msra.mxu0 %v1359
    %3281 = vmatprep.subr.bf16.mxu0 %v1368
    %3282 = vmatpush1.bf16.msra.mxu0 %v1367
    %3283 = vmatprep.subr.bf16.mxu0 %v1376
    %3284 = vmatpush1.bf16.msra.mxu0 %v1375
    %3285 = vmatprep.subr.bf16.mxu0 %v1384
    %3286 = vmatpush1.bf16.msra.mxu0 %v1383
    %3287 = vmatprep.subr.bf16.mxu0 %v1392
    %3288 = vmatpush1.bf16.msra.mxu0 %v1391
    %3289 = vmatprep.subr.bf16.mxu0 %v1400
    %3290 = vmatpush1.bf16.msra.mxu0 %v1399
    %3291 = vmatprep.subr.bf16.mxu0 %v1408
    %3292 = vmatpush1.bf16.msra.mxu0 %v1407
    %3293 = vmatprep.subr.bf16.mxu0 %v1416
    %3294 = vmatpush1.bf16.msra.mxu0 %v1415
    %3295 = vmatprep.subr.bf16.mxu0 %v1424
    %3296 = vmatpush1.bf16.msra.mxu0 %v1423
    %3297 = vmatprep.subr.bf16.mxu0 %v1432
    %3298 = vmatpush1.bf16.msra.mxu0 %v1431
    %3299 = vmatprep.subr.bf16.mxu0 %v1440
    %3300 = vmatpush1.bf16.msra.mxu0 %v1439
    %3301 = vmatprep.subr.bf16.mxu0 %v1448
    %3302 = vmatpush1.bf16.msra.mxu0 %v1447
    %3303 = vmatprep.subr.bf16.mxu0 %v1456
    %3304 = vmatpush1.bf16.msra.mxu0 %v1455
    %3305 = vmatprep.subr.bf16.mxu0 %v1464
    %3306 = vmatpush1.bf16.msra.mxu0 %v1463
    %3307 = vmatprep.mubr.bf16.mxu0 %v3233
    %3308 = vmatmul.mubr.bf16.gmra.mrb[0].mxu0 %v3232
    %v3309 = vpop.f32.mrb[0].mxu0
    %v3310 = vadd.f32 0.0, %v3309
    %v3311 = vpop.f32.mrb[0].mxu0
    %v3312 = vadd.f32 0.0, %v3311
    %v3313 = vpop.f32.mrb[0].mxu0
    %v3314 = vpop.f32.mrb[0].mxu0
    %3315 = vdwg.mxu0
    %3316 = vmatprep.subr.bf16.mxu0 %v1346
    %3317 = vmatpush1.bf16.msra.mxu0 %v1345
    %3318 = vmatprep.subr.bf16.mxu0 %v1354
    %3319 = vmatpush1.bf16.msra.mxu0 %v1353
    %3320 = vmatprep.subr.bf16.mxu0 %v1362
    %3321 = vmatpush1.bf16.msra.mxu0 %v1361
    %3322 = vmatprep.subr.bf16.mxu0 %v1370
    %3323 = vmatpush1.bf16.msra.mxu0 %v1369
    %3324 = vmatprep.subr.bf16.mxu0 %v1378
    %3325 = vmatpush1.bf16.msra.mxu0 %v1377
    %3326 = vmatprep.subr.bf16.mxu0 %v1386
    %3327 = vmatpush1.bf16.msra.mxu0 %v1385
    %3328 = vmatprep.subr.bf16.mxu0 %v1394
    %3329 = vmatpush1.bf16.msra.mxu0 %v1393
    %3330 = vmatprep.subr.bf16.mxu0 %v1402
    %3331 = vmatpush1.bf16.msra.mxu0 %v1401
    %3332 = vmatprep.subr.bf16.mxu0 %v1410
    %3333 = vmatpush1.bf16.msra.mxu0 %v1409
    %3334 = vmatprep.subr.bf16.mxu0 %v1418
    %3335 = vmatpush1.bf16.msra.mxu0 %v1417
    %3336 = vmatprep.subr.bf16.mxu0 %v1426
    %3337 = vmatpush1.bf16.msra.mxu0 %v1425
    %3338 = vmatprep.subr.bf16.mxu0 %v1434
    %3339 = vmatpush1.bf16.msra.mxu0 %v1433
    %3340 = vmatprep.subr.bf16.mxu0 %v1442
    %3341 = vmatpush1.bf16.msra.mxu0 %v1441
    %3342 = vmatprep.subr.bf16.mxu0 %v1450
    %3343 = vmatpush1.bf16.msra.mxu0 %v1449
    %3344 = vmatprep.subr.bf16.mxu0 %v1458
    %3345 = vmatpush1.bf16.msra.mxu0 %v1457
    %3346 = vmatprep.subr.bf16.mxu0 %v1466
    %3347 = vmatpush1.bf16.msra.mxu0 %v1465
    %3348 = vmatprep.mubr.bf16.mxu0 %v3233
    %3349 = vmatmul.mubr.bf16.gmra.mrb[0].mxu0 %v3232
    %v3350 = vpop.f32.mrb[0].mxu0
    %v3351 = vadd.f32 0.0, %v3350
    %v3352 = vpop.f32.mrb[0].mxu0
    %v3353 = vadd.f32 0.0, %v3352
    %v3354 = vpop.f32.mrb[0].mxu0
    %v3355 = vpop.f32.mrb[0].mxu0
    %3356 = vdwg.mxu0
    %3357 = vmatprep.subr.bf16.mxu0 %v1348
    %3358 = vmatpush1.bf16.msra.mxu0 %v1347
    %3359 = vmatprep.subr.bf16.mxu0 %v1356
    %3360 = vmatpush1.bf16.msra.mxu0 %v1355
    %3361 = vmatprep.subr.bf16.mxu0 %v1364
    %3362 = vmatpush1.bf16.msra.mxu0 %v1363
    %3363 = vmatprep.subr.bf16.mxu0 %v1372
    %3364 = vmatpush1.bf16.msra.mxu0 %v1371
    %3365 = vmatprep.subr.bf16.mxu0 %v1380
    %3366 = vmatpush1.bf16.msra.mxu0 %v1379
    %3367 = vmatprep.subr.bf16.mxu0 %v1388
    %3368 = vmatpush1.bf16.msra.mxu0 %v1387
    %3369 = vmatprep.subr.bf16.mxu0 %v1396
    %3370 = vmatpush1.bf16.msra.mxu0 %v1395
    %3371 = vmatprep.subr.bf16.mxu0 %v1404
    %3372 = vmatpush1.bf16.msra.mxu0 %v1403
    %3373 = vmatprep.subr.bf16.mxu0 %v1412
    %3374 = vmatpush1.bf16.msra.mxu0 %v1411
    %3375 = vmatprep.subr.bf16.mxu0 %v1420
    %3376 = vmatpush1.bf16.msra.mxu0 %v1419
    %3377 = vmatprep.subr.bf16.mxu0 %v1428
    %3378 = vmatpush1.bf16.msra.mxu0 %v1427
    %3379 = vmatprep.subr.bf16.mxu0 %v1436
    %3380 = vmatpush1.bf16.msra.mxu0 %v1435
    %3381 = vmatprep.subr.bf16.mxu0 %v1444
    %3382 = vmatpush1.bf16.msra.mxu0 %v1443
    %3383 = vmatprep.subr.bf16.mxu0 %v1452
    %3384 = vmatpush1.bf16.msra.mxu0 %v1451
    %3385 = vmatprep.subr.bf16.mxu0 %v1460
    %3386 = vmatpush1.bf16.msra.mxu0 %v1459
    %3387 = vmatprep.subr.bf16.mxu0 %v1468
    %3388 = vmatpush1.bf16.msra.mxu0 %v1467
    %3389 = vmatprep.mubr.bf16.mxu0 %v3233
    %3390 = vmatmul.mubr.bf16.gmra.mrb[0].mxu0 %v3232
    %v3391 = vpop.f32.mrb[0].mxu0
    %v3392 = vadd.f32 0.0, %v3391
    %v3393 = vpop.f32.mrb[0].mxu0
    %v3394 = vadd.f32 0.0, %v3393
    %v3395 = vpop.f32.mrb[0].mxu0
    %v3396 = vpop.f32.mrb[0].mxu0
    %3397 = vdwg.mxu0
    %v3398 = vadd.f32 %v598, %v3269
    %v3399 = vadd.f32 %v600, %v3271
    %v3400 = vadd.f32 %v671, %v3310
    %v3401 = vadd.f32 %v673, %v3312
    %v3402 = vadd.f32 %v744, %v3351
    %v3403 = vadd.f32 %v746, %v3353
    %v3404 = vadd.f32 %v817, %v3392
    %v3405 = vadd.f32 %v819, %v3394
    %v3406 = vxor.u32 %v3398, 2147483648
    %v3407 = vxor.u32 %v3399, 2147483648
    %v3408 = vmul.f32 %v3406, 1.442695
    %v3409 = vpow.pop %v3408
    %v3410 = vmul.f32 %v3407, 1.442695
    %v3411 = vpow.pop %v3410
    %v3412 = vadd.f32 %v3409, 1.0
    %v3413 = vadd.f32 %v3411, 1.0
    %v3414 = vrcp.pop %v3412
    %v3415 = vmul.f32 1.0, %v3414
    %v3416 = vrcp.pop %v3413
    %v3417 = vmul.f32 1.0, %v3416
    %v3418 = vxor.u32 %v3400, 2147483648
    %v3419 = vxor.u32 %v3401, 2147483648
    %v3420 = vmul.f32 %v3418, 1.442695
    %v3421 = vpow.pop %v3420
    %v3422 = vmul.f32 %v3419, 1.442695
    %v3423 = vpow.pop %v3422
    %v3424 = vadd.f32 %v3421, 1.0
    %v3425 = vadd.f32 %v3423, 1.0
    %v3426 = vrcp.pop %v3424
    %v3427 = vmul.f32 1.0, %v3426
    %v3428 = vrcp.pop %v3425
    %v3429 = vmul.f32 1.0, %v3428
    %v3430 = vtanh.pop %v3402
    %v3431 = vtanh.pop %v3403
    %v3432 = vxor.u32 %v3404, 2147483648
    %v3433 = vxor.u32 %v3405, 2147483648
    %v3434 = vmul.f32 %v3432, 1.442695
    %v3435 = vpow.pop %v3434
    %v3436 = vmul.f32 %v3433, 1.442695
    %v3437 = vpow.pop %v3436
    %v3438 = vadd.f32 %v3435, 1.0
    %v3439 = vadd.f32 %v3437, 1.0
    %v3440 = vrcp.pop %v3438
    %v3441 = vmul.f32 1.0, %v3440
    %v3442 = vrcp.pop %v3439
    %v3443 = vmul.f32 1.0, %v3442
    %v3444 = vmul.f32 %v3427, %v3230
    %v3445 = vmul.f32 %v3429, %v3231
    %v3446 = vmul.f32 %v3415, %v3430
    %v3447 = vmul.f32 %v3417, %v3431
    %v3448 = vadd.f32 %v3444, %v3446
    %v3449 = vadd.f32 %v3445, %v3447
    %v3450 = vtanh.pop %v3448
    %v3451 = vtanh.pop %v3449
    %v3452 = vmul.f32 %v3441, %v3450
    %v3453 = vmul.f32 %v3443, %v3451
    %s3454 = sadd.s32 %s822, 7
    %v3455 = vstv %s3454
    %vm3456 = vcmp.lt.s32.totalorder %v3455, %v821
    %v3457 = vsel %vm3456, 1, 0
    %3458 = vset.pattern.permute.xlu0 0
    %3459 = vperm.xlu0 %3458, %v3457
    %v3460 = vpop.permute.xlu0 %3459
    %vm3461 = vcmp.eq.s32.totalorder %v3460, 1
    %v3462 = vsel %vm3461, %v3452, %v3228
    %v3463 = vsel %vm3461, %v3453, %v3229
    %v3464 = vsel %vm3461, %v3448, %v3230
    %v3465 = vsel %vm3461, %v3449, %v3231
    %3466 = vst [vmem:[#allocation2] sm:$0xff] %v3462
    %3467 = vst [vmem:[#allocation2 + $0x8] sm:$0xff] %v3463
    %3468 = vst [vmem:[#allocation3] sm:$0xff] %v3464
    %3469 = vst [vmem:[#allocation3 + $0x8] sm:$0xff] %v3465
    // Predicated region
    $region38: #{tpu_custom_call.1} parent=1 // pred_check
      %p3470 = pneg %p63
    $region39: #{tpu_custom_call.1} parent=1 // pred_check_branch
      %3472 = sbr.rel (%p3470) target = $region41
    $region40: #{tpu_custom_call.1} parent=1 // pred_region
      %3473 = vst [vmem:[#allocation10] sm:$0xff] %v3462
      %3474 = vst [vmem:[#allocation10 + $0x8] sm:$0xff] %v3463
    $region41: #{tpu_custom_call.1} parent=1 // pred_fallthru
      _
    // Predicated region
    $region42: #{tpu_custom_call.1} parent=1 // pred_check
      _
    $region43: #{tpu_custom_call.1} parent=1 // pred_check_branch
      %3476 = sbr.rel (0) target = $region45
    $region44: #{tpu_custom_call.1} parent=1 // pred_region
      %s3478 = ssub.s32 256, 256
      %3479 = vsyncadd [#allocation6], %s3478
      %s3481 = sshll.u32 [#allocation10], 4
      %s3482 = int_to_ptr.vmem [resolvable:$true] %s3481
      %3484 = dma.vmem_to_hbm [thread:$0]  %s3482, 256, %s5, [#allocation6]
    $region45: #{tpu_custom_call.1} parent=1 // pred_fallthru
      _
    // Predicated region
    $region46: #{tpu_custom_call.1} parent=1 // pred_check
      _
    $region47: #{tpu_custom_call.1} parent=1 // pred_check_branch
      %3486 = sbr.rel (0) target = $region49
    $region48: #{tpu_custom_call.1} parent=1 // pred_region
      %3487 = dma.done [#allocation6], 256
    $region49: #{tpu_custom_call.1} parent=1 // pred_fallthru
      _
    %3488 = vsyncpa [#allocation5], 1
    %3489 = vsyncpa [#allocation8], 1
    %3490 = vsyncpa [#allocation6], 1

</llo_original>
